<compile_context>
chip_gen: v7x
topology: tpu7x:2x2x1
jax: 0.10.0
libtpu: 0.0.40
codegen_flags: <defaults>
</compile_context>

<pallas_src>
import functools

import jax
import jax.numpy as jnp
from jax.experimental import pallas as pl
from jax.experimental.pallas import tpu as pltpu


def _round_up(x, m):
    return (x + m - 1) // m * m


# -----------------------------------------------------------------------------
# Fused 4-layer MLP kernel
# -----------------------------------------------------------------------------
def _fc_net_kernel(x_ref, b1_ref, b2_ref, b3_ref, b4_ref,
                   w1_hbm, w2_hbm, w3_hbm, w4_hbm,
                   o_ref,
                   w1_v, w2_v, w3_v, w4_v, sems):
    """All four linears fused.

    Weights arrive as raw HBM refs; each is DMA'd as one contiguous copy into
    its own exact-shape VMEM buffer.  All four copies are started up-front so
    the DMA engine streams the ~7 MiB of weights back-to-back while the (tiny)
    matmuls trail behind the per-layer waits.
    """
    w_hbm = (w1_hbm, w2_hbm, w3_hbm, w4_hbm)
    w_vmem = (w1_v, w2_v, w3_v, w4_v)
    b_refs = (b1_ref, b2_ref, b3_ref, b4_ref)

    # One descriptor per layer; start() and wait() use the same object.
    copies = [pltpu.make_async_copy(w_hbm[l], w_vmem[l], sems.at[l])
              for l in range(4)]
    for cp in copies:           # full look-ahead: 4 DMAs in flight at entry
        cp.start()

    act = x_ref[...]            # bf16 (already cast in the wrapper)
    for l in range(4):
        copies[l].wait()        # block only on the weights we need right now
        acc = jnp.dot(act, w_vmem[l][...],
                      preferred_element_type=jnp.float32)
        acc = acc + b_refs[l][...]          # f32 epilogue (bias broadcast)
        if l < 3:
            acc = jnp.maximum(acc, 0.0)     # ReLU in f32
            act = acc.astype(jnp.bfloat16)  # bf16 only for the next MXU input
        else:
            o_ref[...] = acc.astype(o_ref.dtype)


# -----------------------------------------------------------------------------
# Parameter init / preparation
# -----------------------------------------------------------------------------
def init_fc_net_params(key, input_size, num_classes, dtype=jnp.float32):
    """Weights ~ N(0, 0.01) (as in the module), biases ~ U(+-1/sqrt(fan_in))
    (PyTorch Linear default).  Weights stored as (in, out) == W_pt.T."""
    dims = [(input_size, 1024), (1024, 1024), (1024, 2048), (2048, num_classes)]
    params = []
    for fan_in, fan_out in dims:
        key, kw, kb = jax.random.split(key, 3)
        w = 0.01 * jax.random.normal(kw, (fan_in, fan_out), dtype=dtype)
        bound = 1.0 / jnp.sqrt(jnp.float32(fan_in))
        b = jax.random.uniform(kb, (fan_out,), dtype=dtype,
                               minval=-bound, maxval=bound)
        params.append((w, b))
    return params


def prepare_fc_net(params):
    """Pad lane dims to multiples of 128, cast weights to bf16 (contiguous
    per-layer matrices; no strip reshaping needed)."""
    prepped = []
    k_pad_prev = None
    for l, (w, b) in enumerate(params):
        K, N = w.shape
        K_pad = _round_up(K, 128) if l == 0 else k_pad_prev
        N_pad = _round_up(N, 128)
        w_p = jnp.zeros((K_pad, N_pad), jnp.float32).at[:K, :N].set(w)
        b_p = jnp.zeros((1, N_pad), jnp.float32).at[0, :N].set(b)
        prepped.append((w_p.astype(jnp.bfloat16), b_p))
        k_pad_prev = N_pad
    return prepped


# -----------------------------------------------------------------------------
# Forward
# -----------------------------------------------------------------------------
@functools.partial(jax.jit, static_argnames=("num_classes",))
def fc_net_forward(x, prepped, num_classes):
    M, K_in = x.shape
    weights = [p[0] for p in prepped]
    biases = [p[1] for p in prepped]
    K0 = weights[0].shape[0]
    n_out_pad = weights[-1].shape[1]

    M_pad = _round_up(max(M, 8), 8)
    x_p = jnp.zeros((M_pad, K0), jnp.bfloat16).at[:M, :K_in].set(
        x.astype(jnp.bfloat16))

    out = pl.pallas_call(
        _fc_net_kernel,
        out_shape=jax.ShapeDtypeStruct((M_pad, n_out_pad), jnp.float32),
        grid=(1,),
        in_specs=[
            pl.BlockSpec((M_pad, K0), lambda i: (0, 0)),            # x -> VMEM
            *[pl.BlockSpec(b.shape, lambda i: (0, 0)) for b in biases],
            *[pl.BlockSpec(memory_space=pl.ANY) for _ in weights],  # stay in HBM
        ],
        out_specs=pl.BlockSpec((M_pad, n_out_pad), lambda i: (0, 0)),
        scratch_shapes=[
            *[pltpu.VMEM(w.shape, jnp.bfloat16) for w in weights],  # per-layer
            pltpu.SemaphoreType.DMA((len(weights),)),
        ],
        compiler_params=pltpu.CompilerParams(
            dimension_semantics=("arbitrary",),
            vmem_limit_bytes=32 << 20,   # ~7.1 MiB actual; safe on v7x (64 MiB)
        ),
    )(x_p, *biases, *weights)
    return out[:M, :num_classes]


if __name__ == "__main__":
    batch = 8
    input_size = 256          # small flattened input (module is shape-agnostic)
    num_classes = 10

    key = jax.random.PRNGKey(0)
    key, kx = jax.random.split(key)
    x = jax.random.normal(kx, (batch, input_size), dtype=jnp.float32)

    params = init_fc_net_params(key, input_size, num_classes)
    prepped = prepare_fc_net(params)

    out = fc_net_forward(x, prepped, num_classes)
    out = jax.block_until_ready(out)

    # Pure-JAX reference with identical numerics (bf16 inputs/weights/hidden
    # activations, f32 accumulation).
    ref = x.astype(jnp.bfloat16)
    for i, (w, b) in enumerate(params):
        ref = jnp.dot(ref, w.astype(jnp.bfloat16),
                      preferred_element_type=jnp.float32) + b
        if i < len(params) - 1:
            ref = jnp.maximum(ref, 0.0).astype(jnp.bfloat16)

    assert out.shape == (batch, num_classes)
    assert jnp.allclose(out, ref, atol=1e-2, rtol=1e-2), (
        float(jnp.max(jnp.abs(out - ref))))

    print("KERNEL_OK")
</pallas_src>

<mosaic_0001>
module attributes {stable_mosaic.version = 11 : i64} {
  func.func @_fc_net_kernel(%arg0: i32, %arg1: memref<8x256xbf16, #tpu.memory_space<vmem>>, %arg2: memref<1x1024xf32, #tpu.memory_space<vmem>>, %arg3: memref<1x1024xf32, #tpu.memory_space<vmem>>, %arg4: memref<1x2048xf32, #tpu.memory_space<vmem>>, %arg5: memref<1x128xf32, #tpu.memory_space<vmem>>, %arg6: memref<256x1024xbf16, #tpu.memory_space<any>>, %arg7: memref<1024x1024xbf16, #tpu.memory_space<any>>, %arg8: memref<1024x2048xbf16, #tpu.memory_space<any>>, %arg9: memref<2048x128xbf16, #tpu.memory_space<any>>, %arg10: memref<8x128xf32, #tpu.memory_space<vmem>>, %arg11: memref<256x1024xbf16, #tpu.memory_space<vmem>>, %arg12: memref<1024x1024xbf16, #tpu.memory_space<vmem>>, %arg13: memref<1024x2048xbf16, #tpu.memory_space<vmem>>, %arg14: memref<2048x128xbf16, #tpu.memory_space<vmem>>, %arg15: memref<4x!tpu.dma_semaphore, #tpu.memory_space<semaphore_mem>>) attributes {dimension_semantics = [#tpu.dimension_semantics<arbitrary>], iteration_bounds = array<i64: 1>, scalar_prefetch = 0 : i64, scratch_operands = 5 : i64, tpu.core_type = #tpu.core_type<tc>, window_params = [{pipeline_mode = #tpu.pipeline_mode<synchronous>, transform_indices = @transform_0, window_bounds = array<i64: 8, 256>}, {pipeline_mode = #tpu.pipeline_mode<synchronous>, transform_indices = @transform_1, window_bounds = array<i64: 1, 1024>}, {pipeline_mode = #tpu.pipeline_mode<synchronous>, transform_indices = @transform_2, window_bounds = array<i64: 1, 1024>}, {pipeline_mode = #tpu.pipeline_mode<synchronous>, transform_indices = @transform_3, window_bounds = array<i64: 1, 2048>}, {pipeline_mode = #tpu.pipeline_mode<synchronous>, transform_indices = @transform_4, window_bounds = array<i64: 1, 128>}, {}, {}, {}, {}, {pipeline_mode = #tpu.pipeline_mode<synchronous>, transform_indices = @transform_9, window_bounds = array<i64: 8, 128>}]} {
    %c0_i32 = arith.constant 0 : i32
    %0 = tpu.memref_slice %arg15[%c0_i32] : memref<4x!tpu.dma_semaphore, #tpu.memory_space<semaphore_mem>> -> memref<1x!tpu.dma_semaphore, #tpu.memory_space<semaphore_mem>>
    %1 = tpu.memref_squeeze %0 : memref<1x!tpu.dma_semaphore, #tpu.memory_space<semaphore_mem>> -> memref<!tpu.dma_semaphore, #tpu.memory_space<semaphore_mem>>
    tpu.enqueue_dma source(%arg6 : memref<256x1024xbf16, #tpu.memory_space<any>>) target(%arg11 : memref<256x1024xbf16, #tpu.memory_space<vmem>>) target_semaphore(%1 : memref<!tpu.dma_semaphore, #tpu.memory_space<semaphore_mem>>)
    %c1_i32 = arith.constant 1 : i32
    %2 = tpu.memref_slice %arg15[%c1_i32] : memref<4x!tpu.dma_semaphore, #tpu.memory_space<semaphore_mem>> -> memref<1x!tpu.dma_semaphore, #tpu.memory_space<semaphore_mem>>
    %3 = tpu.memref_squeeze %2 : memref<1x!tpu.dma_semaphore, #tpu.memory_space<semaphore_mem>> -> memref<!tpu.dma_semaphore, #tpu.memory_space<semaphore_mem>>
    tpu.enqueue_dma source(%arg7 : memref<1024x1024xbf16, #tpu.memory_space<any>>) target(%arg12 : memref<1024x1024xbf16, #tpu.memory_space<vmem>>) target_semaphore(%3 : memref<!tpu.dma_semaphore, #tpu.memory_space<semaphore_mem>>)
    %c2_i32 = arith.constant 2 : i32
    %4 = tpu.memref_slice %arg15[%c2_i32] : memref<4x!tpu.dma_semaphore, #tpu.memory_space<semaphore_mem>> -> memref<1x!tpu.dma_semaphore, #tpu.memory_space<semaphore_mem>>
    %5 = tpu.memref_squeeze %4 : memref<1x!tpu.dma_semaphore, #tpu.memory_space<semaphore_mem>> -> memref<!tpu.dma_semaphore, #tpu.memory_space<semaphore_mem>>
    tpu.enqueue_dma source(%arg8 : memref<1024x2048xbf16, #tpu.memory_space<any>>) target(%arg13 : memref<1024x2048xbf16, #tpu.memory_space<vmem>>) target_semaphore(%5 : memref<!tpu.dma_semaphore, #tpu.memory_space<semaphore_mem>>)
    %c3_i32 = arith.constant 3 : i32
    %6 = tpu.memref_slice %arg15[%c3_i32] : memref<4x!tpu.dma_semaphore, #tpu.memory_space<semaphore_mem>> -> memref<1x!tpu.dma_semaphore, #tpu.memory_space<semaphore_mem>>
    %7 = tpu.memref_squeeze %6 : memref<1x!tpu.dma_semaphore, #tpu.memory_space<semaphore_mem>> -> memref<!tpu.dma_semaphore, #tpu.memory_space<semaphore_mem>>
    tpu.enqueue_dma source(%arg9 : memref<2048x128xbf16, #tpu.memory_space<any>>) target(%arg14 : memref<2048x128xbf16, #tpu.memory_space<vmem>>) target_semaphore(%7 : memref<!tpu.dma_semaphore, #tpu.memory_space<semaphore_mem>>)
    %c0 = arith.constant 0 : index
    %c0_0 = arith.constant 0 : index
    %8 = vector.load %arg1[%c0, %c0_0] : memref<8x256xbf16, #tpu.memory_space<vmem>>, vector<8x256xbf16>
    %c0_i32_1 = arith.constant 0 : i32
    %9 = tpu.memref_slice %arg15[%c0_i32_1] : memref<4x!tpu.dma_semaphore, #tpu.memory_space<semaphore_mem>> -> memref<1x!tpu.dma_semaphore, #tpu.memory_space<semaphore_mem>>
    %10 = tpu.memref_squeeze %9 : memref<1x!tpu.dma_semaphore, #tpu.memory_space<semaphore_mem>> -> memref<!tpu.dma_semaphore, #tpu.memory_space<semaphore_mem>>
    tpu.wait_dma2 semaphore(%10 : memref<!tpu.dma_semaphore, #tpu.memory_space<semaphore_mem>>) src(%arg6 : memref<256x1024xbf16, #tpu.memory_space<any>>) dst(%arg11 : memref<256x1024xbf16, #tpu.memory_space<vmem>>)
    %c0_2 = arith.constant 0 : index
    %c0_3 = arith.constant 0 : index
    %11 = vector.load %arg11[%c0_2, %c0_3] : memref<256x1024xbf16, #tpu.memory_space<vmem>>, vector<256x1024xbf16>
    %cst = arith.constant dense<0.000000e+00> : vector<8x1024xf32>
    %12 = tpu.matmul %8, %11, %cst {dimension_numbers = #tpu.dot_dimension_numbers<[1], [0], [0], [1], [0, 0, 1, 1], [], []>} : vector<8x256xbf16>, vector<256x1024xbf16>, vector<8x1024xf32> -> vector<8x1024xf32>
    %c0_4 = arith.constant 0 : index
    %c0_5 = arith.constant 0 : index
    %13 = vector.load %arg2[%c0_4, %c0_5] : memref<1x1024xf32, #tpu.memory_space<vmem>>, vector<1x1024xf32>
    %14 = vector.broadcast %13 : vector<1x1024xf32> to vector<8x1024xf32>
    %15 = arith.addf %12, %14 : vector<8x1024xf32>
    %cst_6 = arith.constant 0.000000e+00 : f32
    %16 = vector.broadcast %cst_6 : f32 to vector<8x1024xf32>
    %17 = arith.maximumf %15, %16 : vector<8x1024xf32>
    %18 = arith.truncf %17 : vector<8x1024xf32> to vector<8x1024xbf16>
    %c1_i32_7 = arith.constant 1 : i32
    %19 = tpu.memref_slice %arg15[%c1_i32_7] : memref<4x!tpu.dma_semaphore, #tpu.memory_space<semaphore_mem>> -> memref<1x!tpu.dma_semaphore, #tpu.memory_space<semaphore_mem>>
    %20 = tpu.memref_squeeze %19 : memref<1x!tpu.dma_semaphore, #tpu.memory_space<semaphore_mem>> -> memref<!tpu.dma_semaphore, #tpu.memory_space<semaphore_mem>>
    tpu.wait_dma2 semaphore(%20 : memref<!tpu.dma_semaphore, #tpu.memory_space<semaphore_mem>>) src(%arg7 : memref<1024x1024xbf16, #tpu.memory_space<any>>) dst(%arg12 : memref<1024x1024xbf16, #tpu.memory_space<vmem>>)
    %c0_8 = arith.constant 0 : index
    %c0_9 = arith.constant 0 : index
    %21 = vector.load %arg12[%c0_8, %c0_9] : memref<1024x1024xbf16, #tpu.memory_space<vmem>>, vector<1024x1024xbf16>
    %cst_10 = arith.constant dense<0.000000e+00> : vector<8x1024xf32>
    %22 = tpu.matmul %18, %21, %cst_10 {dimension_numbers = #tpu.dot_dimension_numbers<[1], [0], [0], [1], [0, 0, 1, 1], [], []>} : vector<8x1024xbf16>, vector<1024x1024xbf16>, vector<8x1024xf32> -> vector<8x1024xf32>
    %c0_11 = arith.constant 0 : index
    %c0_12 = arith.constant 0 : index
    %23 = vector.load %arg3[%c0_11, %c0_12] : memref<1x1024xf32, #tpu.memory_space<vmem>>, vector<1x1024xf32>
    %24 = vector.broadcast %23 : vector<1x1024xf32> to vector<8x1024xf32>
    %25 = arith.addf %22, %24 : vector<8x1024xf32>
    %cst_13 = arith.constant 0.000000e+00 : f32
    %26 = vector.broadcast %cst_13 : f32 to vector<8x1024xf32>
    %27 = arith.maximumf %25, %26 : vector<8x1024xf32>
    %28 = arith.truncf %27 : vector<8x1024xf32> to vector<8x1024xbf16>
    %c2_i32_14 = arith.constant 2 : i32
    %29 = tpu.memref_slice %arg15[%c2_i32_14] : memref<4x!tpu.dma_semaphore, #tpu.memory_space<semaphore_mem>> -> memref<1x!tpu.dma_semaphore, #tpu.memory_space<semaphore_mem>>
    %30 = tpu.memref_squeeze %29 : memref<1x!tpu.dma_semaphore, #tpu.memory_space<semaphore_mem>> -> memref<!tpu.dma_semaphore, #tpu.memory_space<semaphore_mem>>
    tpu.wait_dma2 semaphore(%30 : memref<!tpu.dma_semaphore, #tpu.memory_space<semaphore_mem>>) src(%arg8 : memref<1024x2048xbf16, #tpu.memory_space<any>>) dst(%arg13 : memref<1024x2048xbf16, #tpu.memory_space<vmem>>)
    %c0_15 = arith.constant 0 : index
    %c0_16 = arith.constant 0 : index
    %31 = vector.load %arg13[%c0_15, %c0_16] : memref<1024x2048xbf16, #tpu.memory_space<vmem>>, vector<1024x2048xbf16>
    %cst_17 = arith.constant dense<0.000000e+00> : vector<8x2048xf32>
    %32 = tpu.matmul %28, %31, %cst_17 {dimension_numbers = #tpu.dot_dimension_numbers<[1], [0], [0], [1], [0, 0, 1, 1], [], []>} : vector<8x1024xbf16>, vector<1024x2048xbf16>, vector<8x2048xf32> -> vector<8x2048xf32>
    %c0_18 = arith.constant 0 : index
    %c0_19 = arith.constant 0 : index
    %33 = vector.load %arg4[%c0_18, %c0_19] : memref<1x2048xf32, #tpu.memory_space<vmem>>, vector<1x2048xf32>
    %34 = vector.broadcast %33 : vector<1x2048xf32> to vector<8x2048xf32>
    %35 = arith.addf %32, %34 : vector<8x2048xf32>
    %cst_20 = arith.constant 0.000000e+00 : f32
    %36 = vector.broadcast %cst_20 : f32 to vector<8x2048xf32>
    %37 = arith.maximumf %35, %36 : vector<8x2048xf32>
    %38 = arith.truncf %37 : vector<8x2048xf32> to vector<8x2048xbf16>
    %c3_i32_21 = arith.constant 3 : i32
    %39 = tpu.memref_slice %arg15[%c3_i32_21] : memref<4x!tpu.dma_semaphore, #tpu.memory_space<semaphore_mem>> -> memref<1x!tpu.dma_semaphore, #tpu.memory_space<semaphore_mem>>
    %40 = tpu.memref_squeeze %39 : memref<1x!tpu.dma_semaphore, #tpu.memory_space<semaphore_mem>> -> memref<!tpu.dma_semaphore, #tpu.memory_space<semaphore_mem>>
    tpu.wait_dma2 semaphore(%40 : memref<!tpu.dma_semaphore, #tpu.memory_space<semaphore_mem>>) src(%arg9 : memref<2048x128xbf16, #tpu.memory_space<any>>) dst(%arg14 : memref<2048x128xbf16, #tpu.memory_space<vmem>>)
    %c0_22 = arith.constant 0 : index
    %c0_23 = arith.constant 0 : index
    %41 = vector.load %arg14[%c0_22, %c0_23] : memref<2048x128xbf16, #tpu.memory_space<vmem>>, vector<2048x128xbf16>
    %cst_24 = arith.constant dense<0.000000e+00> : vector<8x128xf32>
    %42 = tpu.matmul %38, %41, %cst_24 {dimension_numbers = #tpu.dot_dimension_numbers<[1], [0], [0], [1], [0, 0, 1, 1], [], []>} : vector<8x2048xbf16>, vector<2048x128xbf16>, vector<8x128xf32> -> vector<8x128xf32>
    %c0_25 = arith.constant 0 : index
    %c0_26 = arith.constant 0 : index
    %43 = vector.load %arg5[%c0_25, %c0_26] : memref<1x128xf32, #tpu.memory_space<vmem>>, vector<1x128xf32>
    %44 = vector.broadcast %43 : vector<1x128xf32> to vector<8x128xf32>
    %45 = arith.addf %42, %44 : vector<8x128xf32>
    %c0_27 = arith.constant 0 : index
    %c0_28 = arith.constant 0 : index
    %46 = vector.load %arg10[%c0_27, %c0_28] : memref<8x128xf32, #tpu.memory_space<vmem>>, vector<8x128xf32>
    tpu.vector_store %arg10[%c0_27, %c0_28], %45 {strides = array<i32>} : memref<8x128xf32, #tpu.memory_space<vmem>>, vector<8x128xf32>,
    return
  }
  func.func @transform_0(%arg0: i32) -> (i32, i32) {
    %c0_i32 = arith.constant 0 : i32
    %c0_i32_0 = arith.constant 0 : i32
    %c0_i32_1 = arith.constant 0 : i32
    return %c0_i32, %c0_i32_0 : i32, i32
  }
  func.func @transform_1(%arg0: i32) -> (i32, i32) {
    %c0_i32 = arith.constant 0 : i32
    %c0_i32_0 = arith.constant 0 : i32
    %c0_i32_1 = arith.constant 0 : i32
    return %c0_i32, %c0_i32_0 : i32, i32
  }
  func.func @transform_2(%arg0: i32) -> (i32, i32) {
    %c0_i32 = arith.constant 0 : i32
    %c0_i32_0 = arith.constant 0 : i32
    %c0_i32_1 = arith.constant 0 : i32
    return %c0_i32, %c0_i32_0 : i32, i32
  }
  func.func @transform_3(%arg0: i32) -> (i32, i32) {
    %c0_i32 = arith.constant 0 : i32
    %c0_i32_0 = arith.constant 0 : i32
    %c0_i32_1 = arith.constant 0 : i32
    return %c0_i32, %c0_i32_0 : i32, i32
  }
  func.func @transform_4(%arg0: i32) -> (i32, i32) {
    %c0_i32 = arith.constant 0 : i32
    %c0_i32_0 = arith.constant 0 : i32
    %c0_i32_1 = arith.constant 0 : i32
    return %c0_i32, %c0_i32_0 : i32, i32
  }
  func.func @transform_9(%arg0: i32) -> (i32, i32) {
    %c0_i32 = arith.constant 0 : i32
    %c0_i32_0 = arith.constant 0 : i32
    %c0_i32_1 = arith.constant 0 : i32
    return %c0_i32, %c0_i32_0 : i32, i32
  }
}

</mosaic_0001>

<llo_original>
// kernel: fc_net_forward.1
$region0: #{fc_net_forward.1}
  #allocation0 [shape = 'u32[]', space=smem, size = 0x4, offset = 0x4, fixed_abs, tag = 'smem constant byte address 0x4 - core index']
  #allocation1 [shape = 'u32[144,128]{1,0:T(1,128)}', space=vmem, size = 0x12000, scoped, tag = 'internal scratch']
  #allocation2 [shape = 'bf16[256,1024]{1,0:T(16,128)(2,1)}', space=vmem, size = 0x80000, scoped, tag = 'scratch operand']
  #allocation3 [shape = 'bf16[1024,1024]{1,0:T(16,128)(2,1)}', space=vmem, size = 0x200000, scoped, tag = 'scratch operand']
  #allocation4 [shape = 'bf16[1024,2048]{1,0:T(16,128)(2,1)}', space=vmem, size = 0x400000, scoped, tag = 'scratch operand']
  #allocation5 [shape = 'bf16[2048,128]{1,0:T(16,128)(2,1)}', space=vmem, size = 0x80000, scoped, tag = 'scratch operand']
  #allocation6 [shape = 's32[4]{0}', space=sflag, size = 0x10, scoped, tag = 'scratch operand']
  #allocation16 [shape = 's32[]', space=sflag, size = 0x4, offset = 0, fixed_abs, tag = 'sflag constant byte address 0x0 - dummy sync flag']
  #allocation18 [shape = 's32[]', space=sflag, size = 0x4, offset = 0, fixed_abs, tag = 'sflag constant byte address 0x0 - dummy sync flag']
  #allocation20 [shape = 's32[]', space=sflag, size = 0x4, offset = 0, fixed_abs, tag = 'sflag constant byte address 0x0 - dummy sync flag']
  #allocation22 [shape = 's32[]', space=sflag, size = 0x4, offset = 0, fixed_abs, tag = 'sflag constant byte address 0x0 - dummy sync flag']
  #allocation23 [shape = 's32[]', space=sflag, size = 0x4, offset = 0, fixed_abs, tag = 'sflag constant byte address 0x0 - dummy sync flag']
  #allocation24 [shape = 'u32[]', space=smem, size = 0x4, offset = 0x44, fixed_abs, tag = 'smem constant byte address 0x44 - assertion arg 0']
  #allocation25 [shape = 'u32[]', space=smem, size = 0x4, offset = 0x48, fixed_abs, tag = 'smem constant byte address 0x48 - assertion arg 1']
  %s0 = inlined_call_operand.vmem [shape: bf16[8,256], index: 0, kind: input, shape index: {}]
  %s1 = inlined_call_operand.hbm [shape: f32[1,1024], index: 1, kind: input, shape index: {}]
  %s2 = inlined_call_operand.hbm [shape: f32[1,1024], index: 2, kind: input, shape index: {}]
  %s3 = inlined_call_operand.hbm [shape: f32[1,2048], index: 3, kind: input, shape index: {}]
  %s4 = inlined_call_operand.hbm [shape: f32[1,128], index: 4, kind: input, shape index: {}]
  %s5 = inlined_call_operand.hbm [shape: bf16[256,1024], index: 5, kind: input, shape index: {}]
  %s6 = inlined_call_operand.hbm [shape: bf16[1024,1024], index: 6, kind: input, shape index: {}]
  %s7 = inlined_call_operand.hbm [shape: bf16[1024,2048], index: 7, kind: input, shape index: {}]
  %s8 = inlined_call_operand.hbm [shape: bf16[2048,128], index: 8, kind: input, shape index: {}]
  %s9 = inlined_call_operand.hbm [shape: f32[8,128], index: 9, kind: output, shape index: {}]
  %s10 = sld [smem:[#allocation0]]
  $region50: #{fc_net_forward.1} parent=0
    _
  %s12 = ssub.s32 1, %s10
  %s13 = scalar_select 0, %s12, %s10
  $region1: #{fc_net_forward.1} parent=0
    #allocation7 [shape = 'u8[4096]{0}', space=vmem, size = 0x1000, scoped, tag = 'input window, operand 1, single buffered']
    #allocation8 [shape = 's32[1]{0}', space=sflag, size = 0x4, scoped, tag = 'scoped memory for fc_net_forward.1']
    #allocation9 [shape = 's32[1]{0}', space=sflag, size = 0x4, scoped, tag = 'scoped memory for fc_net_forward.1']
    #allocation10 [shape = 'u8[4096]{0}', space=vmem, size = 0x1000, scoped, tag = 'input window, operand 2, single buffered']
    #allocation11 [shape = 's32[1]{0}', space=sflag, size = 0x4, scoped, tag = 'scoped memory for fc_net_forward.1']
    #allocation12 [shape = 'u8[8192]{0}', space=vmem, size = 0x2000, scoped, tag = 'input window, operand 3, single buffered']
    #allocation13 [shape = 'u8[512]{0}', space=vmem, size = 0x400, scoped, tag = 'input window, operand 4, single buffered']
    #allocation14 [shape = 's32[1]{0}', space=sflag, size = 0x4, scoped, tag = 'scoped memory for fc_net_forward.1']
    #allocation15 [shape = 'u8[4096]{0}', space=vmem, size = 0x1000, scoped, tag = 'output window, operand 0, single buffered']
    #allocation17 [shape = 'u32[9]{0}', space=smem, size = 0x24, scoped, tag = 'DMA stride descriptor']
    #allocation19 [shape = 'u32[9]{0}', space=smem, size = 0x24, scoped, tag = 'DMA stride descriptor']
    #allocation21 [shape = 'u32[9]{0}', space=smem, size = 0x24, scoped, tag = 'DMA stride descriptor']
    %14 = vsyncpa [#allocation8], 0
    %15 = vsyncpa [#allocation11], 0
    %16 = vsyncpa [#allocation14], 0
    %17 = vsyncpa [#allocation9], 0
    // Predicated region
    $region2: #{fc_net_forward.1} parent=1 // pred_check
      _
    $region3: #{fc_net_forward.1} parent=1 // pred_check_branch
      %19 = sbr.rel (0) target = $region5
    $region4: #{fc_net_forward.1} parent=1 // pred_region
      _
    $region5: #{fc_net_forward.1} parent=1 // pred_fallthru
      _
    // Predicated region
    $region6: #{fc_net_forward.1} parent=1 // pred_check
      _
    $region7: #{fc_net_forward.1} parent=1 // pred_check_branch
      %21 = sbr.rel (0) target = $region9
    $region8: #{fc_net_forward.1} parent=1 // pred_region
      %s23 = ssub.s32 128, 128
      %24 = vsyncadd [#allocation8], %s23
      %s26 = sshll.u32 [#allocation7], 4
      %s27 = int_to_ptr.vmem [resolvable:$true] %s26
      %29 = dma.hbm_to_vmem [thread:$0]  %s1, 128, %s27, [#allocation8]
    $region9: #{fc_net_forward.1} parent=1 // pred_fallthru
      _
    // Predicated region
    $region10: #{fc_net_forward.1} parent=1 // pred_check
      _
    $region11: #{fc_net_forward.1} parent=1 // pred_check_branch
      %31 = sbr.rel (0) target = $region13
    $region12: #{fc_net_forward.1} parent=1 // pred_region
      %s33 = ssub.s32 128, 128
      %34 = vsyncadd [#allocation11], %s33
      %s36 = sshll.u32 [#allocation10], 4
      %s37 = int_to_ptr.vmem [resolvable:$true] %s36
      %39 = dma.hbm_to_vmem [thread:$0]  %s2, 128, %s37, [#allocation11]
    $region13: #{fc_net_forward.1} parent=1 // pred_fallthru
      _
    // Predicated region
    $region14: #{fc_net_forward.1} parent=1 // pred_check
      _
    $region15: #{fc_net_forward.1} parent=1 // pred_check_branch
      %41 = sbr.rel (0) target = $region17
    $region16: #{fc_net_forward.1} parent=1 // pred_region
      %s43 = ssub.s32 256, 256
      %44 = vsyncadd [#allocation11], %s43
      %s46 = sshll.u32 [#allocation12], 4
      %s47 = int_to_ptr.vmem [resolvable:$true] %s46
      %49 = dma.hbm_to_vmem [thread:$0]  %s3, 256, %s47, [#allocation11]
    $region17: #{fc_net_forward.1} parent=1 // pred_fallthru
      _
    // Predicated region
    $region18: #{fc_net_forward.1} parent=1 // pred_check
      _
    $region19: #{fc_net_forward.1} parent=1 // pred_check_branch
      %51 = sbr.rel (0) target = $region21
    $region20: #{fc_net_forward.1} parent=1 // pred_region
      %s53 = ssub.s32 16, 16
      %54 = vsyncadd [#allocation14], %s53
      %s56 = sshll.u32 [#allocation13], 4
      %s57 = int_to_ptr.vmem [resolvable:$true] %s56
      %59 = dma.hbm_to_vmem [thread:$0]  %s4, 16, %s57, [#allocation14]
    $region21: #{fc_net_forward.1} parent=1 // pred_fallthru
      _
    // Predicated region
    $region22: #{fc_net_forward.1} parent=1 // pred_check
      _
    $region23: #{fc_net_forward.1} parent=1 // pred_check_branch
      %61 = sbr.rel (0) target = $region25
    $region24: #{fc_net_forward.1} parent=1 // pred_region
      %62 = dma.done [#allocation8], 128
    $region25: #{fc_net_forward.1} parent=1 // pred_fallthru
      _
    // Predicated region
    $region26: #{fc_net_forward.1} parent=1 // pred_check
      _
    $region27: #{fc_net_forward.1} parent=1 // pred_check_branch
      %64 = sbr.rel (0) target = $region29
    $region28: #{fc_net_forward.1} parent=1 // pred_region
      %65 = dma.done [#allocation11], 128
    $region29: #{fc_net_forward.1} parent=1 // pred_fallthru
      _
    // Predicated region
    $region30: #{fc_net_forward.1} parent=1 // pred_check
      _
    $region31: #{fc_net_forward.1} parent=1 // pred_check_branch
      %67 = sbr.rel (0) target = $region33
    $region32: #{fc_net_forward.1} parent=1 // pred_region
      %68 = dma.done [#allocation11], 256
    $region33: #{fc_net_forward.1} parent=1 // pred_fallthru
      _
    // Predicated region
    $region34: #{fc_net_forward.1} parent=1 // pred_check
      _
    $region35: #{fc_net_forward.1} parent=1 // pred_check_branch
      %70 = sbr.rel (0) target = $region37
    $region36: #{fc_net_forward.1} parent=1 // pred_region
      %71 = dma.done [#allocation14], 16
    $region37: #{fc_net_forward.1} parent=1 // pred_fallthru
      _
    %s74 = sshll.u32 1, 14
    %s75 = sxor.u32 4294967295, %s74
    %s77 = sld [smem:[#allocation0]]
    %s78 = sadd.s32 2, %s77
    %s80 = sshll.u32 7, 26
    %s81 = sxor.u32 4294967295, %s80
    %s82 = sand.u32 0, %s81
    %s83 = sshll.u32 %s78, 26
    %s84 = sor.u32 %s82, %s83
    %s85 = sshll.u32 [#allocation2], 4
    %s86 = int_to_ptr.vmem [resolvable:$true] %s85
    %89 = sst [smem:[#allocation17]] 1024
    %s90 = scalar_lea.smem [#allocation17], 1
    %91 = sst [smem:[%s90]] 1024
    %s92 = scalar_lea.smem [#allocation17], 2
    %93 = sst [smem:[%s92]] 8
    %s94 = scalar_lea.smem [#allocation17], 3
    %95 = sst [smem:[%s94]] 64
    %s96 = scalar_lea.smem [#allocation17], 4
    %97 = sst [smem:[%s96]] 128
    %s98 = scalar_lea.smem [#allocation17], 5
    %99 = sst [smem:[%s98]] 2
    %s100 = scalar_lea.smem [#allocation17], 6
    %101 = sst [smem:[%s100]] 512
    %s102 = scalar_lea.smem [#allocation17], 7
    %103 = sst [smem:[%s102]] 64
    %s104 = scalar_lea.smem [#allocation17], 8
    %105 = sst [smem:[%s104]] 4
    %107 = dma.general %s5, 16384, %s86, [#allocation6], [#allocation16], [#allocation17], %s84, 0
    %s108 = scalar_lea.sflag [#allocation6], 1
    %s110 = sshll.u32 1, 14
    %s111 = sxor.u32 4294967295, %s110
    %s113 = sadd.s32 2, %s77
    %s115 = sshll.u32 7, 26
    %s116 = sxor.u32 4294967295, %s115
    %s117 = sand.u32 0, %s116
    %s118 = sshll.u32 %s113, 26
    %s119 = sor.u32 %s117, %s118
    %s120 = sshll.u32 [#allocation3], 4
    %s121 = int_to_ptr.vmem [resolvable:$true] %s120
    %124 = sst [smem:[#allocation19]] 1024
    %s125 = scalar_lea.smem [#allocation19], 1
    %126 = sst [smem:[%s125]] 1024
    %s127 = scalar_lea.smem [#allocation19], 2
    %128 = sst [smem:[%s127]] 8
    %s129 = scalar_lea.smem [#allocation19], 3
    %130 = sst [smem:[%s129]] 64
    %s131 = scalar_lea.smem [#allocation19], 4
    %132 = sst [smem:[%s131]] 128
    %s133 = scalar_lea.smem [#allocation19], 5
    %134 = sst [smem:[%s133]] 2
    %s135 = scalar_lea.smem [#allocation19], 6
    %136 = sst [smem:[%s135]] 512
    %s137 = scalar_lea.smem [#allocation19], 7
    %138 = sst [smem:[%s137]] 64
    %s139 = scalar_lea.smem [#allocation19], 8
    %140 = sst [smem:[%s139]] 4
    %142 = dma.general %s6, 65536, %s121, %s108, [#allocation18], [#allocation19], %s119, 0
    %s143 = scalar_lea.sflag [#allocation6], 2
    %s145 = sshll.u32 1, 14
    %s146 = sxor.u32 4294967295, %s145
    %s148 = sadd.s32 2, %s77
    %s150 = sshll.u32 7, 26
    %s151 = sxor.u32 4294967295, %s150
    %s152 = sand.u32 0, %s151
    %s153 = sshll.u32 %s148, 26
    %s154 = sor.u32 %s152, %s153
    %s155 = sshll.u32 [#allocation4], 4
    %s156 = int_to_ptr.vmem [resolvable:$true] %s155
    %159 = sst [smem:[#allocation21]] 2048
    %s160 = scalar_lea.smem [#allocation21], 1
    %161 = sst [smem:[%s160]] 2048
    %s162 = scalar_lea.smem [#allocation21], 2
    %163 = sst [smem:[%s162]] 16
    %s164 = scalar_lea.smem [#allocation21], 3
    %165 = sst [smem:[%s164]] 64
    %s166 = scalar_lea.smem [#allocation21], 4
    %167 = sst [smem:[%s166]] 128
    %s168 = scalar_lea.smem [#allocation21], 5
    %169 = sst [smem:[%s168]] 2
    %s170 = scalar_lea.smem [#allocation21], 6
    %171 = sst [smem:[%s170]] 1024
    %s172 = scalar_lea.smem [#allocation21], 7
    %173 = sst [smem:[%s172]] 64
    %s174 = scalar_lea.smem [#allocation21], 8
    %175 = sst [smem:[%s174]] 4
    %177 = dma.general %s7, 131072, %s156, %s143, [#allocation20], [#allocation21], %s154, 0
    %s178 = scalar_lea.sflag [#allocation6], 3
    // Predicated region
    $region38: #{fc_net_forward.1} parent=1 // pred_check
      _
    $region39: #{fc_net_forward.1} parent=1 // pred_check_branch
      %180 = sbr.rel target = $region41
    $region40: #{fc_net_forward.1} parent=1 // pred_region
      %181 = sst [smem:[#allocation24]] [#allocation23]
      %182 = sst [smem:[#allocation25]] [#allocation22]
    $region41: #{fc_net_forward.1} parent=1 // pred_fallthru
      _
    %184 = shalt.err (0)
    %s186 = sshll.u32 [#allocation5], 4
    %s187 = int_to_ptr.vmem [resolvable:$true] %s186
    %189 = dma.hbm_to_vmem [thread:$0]  %s8, 16384, %s187, %s178
    %v190 = vld [vmem:[%s0] sm:$0xff]
    %s191 = smul.u32 4, 32
    %s192 = smul.u32 %s191, 8
    %s193 = sshll.u32 %s192, 4
    %194 = dma.done [#allocation6], %s193
    %v195 = vld [vmem:[#allocation2] sm:$0xff]
    %v196 = vld [vmem:[#allocation2 + $0x8] sm:$0xff]
    %v197 = vld [vmem:[#allocation2 + $0x10] sm:$0xff]
    %v198 = vld [vmem:[#allocation2 + $0x18] sm:$0xff]
    %v199 = vld [vmem:[#allocation2 + $0x20] sm:$0xff]
    %v200 = vld [vmem:[#allocation2 + $0x28] sm:$0xff]
    %v201 = vld [vmem:[#allocation2 + $0x30] sm:$0xff]
    %v202 = vld [vmem:[#allocation2 + $0x38] sm:$0xff]
    %v203 = vld [vmem:[#allocation2 + $0x40] sm:$0xff]
    %v204 = vld [vmem:[#allocation2 + $0x48] sm:$0xff]
    %v205 = vld [vmem:[#allocation2 + $0x50] sm:$0xff]
    %v206 = vld [vmem:[#allocation2 + $0x58] sm:$0xff]
    %v207 = vld [vmem:[#allocation2 + $0x60] sm:$0xff]
    %v208 = vld [vmem:[#allocation2 + $0x68] sm:$0xff]
    %v209 = vld [vmem:[#allocation2 + $0x70] sm:$0xff]
    %v210 = vld [vmem:[#allocation2 + $0x78] sm:$0xff]
    %v211 = vld [vmem:[#allocation2 + $0x80] sm:$0xff]
    %v212 = vld [vmem:[#allocation2 + $0x88] sm:$0xff]
    %v213 = vld [vmem:[#allocation2 + $0x90] sm:$0xff]
    %v214 = vld [vmem:[#allocation2 + $0x98] sm:$0xff]
    %v215 = vld [vmem:[#allocation2 + $0xa0] sm:$0xff]
    %v216 = vld [vmem:[#allocation2 + $0xa8] sm:$0xff]
    %v217 = vld [vmem:[#allocation2 + $0xb0] sm:$0xff]
    %v218 = vld [vmem:[#allocation2 + $0xb8] sm:$0xff]
    %v219 = vld [vmem:[#allocation2 + $0xc0] sm:$0xff]
    %v220 = vld [vmem:[#allocation2 + $0xc8] sm:$0xff]
    %v221 = vld [vmem:[#allocation2 + $0xd0] sm:$0xff]
    %v222 = vld [vmem:[#allocation2 + $0xd8] sm:$0xff]
    %v223 = vld [vmem:[#allocation2 + $0xe0] sm:$0xff]
    %v224 = vld [vmem:[#allocation2 + $0xe8] sm:$0xff]
    %v225 = vld [vmem:[#allocation2 + $0xf0] sm:$0xff]
    %v226 = vld [vmem:[#allocation2 + $0xf8] sm:$0xff]
    %v227 = vld [vmem:[#allocation2 + $0x100] sm:$0xff]
    %v228 = vld [vmem:[#allocation2 + $0x108] sm:$0xff]
    %v229 = vld [vmem:[#allocation2 + $0x110] sm:$0xff]
    %v230 = vld [vmem:[#allocation2 + $0x118] sm:$0xff]
    %v231 = vld [vmem:[#allocation2 + $0x120] sm:$0xff]
    %v232 = vld [vmem:[#allocation2 + $0x128] sm:$0xff]
    %v233 = vld [vmem:[#allocation2 + $0x130] sm:$0xff]
    %v234 = vld [vmem:[#allocation2 + $0x138] sm:$0xff]
    %v235 = vld [vmem:[#allocation2 + $0x140] sm:$0xff]
    %v236 = vld [vmem:[#allocation2 + $0x148] sm:$0xff]
    %v237 = vld [vmem:[#allocation2 + $0x150] sm:$0xff]
    %v238 = vld [vmem:[#allocation2 + $0x158] sm:$0xff]
    %v239 = vld [vmem:[#allocation2 + $0x160] sm:$0xff]
    %v240 = vld [vmem:[#allocation2 + $0x168] sm:$0xff]
    %v241 = vld [vmem:[#allocation2 + $0x170] sm:$0xff]
    %v242 = vld [vmem:[#allocation2 + $0x178] sm:$0xff]
    %v243 = vld [vmem:[#allocation2 + $0x180] sm:$0xff]
    %v244 = vld [vmem:[#allocation2 + $0x188] sm:$0xff]
    %v245 = vld [vmem:[#allocation2 + $0x190] sm:$0xff]
    %v246 = vld [vmem:[#allocation2 + $0x198] sm:$0xff]
    %v247 = vld [vmem:[#allocation2 + $0x1a0] sm:$0xff]
    %v248 = vld [vmem:[#allocation2 + $0x1a8] sm:$0xff]
    %v249 = vld [vmem:[#allocation2 + $0x1b0] sm:$0xff]
    %v250 = vld [vmem:[#allocation2 + $0x1b8] sm:$0xff]
    %v251 = vld [vmem:[#allocation2 + $0x1c0] sm:$0xff]
    %v252 = vld [vmem:[#allocation2 + $0x1c8] sm:$0xff]
    %v253 = vld [vmem:[#allocation2 + $0x1d0] sm:$0xff]
    %v254 = vld [vmem:[#allocation2 + $0x1d8] sm:$0xff]
    %v255 = vld [vmem:[#allocation2 + $0x1e0] sm:$0xff]
    %v256 = vld [vmem:[#allocation2 + $0x1e8] sm:$0xff]
    %v257 = vld [vmem:[#allocation2 + $0x1f0] sm:$0xff]
    %v258 = vld [vmem:[#allocation2 + $0x1f8] sm:$0xff]
    %v259 = vld [vmem:[#allocation2 + $0x200] sm:$0xff]
    %v260 = vld [vmem:[#allocation2 + $0x208] sm:$0xff]
    %v261 = vld [vmem:[#allocation2 + $0x210] sm:$0xff]
    %v262 = vld [vmem:[#allocation2 + $0x218] sm:$0xff]
    %v263 = vld [vmem:[#allocation2 + $0x220] sm:$0xff]
    %v264 = vld [vmem:[#allocation2 + $0x228] sm:$0xff]
    %v265 = vld [vmem:[#allocation2 + $0x230] sm:$0xff]
    %v266 = vld [vmem:[#allocation2 + $0x238] sm:$0xff]
    %v267 = vld [vmem:[#allocation2 + $0x240] sm:$0xff]
    %v268 = vld [vmem:[#allocation2 + $0x248] sm:$0xff]
    %v269 = vld [vmem:[#allocation2 + $0x250] sm:$0xff]
    %v270 = vld [vmem:[#allocation2 + $0x258] sm:$0xff]
    %v271 = vld [vmem:[#allocation2 + $0x260] sm:$0xff]
    %v272 = vld [vmem:[#allocation2 + $0x268] sm:$0xff]
    %v273 = vld [vmem:[#allocation2 + $0x270] sm:$0xff]
    %v274 = vld [vmem:[#allocation2 + $0x278] sm:$0xff]
    %v275 = vld [vmem:[#allocation2 + $0x280] sm:$0xff]
    %v276 = vld [vmem:[#allocation2 + $0x288] sm:$0xff]
    %v277 = vld [vmem:[#allocation2 + $0x290] sm:$0xff]
    %v278 = vld [vmem:[#allocation2 + $0x298] sm:$0xff]
    %v279 = vld [vmem:[#allocation2 + $0x2a0] sm:$0xff]
    %v280 = vld [vmem:[#allocation2 + $0x2a8] sm:$0xff]
    %v281 = vld [vmem:[#allocation2 + $0x2b0] sm:$0xff]
    %v282 = vld [vmem:[#allocation2 + $0x2b8] sm:$0xff]
    %v283 = vld [vmem:[#allocation2 + $0x2c0] sm:$0xff]
    %v284 = vld [vmem:[#allocation2 + $0x2c8] sm:$0xff]
    %v285 = vld [vmem:[#allocation2 + $0x2d0] sm:$0xff]
    %v286 = vld [vmem:[#allocation2 + $0x2d8] sm:$0xff]
    %v287 = vld [vmem:[#allocation2 + $0x2e0] sm:$0xff]
    %v288 = vld [vmem:[#allocation2 + $0x2e8] sm:$0xff]
    %v289 = vld [vmem:[#allocation2 + $0x2f0] sm:$0xff]
    %v290 = vld [vmem:[#allocation2 + $0x2f8] sm:$0xff]
    %v291 = vld [vmem:[#allocation2 + $0x300] sm:$0xff]
    %v292 = vld [vmem:[#allocation2 + $0x308] sm:$0xff]
    %v293 = vld [vmem:[#allocation2 + $0x310] sm:$0xff]
    %v294 = vld [vmem:[#allocation2 + $0x318] sm:$0xff]
    %v295 = vld [vmem:[#allocation2 + $0x320] sm:$0xff]
    %v296 = vld [vmem:[#allocation2 + $0x328] sm:$0xff]
    %v297 = vld [vmem:[#allocation2 + $0x330] sm:$0xff]
    %v298 = vld [vmem:[#allocation2 + $0x338] sm:$0xff]
    %v299 = vld [vmem:[#allocation2 + $0x340] sm:$0xff]
    %v300 = vld [vmem:[#allocation2 + $0x348] sm:$0xff]
    %v301 = vld [vmem:[#allocation2 + $0x350] sm:$0xff]
    %v302 = vld [vmem:[#allocation2 + $0x358] sm:$0xff]
    %v303 = vld [vmem:[#allocation2 + $0x360] sm:$0xff]
    %v304 = vld [vmem:[#allocation2 + $0x368] sm:$0xff]
    %v305 = vld [vmem:[#allocation2 + $0x370] sm:$0xff]
    %v306 = vld [vmem:[#allocation2 + $0x378] sm:$0xff]
    %v307 = vld [vmem:[#allocation2 + $0x380] sm:$0xff]
    %v308 = vld [vmem:[#allocation2 + $0x388] sm:$0xff]
    %v309 = vld [vmem:[#allocation2 + $0x390] sm:$0xff]
    %v310 = vld [vmem:[#allocation2 + $0x398] sm:$0xff]
    %v311 = vld [vmem:[#allocation2 + $0x3a0] sm:$0xff]
    %v312 = vld [vmem:[#allocation2 + $0x3a8] sm:$0xff]
    %v313 = vld [vmem:[#allocation2 + $0x3b0] sm:$0xff]
    %v314 = vld [vmem:[#allocation2 + $0x3b8] sm:$0xff]
    %v315 = vld [vmem:[#allocation2 + $0x3c0] sm:$0xff]
    %v316 = vld [vmem:[#allocation2 + $0x3c8] sm:$0xff]
    %v317 = vld [vmem:[#allocation2 + $0x3d0] sm:$0xff]
    %v318 = vld [vmem:[#allocation2 + $0x3d8] sm:$0xff]
    %v319 = vld [vmem:[#allocation2 + $0x3e0] sm:$0xff]
    %v320 = vld [vmem:[#allocation2 + $0x3e8] sm:$0xff]
    %v321 = vld [vmem:[#allocation2 + $0x3f0] sm:$0xff]
    %v322 = vld [vmem:[#allocation2 + $0x3f8] sm:$0xff]
    %v323 = vld [vmem:[#allocation7] sm:$0xff]
    %v325 = vlaneseq
    %v326 = vshrl.u32 %v325, 7
    %v327 = vsub.s32 0, %v326
    %v328 = vrot.slane %v323, %v327
    %v329 = vlaneseq
    %v330 = vshrl.u32 %v329, 7
    %v331 = vsub.s32 1, %v330
    %v332 = vrot.slane %v323, %v331
    %v333 = vlaneseq
    %v334 = vshrl.u32 %v333, 7
    %v335 = vsub.s32 2, %v334
    %v336 = vrot.slane %v323, %v335
    %v337 = vlaneseq
    %v338 = vshrl.u32 %v337, 7
    %v339 = vsub.s32 3, %v338
    %v340 = vrot.slane %v323, %v339
    %v341 = vlaneseq
    %v342 = vshrl.u32 %v341, 7
    %v343 = vsub.s32 4, %v342
    %v344 = vrot.slane %v323, %v343
    %v345 = vlaneseq
    %v346 = vshrl.u32 %v345, 7
    %v347 = vsub.s32 5, %v346
    %v348 = vrot.slane %v323, %v347
    %v349 = vlaneseq
    %v350 = vshrl.u32 %v349, 7
    %v351 = vsub.s32 6, %v350
    %v352 = vrot.slane %v323, %v351
    %v353 = vlaneseq
    %v354 = vshrl.u32 %v353, 7
    %v355 = vsub.s32 7, %v354
    %v356 = vrot.slane %v323, %v355
    %v366 = vunpack.c.l.b16 %v190
    %v367 = vunpack.c.h.b16 %v190
    %v368 = vpack.c.b16 %v366, %v366
    %v369 = vpack.c.b16 %v367, %v367
    %372 = vmatprep.subr.bf16.mxu0 %v196
    %373 = vmatpush1.bf16.msra.mxu0 %v195
    %374 = vmatprep.subr.bf16.mxu0 %v204
    %375 = vmatpush1.bf16.msra.mxu0 %v203
    %376 = vmatprep.subr.bf16.mxu0 %v212
    %377 = vmatpush1.bf16.msra.mxu0 %v211
    %378 = vmatprep.subr.bf16.mxu0 %v220
    %379 = vmatpush1.bf16.msra.mxu0 %v219
    %380 = vmatprep.subr.bf16.mxu0 %v228
    %381 = vmatpush1.bf16.msra.mxu0 %v227
    %382 = vmatprep.subr.bf16.mxu0 %v236
    %383 = vmatpush1.bf16.msra.mxu0 %v235
    %384 = vmatprep.subr.bf16.mxu0 %v244
    %385 = vmatpush1.bf16.msra.mxu0 %v243
    %386 = vmatprep.subr.bf16.mxu0 %v252
    %387 = vmatpush1.bf16.msra.mxu0 %v251
    %388 = vmatprep.subr.bf16.mxu0 %v260
    %389 = vmatpush1.bf16.msra.mxu0 %v259
    %390 = vmatprep.subr.bf16.mxu0 %v268
    %391 = vmatpush1.bf16.msra.mxu0 %v267
    %392 = vmatprep.subr.bf16.mxu0 %v276
    %393 = vmatpush1.bf16.msra.mxu0 %v275
    %394 = vmatprep.subr.bf16.mxu0 %v284
    %395 = vmatpush1.bf16.msra.mxu0 %v283
    %396 = vmatprep.subr.bf16.mxu0 %v292
    %397 = vmatpush1.bf16.msra.mxu0 %v291
    %398 = vmatprep.subr.bf16.mxu0 %v300
    %399 = vmatpush1.bf16.msra.mxu0 %v299
    %400 = vmatprep.subr.bf16.mxu0 %v308
    %401 = vmatpush1.bf16.msra.mxu0 %v307
    %402 = vmatprep.subr.bf16.mxu0 %v316
    %403 = vmatpush1.bf16.msra.mxu0 %v315
    %404 = vmatprep.mubr.bf16.mxu0 %v369
    %405 = vmatmul.mubr.bf16.gmra.mrb[0].mxu0 %v368
    %v406 = vpop.f32.mrb[0].mxu0
    %v407 = vadd.f32 %v328, %v406
    %v408 = vpop.f32.mrb[0].mxu0
    %v409 = vadd.f32 %v332, %v408
    %v410 = vpop.f32.mrb[0].mxu0
    %v411 = vpop.f32.mrb[0].mxu0
    %412 = vdwg.mxu0
    %413 = vmatprep.subr.bf16.mxu0 %v198
    %414 = vmatpush1.bf16.msra.mxu0 %v197
    %415 = vmatprep.subr.bf16.mxu0 %v206
    %416 = vmatpush1.bf16.msra.mxu0 %v205
    %417 = vmatprep.subr.bf16.mxu0 %v214
    %418 = vmatpush1.bf16.msra.mxu0 %v213
    %419 = vmatprep.subr.bf16.mxu0 %v222
    %420 = vmatpush1.bf16.msra.mxu0 %v221
    %421 = vmatprep.subr.bf16.mxu0 %v230
    %422 = vmatpush1.bf16.msra.mxu0 %v229
    %423 = vmatprep.subr.bf16.mxu0 %v238
    %424 = vmatpush1.bf16.msra.mxu0 %v237
    %425 = vmatprep.subr.bf16.mxu0 %v246
    %426 = vmatpush1.bf16.msra.mxu0 %v245
    %427 = vmatprep.subr.bf16.mxu0 %v254
    %428 = vmatpush1.bf16.msra.mxu0 %v253
    %429 = vmatprep.subr.bf16.mxu0 %v262
    %430 = vmatpush1.bf16.msra.mxu0 %v261
    %431 = vmatprep.subr.bf16.mxu0 %v270
    %432 = vmatpush1.bf16.msra.mxu0 %v269
    %433 = vmatprep.subr.bf16.mxu0 %v278
    %434 = vmatpush1.bf16.msra.mxu0 %v277
    %435 = vmatprep.subr.bf16.mxu0 %v286
    %436 = vmatpush1.bf16.msra.mxu0 %v285
    %437 = vmatprep.subr.bf16.mxu0 %v294
    %438 = vmatpush1.bf16.msra.mxu0 %v293
    %439 = vmatprep.subr.bf16.mxu0 %v302
    %440 = vmatpush1.bf16.msra.mxu0 %v301
    %441 = vmatprep.subr.bf16.mxu0 %v310
    %442 = vmatpush1.bf16.msra.mxu0 %v309
    %443 = vmatprep.subr.bf16.mxu0 %v318
    %444 = vmatpush1.bf16.msra.mxu0 %v317
    %445 = vmatprep.mubr.bf16.mxu0 %v369
    %446 = vmatmul.mubr.bf16.gmra.mrb[0].mxu0 %v368
    %v447 = vpop.f32.mrb[0].mxu0
    %v448 = vadd.f32 %v336, %v447
    %v449 = vpop.f32.mrb[0].mxu0
    %v450 = vadd.f32 %v340, %v449
    %v451 = vpop.f32.mrb[0].mxu0
    %v452 = vpop.f32.mrb[0].mxu0
    %453 = vdwg.mxu0
    %454 = vmatprep.subr.bf16.mxu0 %v200
    %455 = vmatpush1.bf16.msra.mxu0 %v199
    %456 = vmatprep.subr.bf16.mxu0 %v208
    %457 = vmatpush1.bf16.msra.mxu0 %v207
    %458 = vmatprep.subr.bf16.mxu0 %v216
    %459 = vmatpush1.bf16.msra.mxu0 %v215
    %460 = vmatprep.subr.bf16.mxu0 %v224
    %461 = vmatpush1.bf16.msra.mxu0 %v223
    %462 = vmatprep.subr.bf16.mxu0 %v232
    %463 = vmatpush1.bf16.msra.mxu0 %v231
    %464 = vmatprep.subr.bf16.mxu0 %v240
    %465 = vmatpush1.bf16.msra.mxu0 %v239
    %466 = vmatprep.subr.bf16.mxu0 %v248
    %467 = vmatpush1.bf16.msra.mxu0 %v247
    %468 = vmatprep.subr.bf16.mxu0 %v256
    %469 = vmatpush1.bf16.msra.mxu0 %v255
    %470 = vmatprep.subr.bf16.mxu0 %v264
    %471 = vmatpush1.bf16.msra.mxu0 %v263
    %472 = vmatprep.subr.bf16.mxu0 %v272
    %473 = vmatpush1.bf16.msra.mxu0 %v271
    %474 = vmatprep.subr.bf16.mxu0 %v280
    %475 = vmatpush1.bf16.msra.mxu0 %v279
    %476 = vmatprep.subr.bf16.mxu0 %v288
    %477 = vmatpush1.bf16.msra.mxu0 %v287
    %478 = vmatprep.subr.bf16.mxu0 %v296
    %479 = vmatpush1.bf16.msra.mxu0 %v295
    %480 = vmatprep.subr.bf16.mxu0 %v304
    %481 = vmatpush1.bf16.msra.mxu0 %v303
    %482 = vmatprep.subr.bf16.mxu0 %v312
    %483 = vmatpush1.bf16.msra.mxu0 %v311
    %484 = vmatprep.subr.bf16.mxu0 %v320
    %485 = vmatpush1.bf16.msra.mxu0 %v319
    %486 = vmatprep.mubr.bf16.mxu0 %v369
    %487 = vmatmul.mubr.bf16.gmra.mrb[0].mxu0 %v368
    %v488 = vpop.f32.mrb[0].mxu0
    %v489 = vadd.f32 %v344, %v488
    %v490 = vpop.f32.mrb[0].mxu0
    %v491 = vadd.f32 %v348, %v490
    %v492 = vpop.f32.mrb[0].mxu0
    %v493 = vpop.f32.mrb[0].mxu0
    %494 = vdwg.mxu0
    %495 = vmatprep.subr.bf16.mxu0 %v202
    %496 = vmatpush1.bf16.msra.mxu0 %v201
    %497 = vmatprep.subr.bf16.mxu0 %v210
    %498 = vmatpush1.bf16.msra.mxu0 %v209
    %499 = vmatprep.subr.bf16.mxu0 %v218
    %500 = vmatpush1.bf16.msra.mxu0 %v217
    %501 = vmatprep.subr.bf16.mxu0 %v226
    %502 = vmatpush1.bf16.msra.mxu0 %v225
    %503 = vmatprep.subr.bf16.mxu0 %v234
    %504 = vmatpush1.bf16.msra.mxu0 %v233
    %505 = vmatprep.subr.bf16.mxu0 %v242
    %506 = vmatpush1.bf16.msra.mxu0 %v241
    %507 = vmatprep.subr.bf16.mxu0 %v250
    %508 = vmatpush1.bf16.msra.mxu0 %v249
    %509 = vmatprep.subr.bf16.mxu0 %v258
    %510 = vmatpush1.bf16.msra.mxu0 %v257
    %511 = vmatprep.subr.bf16.mxu0 %v266
    %512 = vmatpush1.bf16.msra.mxu0 %v265
    %513 = vmatprep.subr.bf16.mxu0 %v274
    %514 = vmatpush1.bf16.msra.mxu0 %v273
    %515 = vmatprep.subr.bf16.mxu0 %v282
    %516 = vmatpush1.bf16.msra.mxu0 %v281
    %517 = vmatprep.subr.bf16.mxu0 %v290
    %518 = vmatpush1.bf16.msra.mxu0 %v289
    %519 = vmatprep.subr.bf16.mxu0 %v298
    %520 = vmatpush1.bf16.msra.mxu0 %v297
    %521 = vmatprep.subr.bf16.mxu0 %v306
    %522 = vmatpush1.bf16.msra.mxu0 %v305
    %523 = vmatprep.subr.bf16.mxu0 %v314
    %524 = vmatpush1.bf16.msra.mxu0 %v313
    %525 = vmatprep.subr.bf16.mxu0 %v322
    %526 = vmatpush1.bf16.msra.mxu0 %v321
    %527 = vmatprep.mubr.bf16.mxu0 %v369
    %528 = vmatmul.mubr.bf16.gmra.mrb[0].mxu0 %v368
    %v529 = vpop.f32.mrb[0].mxu0
    %v530 = vadd.f32 %v352, %v529
    %v531 = vpop.f32.mrb[0].mxu0
    %v532 = vadd.f32 %v356, %v531
    %v533 = vpop.f32.mrb[0].mxu0
    %v534 = vpop.f32.mrb[0].mxu0
    %535 = vdwg.mxu0
    %v536 = vmax.f32 %v407, 0.0
    %v537 = vmax.f32 %v409, 0.0
    %v538 = vmax.f32 %v448, 0.0
    %v539 = vmax.f32 %v450, 0.0
    %v540 = vmax.f32 %v489, 0.0
    %v541 = vmax.f32 %v491, 0.0
    %v542 = vmax.f32 %v530, 0.0
    %v543 = vmax.f32 %v532, 0.0
    %v544 = vpack.c.bf16 %v536, %v536
    %v545 = vpack.c.bf16 %v537, %v537
    %v546 = vpack.c.bf16 %v538, %v538
    %v547 = vpack.c.bf16 %v539, %v539
    %v548 = vpack.c.bf16 %v540, %v540
    %v549 = vpack.c.bf16 %v541, %v541
    %v550 = vpack.c.bf16 %v542, %v542
    %v551 = vpack.c.bf16 %v543, %v543
    %s552 = smul.u32 4, 128
    %s553 = smul.u32 %s552, 8
    %s554 = sshll.u32 %s553, 4
    %555 = dma.done %s108, %s554
    %v556 = vld [vmem:[#allocation3] sm:$0xff]
    %v557 = vld [vmem:[#allocation3 + $0x8] sm:$0xff]
    %v558 = vld [vmem:[#allocation3 + $0x10] sm:$0xff]
    %v559 = vld [vmem:[#allocation3 + $0x18] sm:$0xff]
    %v560 = vld [vmem:[#allocation3 + $0x20] sm:$0xff]
    %v561 = vld [vmem:[#allocation3 + $0x28] sm:$0xff]
    %v562 = vld [vmem:[#allocation3 + $0x30] sm:$0xff]
    %v563 = vld [vmem:[#allocation3 + $0x38] sm:$0xff]
    %v564 = vld [vmem:[#allocation3 + $0x40] sm:$0xff]
    %v565 = vld [vmem:[#allocation3 + $0x48] sm:$0xff]
    %v566 = vld [vmem:[#allocation3 + $0x50] sm:$0xff]
    %v567 = vld [vmem:[#allocation3 + $0x58] sm:$0xff]
    %v568 = vld [vmem:[#allocation3 + $0x60] sm:$0xff]
    %v569 = vld [vmem:[#allocation3 + $0x68] sm:$0xff]
    %v570 = vld [vmem:[#allocation3 + $0x70] sm:$0xff]
    %v571 = vld [vmem:[#allocation3 + $0x78] sm:$0xff]
    %v572 = vld [vmem:[#allocation3 + $0x80] sm:$0xff]
    %v573 = vld [vmem:[#allocation3 + $0x88] sm:$0xff]
    %v574 = vld [vmem:[#allocation3 + $0x90] sm:$0xff]
    %v575 = vld [vmem:[#allocation3 + $0x98] sm:$0xff]
    %v576 = vld [vmem:[#allocation3 + $0xa0] sm:$0xff]
    %v577 = vld [vmem:[#allocation3 + $0xa8] sm:$0xff]
    %v578 = vld [vmem:[#allocation3 + $0xb0] sm:$0xff]
    %v579 = vld [vmem:[#allocation3 + $0xb8] sm:$0xff]
    %v580 = vld [vmem:[#allocation3 + $0xc0] sm:$0xff]
    %v581 = vld [vmem:[#allocation3 + $0xc8] sm:$0xff]
    %v582 = vld [vmem:[#allocation3 + $0xd0] sm:$0xff]
    %v583 = vld [vmem:[#allocation3 + $0xd8] sm:$0xff]
    %v584 = vld [vmem:[#allocation3 + $0xe0] sm:$0xff]
    %v585 = vld [vmem:[#allocation3 + $0xe8] sm:$0xff]
    %v586 = vld [vmem:[#allocation3 + $0xf0] sm:$0xff]
    %v587 = vld [vmem:[#allocation3 + $0xf8] sm:$0xff]
    %v588 = vld [vmem:[#allocation3 + $0x100] sm:$0xff]
    %v589 = vld [vmem:[#allocation3 + $0x108] sm:$0xff]
    %v590 = vld [vmem:[#allocation3 + $0x110] sm:$0xff]
    %v591 = vld [vmem:[#allocation3 + $0x118] sm:$0xff]
    %v592 = vld [vmem:[#allocation3 + $0x120] sm:$0xff]
    %v593 = vld [vmem:[#allocation3 + $0x128] sm:$0xff]
    %v594 = vld [vmem:[#allocation3 + $0x130] sm:$0xff]
    %v595 = vld [vmem:[#allocation3 + $0x138] sm:$0xff]
    %v596 = vld [vmem:[#allocation3 + $0x140] sm:$0xff]
    %v597 = vld [vmem:[#allocation3 + $0x148] sm:$0xff]
    %v598 = vld [vmem:[#allocation3 + $0x150] sm:$0xff]
    %v599 = vld [vmem:[#allocation3 + $0x158] sm:$0xff]
    %v600 = vld [vmem:[#allocation3 + $0x160] sm:$0xff]
    %v601 = vld [vmem:[#allocation3 + $0x168] sm:$0xff]
    %v602 = vld [vmem:[#allocation3 + $0x170] sm:$0xff]
    %v603 = vld [vmem:[#allocation3 + $0x178] sm:$0xff]
    %v604 = vld [vmem:[#allocation3 + $0x180] sm:$0xff]
    %v605 = vld [vmem:[#allocation3 + $0x188] sm:$0xff]
    %v606 = vld [vmem:[#allocation3 + $0x190] sm:$0xff]
    %v607 = vld [vmem:[#allocation3 + $0x198] sm:$0xff]
    %v608 = vld [vmem:[#allocation3 + $0x1a0] sm:$0xff]
    %v609 = vld [vmem:[#allocation3 + $0x1a8] sm:$0xff]
    %v610 = vld [vmem:[#allocation3 + $0x1b0] sm:$0xff]
    %v611 = vld [vmem:[#allocation3 + $0x1b8] sm:$0xff]
    %v612 = vld [vmem:[#allocation3 + $0x1c0] sm:$0xff]
    %v613 = vld [vmem:[#allocation3 + $0x1c8] sm:$0xff]
    %v614 = vld [vmem:[#allocation3 + $0x1d0] sm:$0xff]
    %v615 = vld [vmem:[#allocation3 + $0x1d8] sm:$0xff]
    %v616 = vld [vmem:[#allocation3 + $0x1e0] sm:$0xff]
    %v617 = vld [vmem:[#allocation3 + $0x1e8] sm:$0xff]
    %v618 = vld [vmem:[#allocation3 + $0x1f0] sm:$0xff]
    %v619 = vld [vmem:[#allocation3 + $0x1f8] sm:$0xff]
    %v620 = vld [vmem:[#allocation3 + $0x200] sm:$0xff]
    %v621 = vld [vmem:[#allocation3 + $0x208] sm:$0xff]
    %v622 = vld [vmem:[#allocation3 + $0x210] sm:$0xff]
    %v623 = vld [vmem:[#allocation3 + $0x218] sm:$0xff]
    %v624 = vld [vmem:[#allocation3 + $0x220] sm:$0xff]
    %v625 = vld [vmem:[#allocation3 + $0x228] sm:$0xff]
    %v626 = vld [vmem:[#allocation3 + $0x230] sm:$0xff]
    %v627 = vld [vmem:[#allocation3 + $0x238] sm:$0xff]
    %v628 = vld [vmem:[#allocation3 + $0x240] sm:$0xff]
    %v629 = vld [vmem:[#allocation3 + $0x248] sm:$0xff]
    %v630 = vld [vmem:[#allocation3 + $0x250] sm:$0xff]
    %v631 = vld [vmem:[#allocation3 + $0x258] sm:$0xff]
    %v632 = vld [vmem:[#allocation3 + $0x260] sm:$0xff]
    %v633 = vld [vmem:[#allocation3 + $0x268] sm:$0xff]
    %v634 = vld [vmem:[#allocation3 + $0x270] sm:$0xff]
    %v635 = vld [vmem:[#allocation3 + $0x278] sm:$0xff]
    %v636 = vld [vmem:[#allocation3 + $0x280] sm:$0xff]
    %v637 = vld [vmem:[#allocation3 + $0x288] sm:$0xff]
    %v638 = vld [vmem:[#allocation3 + $0x290] sm:$0xff]
    %v639 = vld [vmem:[#allocation3 + $0x298] sm:$0xff]
    %v640 = vld [vmem:[#allocation3 + $0x2a0] sm:$0xff]
    %v641 = vld [vmem:[#allocation3 + $0x2a8] sm:$0xff]
    %v642 = vld [vmem:[#allocation3 + $0x2b0] sm:$0xff]
    %v643 = vld [vmem:[#allocation3 + $0x2b8] sm:$0xff]
    %v644 = vld [vmem:[#allocation3 + $0x2c0] sm:$0xff]
    %v645 = vld [vmem:[#allocation3 + $0x2c8] sm:$0xff]
    %v646 = vld [vmem:[#allocation3 + $0x2d0] sm:$0xff]
    %v647 = vld [vmem:[#allocation3 + $0x2d8] sm:$0xff]
    %v648 = vld [vmem:[#allocation3 + $0x2e0] sm:$0xff]
    %v649 = vld [vmem:[#allocation3 + $0x2e8] sm:$0xff]
    %v650 = vld [vmem:[#allocation3 + $0x2f0] sm:$0xff]
    %v651 = vld [vmem:[#allocation3 + $0x2f8] sm:$0xff]
    %v652 = vld [vmem:[#allocation3 + $0x300] sm:$0xff]
    %v653 = vld [vmem:[#allocation3 + $0x308] sm:$0xff]
    %v654 = vld [vmem:[#allocation3 + $0x310] sm:$0xff]
    %v655 = vld [vmem:[#allocation3 + $0x318] sm:$0xff]
    %v656 = vld [vmem:[#allocation3 + $0x320] sm:$0xff]
    %v657 = vld [vmem:[#allocation3 + $0x328] sm:$0xff]
    %v658 = vld [vmem:[#allocation3 + $0x330] sm:$0xff]
    %v659 = vld [vmem:[#allocation3 + $0x338] sm:$0xff]
    %v660 = vld [vmem:[#allocation3 + $0x340] sm:$0xff]
    %v661 = vld [vmem:[#allocation3 + $0x348] sm:$0xff]
    %v662 = vld [vmem:[#allocation3 + $0x350] sm:$0xff]
    %v663 = vld [vmem:[#allocation3 + $0x358] sm:$0xff]
    %v664 = vld [vmem:[#allocation3 + $0x360] sm:$0xff]
    %v665 = vld [vmem:[#allocation3 + $0x368] sm:$0xff]
    %v666 = vld [vmem:[#allocation3 + $0x370] sm:$0xff]
    %v667 = vld [vmem:[#allocation3 + $0x378] sm:$0xff]
    %v668 = vld [vmem:[#allocation3 + $0x380] sm:$0xff]
    %v669 = vld [vmem:[#allocation3 + $0x388] sm:$0xff]
    %v670 = vld [vmem:[#allocation3 + $0x390] sm:$0xff]
    %v671 = vld [vmem:[#allocation3 + $0x398] sm:$0xff]
    %v672 = vld [vmem:[#allocation3 + $0x3a0] sm:$0xff]
    %v673 = vld [vmem:[#allocation3 + $0x3a8] sm:$0xff]
    %v674 = vld [vmem:[#allocation3 + $0x3b0] sm:$0xff]
    %v675 = vld [vmem:[#allocation3 + $0x3b8] sm:$0xff]
    %v676 = vld [vmem:[#allocation3 + $0x3c0] sm:$0xff]
    %v677 = vld [vmem:[#allocation3 + $0x3c8] sm:$0xff]
    %v678 = vld [vmem:[#allocation3 + $0x3d0] sm:$0xff]
    %v679 = vld [vmem:[#allocation3 + $0x3d8] sm:$0xff]
    %v680 = vld [vmem:[#allocation3 + $0x3e0] sm:$0xff]
    %v681 = vld [vmem:[#allocation3 + $0x3e8] sm:$0xff]
    %v682 = vld [vmem:[#allocation3 + $0x3f0] sm:$0xff]
    %v683 = vld [vmem:[#allocation3 + $0x3f8] sm:$0xff]
    %v684 = vld [vmem:[#allocation3 + $0x400] sm:$0xff]
    %v685 = vld [vmem:[#allocation3 + $0x408] sm:$0xff]
    %v686 = vld [vmem:[#allocation3 + $0x410] sm:$0xff]
    %v687 = vld [vmem:[#allocation3 + $0x418] sm:$0xff]
    %v688 = vld [vmem:[#allocation3 + $0x420] sm:$0xff]
    %v689 = vld [vmem:[#allocation3 + $0x428] sm:$0xff]
    %v690 = vld [vmem:[#allocation3 + $0x430] sm:$0xff]
    %v691 = vld [vmem:[#allocation3 + $0x438] sm:$0xff]
    %v692 = vld [vmem:[#allocation3 + $0x440] sm:$0xff]
    %v693 = vld [vmem:[#allocation3 + $0x448] sm:$0xff]
    %v694 = vld [vmem:[#allocation3 + $0x450] sm:$0xff]
    %v695 = vld [vmem:[#allocation3 + $0x458] sm:$0xff]
    %v696 = vld [vmem:[#allocation3 + $0x460] sm:$0xff]
    %v697 = vld [vmem:[#allocation3 + $0x468] sm:$0xff]
    %v698 = vld [vmem:[#allocation3 + $0x470] sm:$0xff]
    %v699 = vld [vmem:[#allocation3 + $0x478] sm:$0xff]
    %v700 = vld [vmem:[#allocation3 + $0x480] sm:$0xff]
    %v701 = vld [vmem:[#allocation3 + $0x488] sm:$0xff]
    %v702 = vld [vmem:[#allocation3 + $0x490] sm:$0xff]
    %v703 = vld [vmem:[#allocation3 + $0x498] sm:$0xff]
    %v704 = vld [vmem:[#allocation3 + $0x4a0] sm:$0xff]
    %v705 = vld [vmem:[#allocation3 + $0x4a8] sm:$0xff]
    %v706 = vld [vmem:[#allocation3 + $0x4b0] sm:$0xff]
    %v707 = vld [vmem:[#allocation3 + $0x4b8] sm:$0xff]
    %v708 = vld [vmem:[#allocation3 + $0x4c0] sm:$0xff]
    %v709 = vld [vmem:[#allocation3 + $0x4c8] sm:$0xff]
    %v710 = vld [vmem:[#allocation3 + $0x4d0] sm:$0xff]
    %v711 = vld [vmem:[#allocation3 + $0x4d8] sm:$0xff]
    %v712 = vld [vmem:[#allocation3 + $0x4e0] sm:$0xff]
    %v713 = vld [vmem:[#allocation3 + $0x4e8] sm:$0xff]
    %v714 = vld [vmem:[#allocation3 + $0x4f0] sm:$0xff]
    %v715 = vld [vmem:[#allocation3 + $0x4f8] sm:$0xff]
    %v716 = vld [vmem:[#allocation3 + $0x500] sm:$0xff]
    %v717 = vld [vmem:[#allocation3 + $0x508] sm:$0xff]
    %v718 = vld [vmem:[#allocation3 + $0x510] sm:$0xff]
    %v719 = vld [vmem:[#allocation3 + $0x518] sm:$0xff]
    %v720 = vld [vmem:[#allocation3 + $0x520] sm:$0xff]
    %v721 = vld [vmem:[#allocation3 + $0x528] sm:$0xff]
    %v722 = vld [vmem:[#allocation3 + $0x530] sm:$0xff]
    %v723 = vld [vmem:[#allocation3 + $0x538] sm:$0xff]
    %v724 = vld [vmem:[#allocation3 + $0x540] sm:$0xff]
    %v725 = vld [vmem:[#allocation3 + $0x548] sm:$0xff]
    %v726 = vld [vmem:[#allocation3 + $0x550] sm:$0xff]
    %v727 = vld [vmem:[#allocation3 + $0x558] sm:$0xff]
    %v728 = vld [vmem:[#allocation3 + $0x560] sm:$0xff]
    %v729 = vld [vmem:[#allocation3 + $0x568] sm:$0xff]
    %v730 = vld [vmem:[#allocation3 + $0x570] sm:$0xff]
    %v731 = vld [vmem:[#allocation3 + $0x578] sm:$0xff]
    %v732 = vld [vmem:[#allocation3 + $0x580] sm:$0xff]
    %v733 = vld [vmem:[#allocation3 + $0x588] sm:$0xff]
    %v734 = vld [vmem:[#allocation3 + $0x590] sm:$0xff]
    %v735 = vld [vmem:[#allocation3 + $0x598] sm:$0xff]
    %v736 = vld [vmem:[#allocation3 + $0x5a0] sm:$0xff]
    %v737 = vld [vmem:[#allocation3 + $0x5a8] sm:$0xff]
    %v738 = vld [vmem:[#allocation3 + $0x5b0] sm:$0xff]
    %v739 = vld [vmem:[#allocation3 + $0x5b8] sm:$0xff]
    %v740 = vld [vmem:[#allocation3 + $0x5c0] sm:$0xff]
    %v741 = vld [vmem:[#allocation3 + $0x5c8] sm:$0xff]
    %v742 = vld [vmem:[#allocation3 + $0x5d0] sm:$0xff]
    %v743 = vld [vmem:[#allocation3 + $0x5d8] sm:$0xff]
    %v744 = vld [vmem:[#allocation3 + $0x5e0] sm:$0xff]
    %v745 = vld [vmem:[#allocation3 + $0x5e8] sm:$0xff]
    %v746 = vld [vmem:[#allocation3 + $0x5f0] sm:$0xff]
    %v747 = vld [vmem:[#allocation3 + $0x5f8] sm:$0xff]
    %v748 = vld [vmem:[#allocation3 + $0x600] sm:$0xff]
    %v749 = vld [vmem:[#allocation3 + $0x608] sm:$0xff]
    %v750 = vld [vmem:[#allocation3 + $0x610] sm:$0xff]
    %v751 = vld [vmem:[#allocation3 + $0x618] sm:$0xff]
    %v752 = vld [vmem:[#allocation3 + $0x620] sm:$0xff]
    %v753 = vld [vmem:[#allocation3 + $0x628] sm:$0xff]
    %v754 = vld [vmem:[#allocation3 + $0x630] sm:$0xff]
    %v755 = vld [vmem:[#allocation3 + $0x638] sm:$0xff]
    %v756 = vld [vmem:[#allocation3 + $0x640] sm:$0xff]
    %v757 = vld [vmem:[#allocation3 + $0x648] sm:$0xff]
    %v758 = vld [vmem:[#allocation3 + $0x650] sm:$0xff]
    %v759 = vld [vmem:[#allocation3 + $0x658] sm:$0xff]
    %v760 = vld [vmem:[#allocation3 + $0x660] sm:$0xff]
    %v761 = vld [vmem:[#allocation3 + $0x668] sm:$0xff]
    %v762 = vld [vmem:[#allocation3 + $0x670] sm:$0xff]
    %v763 = vld [vmem:[#allocation3 + $0x678] sm:$0xff]
    %v764 = vld [vmem:[#allocation3 + $0x680] sm:$0xff]
    %v765 = vld [vmem:[#allocation3 + $0x688] sm:$0xff]
    %v766 = vld [vmem:[#allocation3 + $0x690] sm:$0xff]
    %v767 = vld [vmem:[#allocation3 + $0x698] sm:$0xff]
    %v768 = vld [vmem:[#allocation3 + $0x6a0] sm:$0xff]
    %v769 = vld [vmem:[#allocation3 + $0x6a8] sm:$0xff]
    %v770 = vld [vmem:[#allocation3 + $0x6b0] sm:$0xff]
    %v771 = vld [vmem:[#allocation3 + $0x6b8] sm:$0xff]
    %v772 = vld [vmem:[#allocation3 + $0x6c0] sm:$0xff]
    %v773 = vld [vmem:[#allocation3 + $0x6c8] sm:$0xff]
    %v774 = vld [vmem:[#allocation3 + $0x6d0] sm:$0xff]
    %v775 = vld [vmem:[#allocation3 + $0x6d8] sm:$0xff]
    %v776 = vld [vmem:[#allocation3 + $0x6e0] sm:$0xff]
    %v777 = vld [vmem:[#allocation3 + $0x6e8] sm:$0xff]
    %v778 = vld [vmem:[#allocation3 + $0x6f0] sm:$0xff]
    %v779 = vld [vmem:[#allocation3 + $0x6f8] sm:$0xff]
    %v780 = vld [vmem:[#allocation3 + $0x700] sm:$0xff]
    %v781 = vld [vmem:[#allocation3 + $0x708] sm:$0xff]
    %v782 = vld [vmem:[#allocation3 + $0x710] sm:$0xff]
    %v783 = vld [vmem:[#allocation3 + $0x718] sm:$0xff]
    %v784 = vld [vmem:[#allocation3 + $0x720] sm:$0xff]
    %v785 = vld [vmem:[#allocation3 + $0x728] sm:$0xff]
    %v786 = vld [vmem:[#allocation3 + $0x730] sm:$0xff]
    %v787 = vld [vmem:[#allocation3 + $0x738] sm:$0xff]
    %v788 = vld [vmem:[#allocation3 + $0x740] sm:$0xff]
    %v789 = vld [vmem:[#allocation3 + $0x748] sm:$0xff]
    %v790 = vld [vmem:[#allocation3 + $0x750] sm:$0xff]
    %v791 = vld [vmem:[#allocation3 + $0x758] sm:$0xff]
    %v792 = vld [vmem:[#allocation3 + $0x760] sm:$0xff]
    %v793 = vld [vmem:[#allocation3 + $0x768] sm:$0xff]
    %v794 = vld [vmem:[#allocation3 + $0x770] sm:$0xff]
    %v795 = vld [vmem:[#allocation3 + $0x778] sm:$0xff]
    %v796 = vld [vmem:[#allocation3 + $0x780] sm:$0xff]
    %v797 = vld [vmem:[#allocation3 + $0x788] sm:$0xff]
    %v798 = vld [vmem:[#allocation3 + $0x790] sm:$0xff]
    %v799 = vld [vmem:[#allocation3 + $0x798] sm:$0xff]
    %v800 = vld [vmem:[#allocation3 + $0x7a0] sm:$0xff]
    %v801 = vld [vmem:[#allocation3 + $0x7a8] sm:$0xff]
    %v802 = vld [vmem:[#allocation3 + $0x7b0] sm:$0xff]
    %v803 = vld [vmem:[#allocation3 + $0x7b8] sm:$0xff]
    %v804 = vld [vmem:[#allocation3 + $0x7c0] sm:$0xff]
    %v805 = vld [vmem:[#allocation3 + $0x7c8] sm:$0xff]
    %v806 = vld [vmem:[#allocation3 + $0x7d0] sm:$0xff]
    %v807 = vld [vmem:[#allocation3 + $0x7d8] sm:$0xff]
    %v808 = vld [vmem:[#allocation3 + $0x7e0] sm:$0xff]
    %v809 = vld [vmem:[#allocation3 + $0x7e8] sm:$0xff]
    %v810 = vld [vmem:[#allocation3 + $0x7f0] sm:$0xff]
    %v811 = vld [vmem:[#allocation3 + $0x7f8] sm:$0xff]
    %v812 = vld [vmem:[#allocation3 + $0x800] sm:$0xff]
    %v813 = vld [vmem:[#allocation3 + $0x808] sm:$0xff]
    %v814 = vld [vmem:[#allocation3 + $0x810] sm:$0xff]
    %v815 = vld [vmem:[#allocation3 + $0x818] sm:$0xff]
    %v816 = vld [vmem:[#allocation3 + $0x820] sm:$0xff]
    %v817 = vld [vmem:[#allocation3 + $0x828] sm:$0xff]
    %v818 = vld [vmem:[#allocation3 + $0x830] sm:$0xff]
    %v819 = vld [vmem:[#allocation3 + $0x838] sm:$0xff]
    %v820 = vld [vmem:[#allocation3 + $0x840] sm:$0xff]
    %v821 = vld [vmem:[#allocation3 + $0x848] sm:$0xff]
    %v822 = vld [vmem:[#allocation3 + $0x850] sm:$0xff]
    %v823 = vld [vmem:[#allocation3 + $0x858] sm:$0xff]
    %v824 = vld [vmem:[#allocation3 + $0x860] sm:$0xff]
    %v825 = vld [vmem:[#allocation3 + $0x868] sm:$0xff]
    %v826 = vld [vmem:[#allocation3 + $0x870] sm:$0xff]
    %v827 = vld [vmem:[#allocation3 + $0x878] sm:$0xff]
    %v828 = vld [vmem:[#allocation3 + $0x880] sm:$0xff]
    %v829 = vld [vmem:[#allocation3 + $0x888] sm:$0xff]
    %v830 = vld [vmem:[#allocation3 + $0x890] sm:$0xff]
    %v831 = vld [vmem:[#allocation3 + $0x898] sm:$0xff]
    %v832 = vld [vmem:[#allocation3 + $0x8a0] sm:$0xff]
    %v833 = vld [vmem:[#allocation3 + $0x8a8] sm:$0xff]
    %v834 = vld [vmem:[#allocation3 + $0x8b0] sm:$0xff]
    %v835 = vld [vmem:[#allocation3 + $0x8b8] sm:$0xff]
    %v836 = vld [vmem:[#allocation3 + $0x8c0] sm:$0xff]
    %v837 = vld [vmem:[#allocation3 + $0x8c8] sm:$0xff]
    %v838 = vld [vmem:[#allocation3 + $0x8d0] sm:$0xff]
    %v839 = vld [vmem:[#allocation3 + $0x8d8] sm:$0xff]
    %v840 = vld [vmem:[#allocation3 + $0x8e0] sm:$0xff]
    %v841 = vld [vmem:[#allocation3 + $0x8e8] sm:$0xff]
    %v842 = vld [vmem:[#allocation3 + $0x8f0] sm:$0xff]
    %v843 = vld [vmem:[#allocation3 + $0x8f8] sm:$0xff]
    %v844 = vld [vmem:[#allocation3 + $0x900] sm:$0xff]
    %v845 = vld [vmem:[#allocation3 + $0x908] sm:$0xff]
    %v846 = vld [vmem:[#allocation3 + $0x910] sm:$0xff]
    %v847 = vld [vmem:[#allocation3 + $0x918] sm:$0xff]
    %v848 = vld [vmem:[#allocation3 + $0x920] sm:$0xff]
    %v849 = vld [vmem:[#allocation3 + $0x928] sm:$0xff]
    %v850 = vld [vmem:[#allocation3 + $0x930] sm:$0xff]
    %v851 = vld [vmem:[#allocation3 + $0x938] sm:$0xff]
    %v852 = vld [vmem:[#allocation3 + $0x940] sm:$0xff]
    %v853 = vld [vmem:[#allocation3 + $0x948] sm:$0xff]
    %v854 = vld [vmem:[#allocation3 + $0x950] sm:$0xff]
    %v855 = vld [vmem:[#allocation3 + $0x958] sm:$0xff]
    %v856 = vld [vmem:[#allocation3 + $0x960] sm:$0xff]
    %v857 = vld [vmem:[#allocation3 + $0x968] sm:$0xff]
    %v858 = vld [vmem:[#allocation3 + $0x970] sm:$0xff]
    %v859 = vld [vmem:[#allocation3 + $0x978] sm:$0xff]
    %v860 = vld [vmem:[#allocation3 + $0x980] sm:$0xff]
    %v861 = vld [vmem:[#allocation3 + $0x988] sm:$0xff]
    %v862 = vld [vmem:[#allocation3 + $0x990] sm:$0xff]
    %v863 = vld [vmem:[#allocation3 + $0x998] sm:$0xff]
    %v864 = vld [vmem:[#allocation3 + $0x9a0] sm:$0xff]
    %v865 = vld [vmem:[#allocation3 + $0x9a8] sm:$0xff]
    %v866 = vld [vmem:[#allocation3 + $0x9b0] sm:$0xff]
    %v867 = vld [vmem:[#allocation3 + $0x9b8] sm:$0xff]
    %v868 = vld [vmem:[#allocation3 + $0x9c0] sm:$0xff]
    %v869 = vld [vmem:[#allocation3 + $0x9c8] sm:$0xff]
    %v870 = vld [vmem:[#allocation3 + $0x9d0] sm:$0xff]
    %v871 = vld [vmem:[#allocation3 + $0x9d8] sm:$0xff]
    %v872 = vld [vmem:[#allocation3 + $0x9e0] sm:$0xff]
    %v873 = vld [vmem:[#allocation3 + $0x9e8] sm:$0xff]
    %v874 = vld [vmem:[#allocation3 + $0x9f0] sm:$0xff]
    %v875 = vld [vmem:[#allocation3 + $0x9f8] sm:$0xff]
    %v876 = vld [vmem:[#allocation3 + $0xa00] sm:$0xff]
    %v877 = vld [vmem:[#allocation3 + $0xa08] sm:$0xff]
    %v878 = vld [vmem:[#allocation3 + $0xa10] sm:$0xff]
    %v879 = vld [vmem:[#allocation3 + $0xa18] sm:$0xff]
    %v880 = vld [vmem:[#allocation3 + $0xa20] sm:$0xff]
    %v881 = vld [vmem:[#allocation3 + $0xa28] sm:$0xff]
    %v882 = vld [vmem:[#allocation3 + $0xa30] sm:$0xff]
    %v883 = vld [vmem:[#allocation3 + $0xa38] sm:$0xff]
    %v884 = vld [vmem:[#allocation3 + $0xa40] sm:$0xff]
    %v885 = vld [vmem:[#allocation3 + $0xa48] sm:$0xff]
    %v886 = vld [vmem:[#allocation3 + $0xa50] sm:$0xff]
    %v887 = vld [vmem:[#allocation3 + $0xa58] sm:$0xff]
    %v888 = vld [vmem:[#allocation3 + $0xa60] sm:$0xff]
    %v889 = vld [vmem:[#allocation3 + $0xa68] sm:$0xff]
    %v890 = vld [vmem:[#allocation3 + $0xa70] sm:$0xff]
    %v891 = vld [vmem:[#allocation3 + $0xa78] sm:$0xff]
    %v892 = vld [vmem:[#allocation3 + $0xa80] sm:$0xff]
    %v893 = vld [vmem:[#allocation3 + $0xa88] sm:$0xff]
    %v894 = vld [vmem:[#allocation3 + $0xa90] sm:$0xff]
    %v895 = vld [vmem:[#allocation3 + $0xa98] sm:$0xff]
    %v896 = vld [vmem:[#allocation3 + $0xaa0] sm:$0xff]
    %v897 = vld [vmem:[#allocation3 + $0xaa8] sm:$0xff]
    %v898 = vld [vmem:[#allocation3 + $0xab0] sm:$0xff]
    %v899 = vld [vmem:[#allocation3 + $0xab8] sm:$0xff]
    %v900 = vld [vmem:[#allocation3 + $0xac0] sm:$0xff]
    %v901 = vld [vmem:[#allocation3 + $0xac8] sm:$0xff]
    %v902 = vld [vmem:[#allocation3 + $0xad0] sm:$0xff]
    %v903 = vld [vmem:[#allocation3 + $0xad8] sm:$0xff]
    %v904 = vld [vmem:[#allocation3 + $0xae0] sm:$0xff]
    %v905 = vld [vmem:[#allocation3 + $0xae8] sm:$0xff]
    %v906 = vld [vmem:[#allocation3 + $0xaf0] sm:$0xff]
    %v907 = vld [vmem:[#allocation3 + $0xaf8] sm:$0xff]
    %v908 = vld [vmem:[#allocation3 + $0xb00] sm:$0xff]
    %v909 = vld [vmem:[#allocation3 + $0xb08] sm:$0xff]
    %v910 = vld [vmem:[#allocation3 + $0xb10] sm:$0xff]
    %v911 = vld [vmem:[#allocation3 + $0xb18] sm:$0xff]
    %v912 = vld [vmem:[#allocation3 + $0xb20] sm:$0xff]
    %v913 = vld [vmem:[#allocation3 + $0xb28] sm:$0xff]
    %v914 = vld [vmem:[#allocation3 + $0xb30] sm:$0xff]
    %v915 = vld [vmem:[#allocation3 + $0xb38] sm:$0xff]
    %v916 = vld [vmem:[#allocation3 + $0xb40] sm:$0xff]
    %v917 = vld [vmem:[#allocation3 + $0xb48] sm:$0xff]
    %v918 = vld [vmem:[#allocation3 + $0xb50] sm:$0xff]
    %v919 = vld [vmem:[#allocation3 + $0xb58] sm:$0xff]
    %v920 = vld [vmem:[#allocation3 + $0xb60] sm:$0xff]
    %v921 = vld [vmem:[#allocation3 + $0xb68] sm:$0xff]
    %v922 = vld [vmem:[#allocation3 + $0xb70] sm:$0xff]
    %v923 = vld [vmem:[#allocation3 + $0xb78] sm:$0xff]
    %v924 = vld [vmem:[#allocation3 + $0xb80] sm:$0xff]
    %v925 = vld [vmem:[#allocation3 + $0xb88] sm:$0xff]
    %v926 = vld [vmem:[#allocation3 + $0xb90] sm:$0xff]
    %v927 = vld [vmem:[#allocation3 + $0xb98] sm:$0xff]
    %v928 = vld [vmem:[#allocation3 + $0xba0] sm:$0xff]
    %v929 = vld [vmem:[#allocation3 + $0xba8] sm:$0xff]
    %v930 = vld [vmem:[#allocation3 + $0xbb0] sm:$0xff]
    %v931 = vld [vmem:[#allocation3 + $0xbb8] sm:$0xff]
    %v932 = vld [vmem:[#allocation3 + $0xbc0] sm:$0xff]
    %v933 = vld [vmem:[#allocation3 + $0xbc8] sm:$0xff]
    %v934 = vld [vmem:[#allocation3 + $0xbd0] sm:$0xff]
    %v935 = vld [vmem:[#allocation3 + $0xbd8] sm:$0xff]
    %v936 = vld [vmem:[#allocation3 + $0xbe0] sm:$0xff]
    %v937 = vld [vmem:[#allocation3 + $0xbe8] sm:$0xff]
    %v938 = vld [vmem:[#allocation3 + $0xbf0] sm:$0xff]
    %v939 = vld [vmem:[#allocation3 + $0xbf8] sm:$0xff]
    %v940 = vld [vmem:[#allocation3 + $0xc00] sm:$0xff]
    %v941 = vld [vmem:[#allocation3 + $0xc08] sm:$0xff]
    %v942 = vld [vmem:[#allocation3 + $0xc10] sm:$0xff]
    %v943 = vld [vmem:[#allocation3 + $0xc18] sm:$0xff]
    %v944 = vld [vmem:[#allocation3 + $0xc20] sm:$0xff]
    %v945 = vld [vmem:[#allocation3 + $0xc28] sm:$0xff]
    %v946 = vld [vmem:[#allocation3 + $0xc30] sm:$0xff]
    %v947 = vld [vmem:[#allocation3 + $0xc38] sm:$0xff]
    %v948 = vld [vmem:[#allocation3 + $0xc40] sm:$0xff]
    %v949 = vld [vmem:[#allocation3 + $0xc48] sm:$0xff]
    %v950 = vld [vmem:[#allocation3 + $0xc50] sm:$0xff]
    %v951 = vld [vmem:[#allocation3 + $0xc58] sm:$0xff]
    %v952 = vld [vmem:[#allocation3 + $0xc60] sm:$0xff]
    %v953 = vld [vmem:[#allocation3 + $0xc68] sm:$0xff]
    %v954 = vld [vmem:[#allocation3 + $0xc70] sm:$0xff]
    %v955 = vld [vmem:[#allocation3 + $0xc78] sm:$0xff]
    %v956 = vld [vmem:[#allocation3 + $0xc80] sm:$0xff]
    %v957 = vld [vmem:[#allocation3 + $0xc88] sm:$0xff]
    %v958 = vld [vmem:[#allocation3 + $0xc90] sm:$0xff]
    %v959 = vld [vmem:[#allocation3 + $0xc98] sm:$0xff]
    %v960 = vld [vmem:[#allocation3 + $0xca0] sm:$0xff]
    %v961 = vld [vmem:[#allocation3 + $0xca8] sm:$0xff]
    %v962 = vld [vmem:[#allocation3 + $0xcb0] sm:$0xff]
    %v963 = vld [vmem:[#allocation3 + $0xcb8] sm:$0xff]
    %v964 = vld [vmem:[#allocation3 + $0xcc0] sm:$0xff]
    %v965 = vld [vmem:[#allocation3 + $0xcc8] sm:$0xff]
    %v966 = vld [vmem:[#allocation3 + $0xcd0] sm:$0xff]
    %v967 = vld [vmem:[#allocation3 + $0xcd8] sm:$0xff]
    %v968 = vld [vmem:[#allocation3 + $0xce0] sm:$0xff]
    %v969 = vld [vmem:[#allocation3 + $0xce8] sm:$0xff]
    %v970 = vld [vmem:[#allocation3 + $0xcf0] sm:$0xff]
    %v971 = vld [vmem:[#allocation3 + $0xcf8] sm:$0xff]
    %v972 = vld [vmem:[#allocation3 + $0xd00] sm:$0xff]
    %v973 = vld [vmem:[#allocation3 + $0xd08] sm:$0xff]
    %v974 = vld [vmem:[#allocation3 + $0xd10] sm:$0xff]
    %v975 = vld [vmem:[#allocation3 + $0xd18] sm:$0xff]
    %v976 = vld [vmem:[#allocation3 + $0xd20] sm:$0xff]
    %v977 = vld [vmem:[#allocation3 + $0xd28] sm:$0xff]
    %v978 = vld [vmem:[#allocation3 + $0xd30] sm:$0xff]
    %v979 = vld [vmem:[#allocation3 + $0xd38] sm:$0xff]
    %v980 = vld [vmem:[#allocation3 + $0xd40] sm:$0xff]
    %v981 = vld [vmem:[#allocation3 + $0xd48] sm:$0xff]
    %v982 = vld [vmem:[#allocation3 + $0xd50] sm:$0xff]
    %v983 = vld [vmem:[#allocation3 + $0xd58] sm:$0xff]
    %v984 = vld [vmem:[#allocation3 + $0xd60] sm:$0xff]
    %v985 = vld [vmem:[#allocation3 + $0xd68] sm:$0xff]
    %v986 = vld [vmem:[#allocation3 + $0xd70] sm:$0xff]
    %v987 = vld [vmem:[#allocation3 + $0xd78] sm:$0xff]
    %v988 = vld [vmem:[#allocation3 + $0xd80] sm:$0xff]
    %v989 = vld [vmem:[#allocation3 + $0xd88] sm:$0xff]
    %v990 = vld [vmem:[#allocation3 + $0xd90] sm:$0xff]
    %v991 = vld [vmem:[#allocation3 + $0xd98] sm:$0xff]
    %v992 = vld [vmem:[#allocation3 + $0xda0] sm:$0xff]
    %v993 = vld [vmem:[#allocation3 + $0xda8] sm:$0xff]
    %v994 = vld [vmem:[#allocation3 + $0xdb0] sm:$0xff]
    %v995 = vld [vmem:[#allocation3 + $0xdb8] sm:$0xff]
    %v996 = vld [vmem:[#allocation3 + $0xdc0] sm:$0xff]
    %v997 = vld [vmem:[#allocation3 + $0xdc8] sm:$0xff]
    %v998 = vld [vmem:[#allocation3 + $0xdd0] sm:$0xff]
    %v999 = vld [vmem:[#allocation3 + $0xdd8] sm:$0xff]
    %v1000 = vld [vmem:[#allocation3 + $0xde0] sm:$0xff]
    %v1001 = vld [vmem:[#allocation3 + $0xde8] sm:$0xff]
    %v1002 = vld [vmem:[#allocation3 + $0xdf0] sm:$0xff]
    %v1003 = vld [vmem:[#allocation3 + $0xdf8] sm:$0xff]
    %v1004 = vld [vmem:[#allocation3 + $0xe00] sm:$0xff]
    %v1005 = vld [vmem:[#allocation3 + $0xe08] sm:$0xff]
    %v1006 = vld [vmem:[#allocation3 + $0xe10] sm:$0xff]
    %v1007 = vld [vmem:[#allocation3 + $0xe18] sm:$0xff]
    %v1008 = vld [vmem:[#allocation3 + $0xe20] sm:$0xff]
    %v1009 = vld [vmem:[#allocation3 + $0xe28] sm:$0xff]
    %v1010 = vld [vmem:[#allocation3 + $0xe30] sm:$0xff]
    %v1011 = vld [vmem:[#allocation3 + $0xe38] sm:$0xff]
    %v1012 = vld [vmem:[#allocation3 + $0xe40] sm:$0xff]
    %v1013 = vld [vmem:[#allocation3 + $0xe48] sm:$0xff]
    %v1014 = vld [vmem:[#allocation3 + $0xe50] sm:$0xff]
    %v1015 = vld [vmem:[#allocation3 + $0xe58] sm:$0xff]
    %v1016 = vld [vmem:[#allocation3 + $0xe60] sm:$0xff]
    %v1017 = vld [vmem:[#allocation3 + $0xe68] sm:$0xff]
    %v1018 = vld [vmem:[#allocation3 + $0xe70] sm:$0xff]
    %v1019 = vld [vmem:[#allocation3 + $0xe78] sm:$0xff]
    %v1020 = vld [vmem:[#allocation3 + $0xe80] sm:$0xff]
    %v1021 = vld [vmem:[#allocation3 + $0xe88] sm:$0xff]
    %v1022 = vld [vmem:[#allocation3 + $0xe90] sm:$0xff]
    %v1023 = vld [vmem:[#allocation3 + $0xe98] sm:$0xff]
    %v1024 = vld [vmem:[#allocation3 + $0xea0] sm:$0xff]
    %v1025 = vld [vmem:[#allocation3 + $0xea8] sm:$0xff]
    %v1026 = vld [vmem:[#allocation3 + $0xeb0] sm:$0xff]
    %v1027 = vld [vmem:[#allocation3 + $0xeb8] sm:$0xff]
    %v1028 = vld [vmem:[#allocation3 + $0xec0] sm:$0xff]
    %v1029 = vld [vmem:[#allocation3 + $0xec8] sm:$0xff]
    %v1030 = vld [vmem:[#allocation3 + $0xed0] sm:$0xff]
    %v1031 = vld [vmem:[#allocation3 + $0xed8] sm:$0xff]
    %v1032 = vld [vmem:[#allocation3 + $0xee0] sm:$0xff]
    %v1033 = vld [vmem:[#allocation3 + $0xee8] sm:$0xff]
    %v1034 = vld [vmem:[#allocation3 + $0xef0] sm:$0xff]
    %v1035 = vld [vmem:[#allocation3 + $0xef8] sm:$0xff]
    %v1036 = vld [vmem:[#allocation3 + $0xf00] sm:$0xff]
    %v1037 = vld [vmem:[#allocation3 + $0xf08] sm:$0xff]
    %v1038 = vld [vmem:[#allocation3 + $0xf10] sm:$0xff]
    %v1039 = vld [vmem:[#allocation3 + $0xf18] sm:$0xff]
    %v1040 = vld [vmem:[#allocation3 + $0xf20] sm:$0xff]
    %v1041 = vld [vmem:[#allocation3 + $0xf28] sm:$0xff]
    %v1042 = vld [vmem:[#allocation3 + $0xf30] sm:$0xff]
    %v1043 = vld [vmem:[#allocation3 + $0xf38] sm:$0xff]
    %v1044 = vld [vmem:[#allocation3 + $0xf40] sm:$0xff]
    %v1045 = vld [vmem:[#allocation3 + $0xf48] sm:$0xff]
    %v1046 = vld [vmem:[#allocation3 + $0xf50] sm:$0xff]
    %v1047 = vld [vmem:[#allocation3 + $0xf58] sm:$0xff]
    %v1048 = vld [vmem:[#allocation3 + $0xf60] sm:$0xff]
    %v1049 = vld [vmem:[#allocation3 + $0xf68] sm:$0xff]
    %v1050 = vld [vmem:[#allocation3 + $0xf70] sm:$0xff]
    %v1051 = vld [vmem:[#allocation3 + $0xf78] sm:$0xff]
    %v1052 = vld [vmem:[#allocation3 + $0xf80] sm:$0xff]
    %v1053 = vld [vmem:[#allocation3 + $0xf88] sm:$0xff]
    %v1054 = vld [vmem:[#allocation3 + $0xf90] sm:$0xff]
    %v1055 = vld [vmem:[#allocation3 + $0xf98] sm:$0xff]
    %v1056 = vld [vmem:[#allocation3 + $0xfa0] sm:$0xff]
    %v1057 = vld [vmem:[#allocation3 + $0xfa8] sm:$0xff]
    %v1058 = vld [vmem:[#allocation3 + $0xfb0] sm:$0xff]
    %v1059 = vld [vmem:[#allocation3 + $0xfb8] sm:$0xff]
    %v1060 = vld [vmem:[#allocation3 + $0xfc0] sm:$0xff]
    %v1061 = vld [vmem:[#allocation3 + $0xfc8] sm:$0xff]
    %v1062 = vld [vmem:[#allocation3 + $0xfd0] sm:$0xff]
    %v1063 = vld [vmem:[#allocation3 + $0xfd8] sm:$0xff]
    %v1064 = vld [vmem:[#allocation3 + $0xfe0] sm:$0xff]
    %v1065 = vld [vmem:[#allocation3 + $0xfe8] sm:$0xff]
    %v1066 = vld [vmem:[#allocation3 + $0xff0] sm:$0xff]
    %v1067 = vld [vmem:[#allocation3 + $0xff8] sm:$0xff]
    %v1068 = vld [vmem:[#allocation10] sm:$0xff]
    %v1070 = vlaneseq
    %v1071 = vshrl.u32 %v1070, 7
    %v1072 = vsub.s32 0, %v1071
    %v1073 = vrot.slane %v1068, %v1072
    %v1074 = vlaneseq
    %v1075 = vshrl.u32 %v1074, 7
    %v1076 = vsub.s32 1, %v1075
    %v1077 = vrot.slane %v1068, %v1076
    %v1078 = vlaneseq
    %v1079 = vshrl.u32 %v1078, 7
    %v1080 = vsub.s32 2, %v1079
    %v1081 = vrot.slane %v1068, %v1080
    %v1082 = vlaneseq
    %v1083 = vshrl.u32 %v1082, 7
    %v1084 = vsub.s32 3, %v1083
    %v1085 = vrot.slane %v1068, %v1084
    %v1086 = vlaneseq
    %v1087 = vshrl.u32 %v1086, 7
    %v1088 = vsub.s32 4, %v1087
    %v1089 = vrot.slane %v1068, %v1088
    %v1090 = vlaneseq
    %v1091 = vshrl.u32 %v1090, 7
    %v1092 = vsub.s32 5, %v1091
    %v1093 = vrot.slane %v1068, %v1092
    %v1094 = vlaneseq
    %v1095 = vshrl.u32 %v1094, 7
    %v1096 = vsub.s32 6, %v1095
    %v1097 = vrot.slane %v1068, %v1096
    %v1098 = vlaneseq
    %v1099 = vshrl.u32 %v1098, 7
    %v1100 = vsub.s32 7, %v1099
    %v1101 = vrot.slane %v1068, %v1100
    %1110 = vmatprep.subr.bf16.mxu0 %v557
    %1111 = vmatpush1.bf16.msra.mxu0 %v556
    %1112 = vmatprep.subr.bf16.mxu0 %v565
    %1113 = vmatpush1.bf16.msra.mxu0 %v564
    %1114 = vmatprep.subr.bf16.mxu0 %v573
    %1115 = vmatpush1.bf16.msra.mxu0 %v572
    %1116 = vmatprep.subr.bf16.mxu0 %v581
    %1117 = vmatpush1.bf16.msra.mxu0 %v580
    %1118 = vmatprep.subr.bf16.mxu0 %v589
    %1119 = vmatpush1.bf16.msra.mxu0 %v588
    %1120 = vmatprep.subr.bf16.mxu0 %v597
    %1121 = vmatpush1.bf16.msra.mxu0 %v596
    %1122 = vmatprep.subr.bf16.mxu0 %v605
    %1123 = vmatpush1.bf16.msra.mxu0 %v604
    %1124 = vmatprep.subr.bf16.mxu0 %v613
    %1125 = vmatpush1.bf16.msra.mxu0 %v612
    %1126 = vmatprep.subr.bf16.mxu0 %v621
    %1127 = vmatpush1.bf16.msra.mxu0 %v620
    %1128 = vmatprep.subr.bf16.mxu0 %v629
    %1129 = vmatpush1.bf16.msra.mxu0 %v628
    %1130 = vmatprep.subr.bf16.mxu0 %v637
    %1131 = vmatpush1.bf16.msra.mxu0 %v636
    %1132 = vmatprep.subr.bf16.mxu0 %v645
    %1133 = vmatpush1.bf16.msra.mxu0 %v644
    %1134 = vmatprep.subr.bf16.mxu0 %v653
    %1135 = vmatpush1.bf16.msra.mxu0 %v652
    %1136 = vmatprep.subr.bf16.mxu0 %v661
    %1137 = vmatpush1.bf16.msra.mxu0 %v660
    %1138 = vmatprep.subr.bf16.mxu0 %v669
    %1139 = vmatpush1.bf16.msra.mxu0 %v668
    %1140 = vmatprep.subr.bf16.mxu0 %v677
    %1141 = vmatpush1.bf16.msra.mxu0 %v676
    %1142 = vmatprep.mubr.bf16.mxu0 %v545
    %1143 = vmatmul.mubr.bf16.gmra.mrb[0].mxu0 %v544
    %v1144 = vpop.f32.mrb[0].mxu0
    %v1145 = vadd.f32 %v1073, %v1144
    %v1146 = vpop.f32.mrb[0].mxu0
    %v1147 = vadd.f32 %v1077, %v1146
    %v1148 = vpop.f32.mrb[0].mxu0
    %v1149 = vpop.f32.mrb[0].mxu0
    %1150 = vdwg.mxu0
    %1151 = vmatprep.subr.bf16.mxu0 %v685
    %1152 = vmatpush1.bf16.msra.mxu0 %v684
    %1153 = vmatprep.subr.bf16.mxu0 %v693
    %1154 = vmatpush1.bf16.msra.mxu0 %v692
    %1155 = vmatprep.subr.bf16.mxu0 %v701
    %1156 = vmatpush1.bf16.msra.mxu0 %v700
    %1157 = vmatprep.subr.bf16.mxu0 %v709
    %1158 = vmatpush1.bf16.msra.mxu0 %v708
    %1159 = vmatprep.subr.bf16.mxu0 %v717
    %1160 = vmatpush1.bf16.msra.mxu0 %v716
    %1161 = vmatprep.subr.bf16.mxu0 %v725
    %1162 = vmatpush1.bf16.msra.mxu0 %v724
    %1163 = vmatprep.subr.bf16.mxu0 %v733
    %1164 = vmatpush1.bf16.msra.mxu0 %v732
    %1165 = vmatprep.subr.bf16.mxu0 %v741
    %1166 = vmatpush1.bf16.msra.mxu0 %v740
    %1167 = vmatprep.subr.bf16.mxu0 %v749
    %1168 = vmatpush1.bf16.msra.mxu0 %v748
    %1169 = vmatprep.subr.bf16.mxu0 %v757
    %1170 = vmatpush1.bf16.msra.mxu0 %v756
    %1171 = vmatprep.subr.bf16.mxu0 %v765
    %1172 = vmatpush1.bf16.msra.mxu0 %v764
    %1173 = vmatprep.subr.bf16.mxu0 %v773
    %1174 = vmatpush1.bf16.msra.mxu0 %v772
    %1175 = vmatprep.subr.bf16.mxu0 %v781
    %1176 = vmatpush1.bf16.msra.mxu0 %v780
    %1177 = vmatprep.subr.bf16.mxu0 %v789
    %1178 = vmatpush1.bf16.msra.mxu0 %v788
    %1179 = vmatprep.subr.bf16.mxu0 %v797
    %1180 = vmatpush1.bf16.msra.mxu0 %v796
    %1181 = vmatprep.subr.bf16.mxu0 %v805
    %1182 = vmatpush1.bf16.msra.mxu0 %v804
    %1183 = vmatprep.mubr.bf16.mxu0 %v547
    %1184 = vmatmul.mubr.bf16.gmra.mrb[0].mxu0 %v546
    %v1185 = vpop.f32.mrb[0].mxu0
    %v1186 = vadd.f32 %v1145, %v1185
    %v1187 = vpop.f32.mrb[0].mxu0
    %v1188 = vadd.f32 %v1147, %v1187
    %v1189 = vpop.f32.mrb[0].mxu0
    %v1190 = vpop.f32.mrb[0].mxu0
    %1191 = vdwg.mxu0
    %1192 = vmatprep.subr.bf16.mxu0 %v813
    %1193 = vmatpush1.bf16.msra.mxu0 %v812
    %1194 = vmatprep.subr.bf16.mxu0 %v821
    %1195 = vmatpush1.bf16.msra.mxu0 %v820
    %1196 = vmatprep.subr.bf16.mxu0 %v829
    %1197 = vmatpush1.bf16.msra.mxu0 %v828
    %1198 = vmatprep.subr.bf16.mxu0 %v837
    %1199 = vmatpush1.bf16.msra.mxu0 %v836
    %1200 = vmatprep.subr.bf16.mxu0 %v845
    %1201 = vmatpush1.bf16.msra.mxu0 %v844
    %1202 = vmatprep.subr.bf16.mxu0 %v853
    %1203 = vmatpush1.bf16.msra.mxu0 %v852
    %1204 = vmatprep.subr.bf16.mxu0 %v861
    %1205 = vmatpush1.bf16.msra.mxu0 %v860
    %1206 = vmatprep.subr.bf16.mxu0 %v869
    %1207 = vmatpush1.bf16.msra.mxu0 %v868
    %1208 = vmatprep.subr.bf16.mxu0 %v877
    %1209 = vmatpush1.bf16.msra.mxu0 %v876
    %1210 = vmatprep.subr.bf16.mxu0 %v885
    %1211 = vmatpush1.bf16.msra.mxu0 %v884
    %1212 = vmatprep.subr.bf16.mxu0 %v893
    %1213 = vmatpush1.bf16.msra.mxu0 %v892
    %1214 = vmatprep.subr.bf16.mxu0 %v901
    %1215 = vmatpush1.bf16.msra.mxu0 %v900
    %1216 = vmatprep.subr.bf16.mxu0 %v909
    %1217 = vmatpush1.bf16.msra.mxu0 %v908
    %1218 = vmatprep.subr.bf16.mxu0 %v917
    %1219 = vmatpush1.bf16.msra.mxu0 %v916
    %1220 = vmatprep.subr.bf16.mxu0 %v925
    %1221 = vmatpush1.bf16.msra.mxu0 %v924
    %1222 = vmatprep.subr.bf16.mxu0 %v933
    %1223 = vmatpush1.bf16.msra.mxu0 %v932
    %1224 = vmatprep.mubr.bf16.mxu0 %v549
    %1225 = vmatmul.mubr.bf16.gmra.mrb[0].mxu0 %v548
    %v1226 = vpop.f32.mrb[0].mxu0
    %v1227 = vadd.f32 %v1186, %v1226
    %v1228 = vpop.f32.mrb[0].mxu0
    %v1229 = vadd.f32 %v1188, %v1228
    %v1230 = vpop.f32.mrb[0].mxu0
    %v1231 = vpop.f32.mrb[0].mxu0
    %1232 = vdwg.mxu0
    %1233 = vmatprep.subr.bf16.mxu0 %v941
    %1234 = vmatpush1.bf16.msra.mxu0 %v940
    %1235 = vmatprep.subr.bf16.mxu0 %v949
    %1236 = vmatpush1.bf16.msra.mxu0 %v948
    %1237 = vmatprep.subr.bf16.mxu0 %v957
    %1238 = vmatpush1.bf16.msra.mxu0 %v956
    %1239 = vmatprep.subr.bf16.mxu0 %v965
    %1240 = vmatpush1.bf16.msra.mxu0 %v964
    %1241 = vmatprep.subr.bf16.mxu0 %v973
    %1242 = vmatpush1.bf16.msra.mxu0 %v972
    %1243 = vmatprep.subr.bf16.mxu0 %v981
    %1244 = vmatpush1.bf16.msra.mxu0 %v980
    %1245 = vmatprep.subr.bf16.mxu0 %v989
    %1246 = vmatpush1.bf16.msra.mxu0 %v988
    %1247 = vmatprep.subr.bf16.mxu0 %v997
    %1248 = vmatpush1.bf16.msra.mxu0 %v996
    %1249 = vmatprep.subr.bf16.mxu0 %v1005
    %1250 = vmatpush1.bf16.msra.mxu0 %v1004
    %1251 = vmatprep.subr.bf16.mxu0 %v1013
    %1252 = vmatpush1.bf16.msra.mxu0 %v1012
    %1253 = vmatprep.subr.bf16.mxu0 %v1021
    %1254 = vmatpush1.bf16.msra.mxu0 %v1020
    %1255 = vmatprep.subr.bf16.mxu0 %v1029
    %1256 = vmatpush1.bf16.msra.mxu0 %v1028
    %1257 = vmatprep.subr.bf16.mxu0 %v1037
    %1258 = vmatpush1.bf16.msra.mxu0 %v1036
    %1259 = vmatprep.subr.bf16.mxu0 %v1045
    %1260 = vmatpush1.bf16.msra.mxu0 %v1044
    %1261 = vmatprep.subr.bf16.mxu0 %v1053
    %1262 = vmatpush1.bf16.msra.mxu0 %v1052
    %1263 = vmatprep.subr.bf16.mxu0 %v1061
    %1264 = vmatpush1.bf16.msra.mxu0 %v1060
    %1265 = vmatprep.mubr.bf16.mxu0 %v551
    %1266 = vmatmul.mubr.bf16.gmra.mrb[0].mxu0 %v550
    %v1267 = vpop.f32.mrb[0].mxu0
    %v1268 = vadd.f32 %v1227, %v1267
    %v1269 = vpop.f32.mrb[0].mxu0
    %v1270 = vadd.f32 %v1229, %v1269
    %v1271 = vpop.f32.mrb[0].mxu0
    %v1272 = vpop.f32.mrb[0].mxu0
    %1273 = vdwg.mxu0
    %1274 = vmatprep.subr.bf16.mxu0 %v559
    %1275 = vmatpush1.bf16.msra.mxu0 %v558
    %1276 = vmatprep.subr.bf16.mxu0 %v567
    %1277 = vmatpush1.bf16.msra.mxu0 %v566
    %1278 = vmatprep.subr.bf16.mxu0 %v575
    %1279 = vmatpush1.bf16.msra.mxu0 %v574
    %1280 = vmatprep.subr.bf16.mxu0 %v583
    %1281 = vmatpush1.bf16.msra.mxu0 %v582
    %1282 = vmatprep.subr.bf16.mxu0 %v591
    %1283 = vmatpush1.bf16.msra.mxu0 %v590
    %1284 = vmatprep.subr.bf16.mxu0 %v599
    %1285 = vmatpush1.bf16.msra.mxu0 %v598
    %1286 = vmatprep.subr.bf16.mxu0 %v607
    %1287 = vmatpush1.bf16.msra.mxu0 %v606
    %1288 = vmatprep.subr.bf16.mxu0 %v615
    %1289 = vmatpush1.bf16.msra.mxu0 %v614
    %1290 = vmatprep.subr.bf16.mxu0 %v623
    %1291 = vmatpush1.bf16.msra.mxu0 %v622
    %1292 = vmatprep.subr.bf16.mxu0 %v631
    %1293 = vmatpush1.bf16.msra.mxu0 %v630
    %1294 = vmatprep.subr.bf16.mxu0 %v639
    %1295 = vmatpush1.bf16.msra.mxu0 %v638
    %1296 = vmatprep.subr.bf16.mxu0 %v647
    %1297 = vmatpush1.bf16.msra.mxu0 %v646
    %1298 = vmatprep.subr.bf16.mxu0 %v655
    %1299 = vmatpush1.bf16.msra.mxu0 %v654
    %1300 = vmatprep.subr.bf16.mxu0 %v663
    %1301 = vmatpush1.bf16.msra.mxu0 %v662
    %1302 = vmatprep.subr.bf16.mxu0 %v671
    %1303 = vmatpush1.bf16.msra.mxu0 %v670
    %1304 = vmatprep.subr.bf16.mxu0 %v679
    %1305 = vmatpush1.bf16.msra.mxu0 %v678
    %1306 = vmatprep.mubr.bf16.mxu0 %v545
    %1307 = vmatmul.mubr.bf16.gmra.mrb[0].mxu0 %v544
    %v1308 = vpop.f32.mrb[0].mxu0
    %v1309 = vadd.f32 %v1081, %v1308
    %v1310 = vpop.f32.mrb[0].mxu0
    %v1311 = vadd.f32 %v1085, %v1310
    %v1312 = vpop.f32.mrb[0].mxu0
    %v1313 = vpop.f32.mrb[0].mxu0
    %1314 = vdwg.mxu0
    %1315 = vmatprep.subr.bf16.mxu0 %v687
    %1316 = vmatpush1.bf16.msra.mxu0 %v686
    %1317 = vmatprep.subr.bf16.mxu0 %v695
    %1318 = vmatpush1.bf16.msra.mxu0 %v694
    %1319 = vmatprep.subr.bf16.mxu0 %v703
    %1320 = vmatpush1.bf16.msra.mxu0 %v702
    %1321 = vmatprep.subr.bf16.mxu0 %v711
    %1322 = vmatpush1.bf16.msra.mxu0 %v710
    %1323 = vmatprep.subr.bf16.mxu0 %v719
    %1324 = vmatpush1.bf16.msra.mxu0 %v718
    %1325 = vmatprep.subr.bf16.mxu0 %v727
    %1326 = vmatpush1.bf16.msra.mxu0 %v726
    %1327 = vmatprep.subr.bf16.mxu0 %v735
    %1328 = vmatpush1.bf16.msra.mxu0 %v734
    %1329 = vmatprep.subr.bf16.mxu0 %v743
    %1330 = vmatpush1.bf16.msra.mxu0 %v742
    %1331 = vmatprep.subr.bf16.mxu0 %v751
    %1332 = vmatpush1.bf16.msra.mxu0 %v750
    %1333 = vmatprep.subr.bf16.mxu0 %v759
    %1334 = vmatpush1.bf16.msra.mxu0 %v758
    %1335 = vmatprep.subr.bf16.mxu0 %v767
    %1336 = vmatpush1.bf16.msra.mxu0 %v766
    %1337 = vmatprep.subr.bf16.mxu0 %v775
    %1338 = vmatpush1.bf16.msra.mxu0 %v774
    %1339 = vmatprep.subr.bf16.mxu0 %v783
    %1340 = vmatpush1.bf16.msra.mxu0 %v782
    %1341 = vmatprep.subr.bf16.mxu0 %v791
    %1342 = vmatpush1.bf16.msra.mxu0 %v790
    %1343 = vmatprep.subr.bf16.mxu0 %v799
    %1344 = vmatpush1.bf16.msra.mxu0 %v798
    %1345 = vmatprep.subr.bf16.mxu0 %v807
    %1346 = vmatpush1.bf16.msra.mxu0 %v806
    %1347 = vmatprep.mubr.bf16.mxu0 %v547
    %1348 = vmatmul.mubr.bf16.gmra.mrb[0].mxu0 %v546
    %v1349 = vpop.f32.mrb[0].mxu0
    %v1350 = vadd.f32 %v1309, %v1349
    %v1351 = vpop.f32.mrb[0].mxu0
    %v1352 = vadd.f32 %v1311, %v1351
    %v1353 = vpop.f32.mrb[0].mxu0
    %v1354 = vpop.f32.mrb[0].mxu0
    %1355 = vdwg.mxu0
    %1356 = vmatprep.subr.bf16.mxu0 %v815
    %1357 = vmatpush1.bf16.msra.mxu0 %v814
    %1358 = vmatprep.subr.bf16.mxu0 %v823
    %1359 = vmatpush1.bf16.msra.mxu0 %v822
    %1360 = vmatprep.subr.bf16.mxu0 %v831
    %1361 = vmatpush1.bf16.msra.mxu0 %v830
    %1362 = vmatprep.subr.bf16.mxu0 %v839
    %1363 = vmatpush1.bf16.msra.mxu0 %v838
    %1364 = vmatprep.subr.bf16.mxu0 %v847
    %1365 = vmatpush1.bf16.msra.mxu0 %v846
    %1366 = vmatprep.subr.bf16.mxu0 %v855
    %1367 = vmatpush1.bf16.msra.mxu0 %v854
    %1368 = vmatprep.subr.bf16.mxu0 %v863
    %1369 = vmatpush1.bf16.msra.mxu0 %v862
    %1370 = vmatprep.subr.bf16.mxu0 %v871
    %1371 = vmatpush1.bf16.msra.mxu0 %v870
    %1372 = vmatprep.subr.bf16.mxu0 %v879
    %1373 = vmatpush1.bf16.msra.mxu0 %v878
    %1374 = vmatprep.subr.bf16.mxu0 %v887
    %1375 = vmatpush1.bf16.msra.mxu0 %v886
    %1376 = vmatprep.subr.bf16.mxu0 %v895
    %1377 = vmatpush1.bf16.msra.mxu0 %v894
    %1378 = vmatprep.subr.bf16.mxu0 %v903
    %1379 = vmatpush1.bf16.msra.mxu0 %v902
    %1380 = vmatprep.subr.bf16.mxu0 %v911
    %1381 = vmatpush1.bf16.msra.mxu0 %v910
    %1382 = vmatprep.subr.bf16.mxu0 %v919
    %1383 = vmatpush1.bf16.msra.mxu0 %v918
    %1384 = vmatprep.subr.bf16.mxu0 %v927
    %1385 = vmatpush1.bf16.msra.mxu0 %v926
    %1386 = vmatprep.subr.bf16.mxu0 %v935
    %1387 = vmatpush1.bf16.msra.mxu0 %v934
    %1388 = vmatprep.mubr.bf16.mxu0 %v549
    %1389 = vmatmul.mubr.bf16.gmra.mrb[0].mxu0 %v548
    %v1390 = vpop.f32.mrb[0].mxu0
    %v1391 = vadd.f32 %v1350, %v1390
    %v1392 = vpop.f32.mrb[0].mxu0
    %v1393 = vadd.f32 %v1352, %v1392
    %v1394 = vpop.f32.mrb[0].mxu0
    %v1395 = vpop.f32.mrb[0].mxu0
    %1396 = vdwg.mxu0
    %1397 = vmatprep.subr.bf16.mxu0 %v943
    %1398 = vmatpush1.bf16.msra.mxu0 %v942
    %1399 = vmatprep.subr.bf16.mxu0 %v951
    %1400 = vmatpush1.bf16.msra.mxu0 %v950
    %1401 = vmatprep.subr.bf16.mxu0 %v959
    %1402 = vmatpush1.bf16.msra.mxu0 %v958
    %1403 = vmatprep.subr.bf16.mxu0 %v967
    %1404 = vmatpush1.bf16.msra.mxu0 %v966
    %1405 = vmatprep.subr.bf16.mxu0 %v975
    %1406 = vmatpush1.bf16.msra.mxu0 %v974
    %1407 = vmatprep.subr.bf16.mxu0 %v983
    %1408 = vmatpush1.bf16.msra.mxu0 %v982
    %1409 = vmatprep.subr.bf16.mxu0 %v991
    %1410 = vmatpush1.bf16.msra.mxu0 %v990
    %1411 = vmatprep.subr.bf16.mxu0 %v999
    %1412 = vmatpush1.bf16.msra.mxu0 %v998
    %1413 = vmatprep.subr.bf16.mxu0 %v1007
    %1414 = vmatpush1.bf16.msra.mxu0 %v1006
    %1415 = vmatprep.subr.bf16.mxu0 %v1015
    %1416 = vmatpush1.bf16.msra.mxu0 %v1014
    %1417 = vmatprep.subr.bf16.mxu0 %v1023
    %1418 = vmatpush1.bf16.msra.mxu0 %v1022
    %1419 = vmatprep.subr.bf16.mxu0 %v1031
    %1420 = vmatpush1.bf16.msra.mxu0 %v1030
    %1421 = vmatprep.subr.bf16.mxu0 %v1039
    %1422 = vmatpush1.bf16.msra.mxu0 %v1038
    %1423 = vmatprep.subr.bf16.mxu0 %v1047
    %1424 = vmatpush1.bf16.msra.mxu0 %v1046
    %1425 = vmatprep.subr.bf16.mxu0 %v1055
    %1426 = vmatpush1.bf16.msra.mxu0 %v1054
    %1427 = vmatprep.subr.bf16.mxu0 %v1063
    %1428 = vmatpush1.bf16.msra.mxu0 %v1062
    %1429 = vmatprep.mubr.bf16.mxu0 %v551
    %1430 = vmatmul.mubr.bf16.gmra.mrb[0].mxu0 %v550
    %v1431 = vpop.f32.mrb[0].mxu0
    %v1432 = vadd.f32 %v1391, %v1431
    %v1433 = vpop.f32.mrb[0].mxu0
    %v1434 = vadd.f32 %v1393, %v1433
    %v1435 = vpop.f32.mrb[0].mxu0
    %v1436 = vpop.f32.mrb[0].mxu0
    %1437 = vdwg.mxu0
    %1438 = vmatprep.subr.bf16.mxu0 %v561
    %1439 = vmatpush1.bf16.msra.mxu0 %v560
    %1440 = vmatprep.subr.bf16.mxu0 %v569
    %1441 = vmatpush1.bf16.msra.mxu0 %v568
    %1442 = vmatprep.subr.bf16.mxu0 %v577
    %1443 = vmatpush1.bf16.msra.mxu0 %v576
    %1444 = vmatprep.subr.bf16.mxu0 %v585
    %1445 = vmatpush1.bf16.msra.mxu0 %v584
    %1446 = vmatprep.subr.bf16.mxu0 %v593
    %1447 = vmatpush1.bf16.msra.mxu0 %v592
    %1448 = vmatprep.subr.bf16.mxu0 %v601
    %1449 = vmatpush1.bf16.msra.mxu0 %v600
    %1450 = vmatprep.subr.bf16.mxu0 %v609
    %1451 = vmatpush1.bf16.msra.mxu0 %v608
    %1452 = vmatprep.subr.bf16.mxu0 %v617
    %1453 = vmatpush1.bf16.msra.mxu0 %v616
    %1454 = vmatprep.subr.bf16.mxu0 %v625
    %1455 = vmatpush1.bf16.msra.mxu0 %v624
    %1456 = vmatprep.subr.bf16.mxu0 %v633
    %1457 = vmatpush1.bf16.msra.mxu0 %v632
    %1458 = vmatprep.subr.bf16.mxu0 %v641
    %1459 = vmatpush1.bf16.msra.mxu0 %v640
    %1460 = vmatprep.subr.bf16.mxu0 %v649
    %1461 = vmatpush1.bf16.msra.mxu0 %v648
    %1462 = vmatprep.subr.bf16.mxu0 %v657
    %1463 = vmatpush1.bf16.msra.mxu0 %v656
    %1464 = vmatprep.subr.bf16.mxu0 %v665
    %1465 = vmatpush1.bf16.msra.mxu0 %v664
    %1466 = vmatprep.subr.bf16.mxu0 %v673
    %1467 = vmatpush1.bf16.msra.mxu0 %v672
    %1468 = vmatprep.subr.bf16.mxu0 %v681
    %1469 = vmatpush1.bf16.msra.mxu0 %v680
    %1470 = vmatprep.mubr.bf16.mxu0 %v545
    %1471 = vmatmul.mubr.bf16.gmra.mrb[0].mxu0 %v544
    %v1472 = vpop.f32.mrb[0].mxu0
    %v1473 = vadd.f32 %v1089, %v1472
    %v1474 = vpop.f32.mrb[0].mxu0
    %v1475 = vadd.f32 %v1093, %v1474
    %v1476 = vpop.f32.mrb[0].mxu0
    %v1477 = vpop.f32.mrb[0].mxu0
    %1478 = vdwg.mxu0
    %1479 = vmatprep.subr.bf16.mxu0 %v689
    %1480 = vmatpush1.bf16.msra.mxu0 %v688
    %1481 = vmatprep.subr.bf16.mxu0 %v697
    %1482 = vmatpush1.bf16.msra.mxu0 %v696
    %1483 = vmatprep.subr.bf16.mxu0 %v705
    %1484 = vmatpush1.bf16.msra.mxu0 %v704
    %1485 = vmatprep.subr.bf16.mxu0 %v713
    %1486 = vmatpush1.bf16.msra.mxu0 %v712
    %1487 = vmatprep.subr.bf16.mxu0 %v721
    %1488 = vmatpush1.bf16.msra.mxu0 %v720
    %1489 = vmatprep.subr.bf16.mxu0 %v729
    %1490 = vmatpush1.bf16.msra.mxu0 %v728
    %1491 = vmatprep.subr.bf16.mxu0 %v737
    %1492 = vmatpush1.bf16.msra.mxu0 %v736
    %1493 = vmatprep.subr.bf16.mxu0 %v745
    %1494 = vmatpush1.bf16.msra.mxu0 %v744
    %1495 = vmatprep.subr.bf16.mxu0 %v753
    %1496 = vmatpush1.bf16.msra.mxu0 %v752
    %1497 = vmatprep.subr.bf16.mxu0 %v761
    %1498 = vmatpush1.bf16.msra.mxu0 %v760
    %1499 = vmatprep.subr.bf16.mxu0 %v769
    %1500 = vmatpush1.bf16.msra.mxu0 %v768
    %1501 = vmatprep.subr.bf16.mxu0 %v777
    %1502 = vmatpush1.bf16.msra.mxu0 %v776
    %1503 = vmatprep.subr.bf16.mxu0 %v785
    %1504 = vmatpush1.bf16.msra.mxu0 %v784
    %1505 = vmatprep.subr.bf16.mxu0 %v793
    %1506 = vmatpush1.bf16.msra.mxu0 %v792
    %1507 = vmatprep.subr.bf16.mxu0 %v801
    %1508 = vmatpush1.bf16.msra.mxu0 %v800
    %1509 = vmatprep.subr.bf16.mxu0 %v809
    %1510 = vmatpush1.bf16.msra.mxu0 %v808
    %1511 = vmatprep.mubr.bf16.mxu0 %v547
    %1512 = vmatmul.mubr.bf16.gmra.mrb[0].mxu0 %v546
    %v1513 = vpop.f32.mrb[0].mxu0
    %v1514 = vadd.f32 %v1473, %v1513
    %v1515 = vpop.f32.mrb[0].mxu0
    %v1516 = vadd.f32 %v1475, %v1515
    %v1517 = vpop.f32.mrb[0].mxu0
    %v1518 = vpop.f32.mrb[0].mxu0
    %1519 = vdwg.mxu0
    %1520 = vmatprep.subr.bf16.mxu0 %v817
    %1521 = vmatpush1.bf16.msra.mxu0 %v816
    %1522 = vmatprep.subr.bf16.mxu0 %v825
    %1523 = vmatpush1.bf16.msra.mxu0 %v824
    %1524 = vmatprep.subr.bf16.mxu0 %v833
    %1525 = vmatpush1.bf16.msra.mxu0 %v832
    %1526 = vmatprep.subr.bf16.mxu0 %v841
    %1527 = vmatpush1.bf16.msra.mxu0 %v840
    %1528 = vmatprep.subr.bf16.mxu0 %v849
    %1529 = vmatpush1.bf16.msra.mxu0 %v848
    %1530 = vmatprep.subr.bf16.mxu0 %v857
    %1531 = vmatpush1.bf16.msra.mxu0 %v856
    %1532 = vmatprep.subr.bf16.mxu0 %v865
    %1533 = vmatpush1.bf16.msra.mxu0 %v864
    %1534 = vmatprep.subr.bf16.mxu0 %v873
    %1535 = vmatpush1.bf16.msra.mxu0 %v872
    %1536 = vmatprep.subr.bf16.mxu0 %v881
    %1537 = vmatpush1.bf16.msra.mxu0 %v880
    %1538 = vmatprep.subr.bf16.mxu0 %v889
    %1539 = vmatpush1.bf16.msra.mxu0 %v888
    %1540 = vmatprep.subr.bf16.mxu0 %v897
    %1541 = vmatpush1.bf16.msra.mxu0 %v896
    %1542 = vmatprep.subr.bf16.mxu0 %v905
    %1543 = vmatpush1.bf16.msra.mxu0 %v904
    %1544 = vmatprep.subr.bf16.mxu0 %v913
    %1545 = vmatpush1.bf16.msra.mxu0 %v912
    %1546 = vmatprep.subr.bf16.mxu0 %v921
    %1547 = vmatpush1.bf16.msra.mxu0 %v920
    %1548 = vmatprep.subr.bf16.mxu0 %v929
    %1549 = vmatpush1.bf16.msra.mxu0 %v928
    %1550 = vmatprep.subr.bf16.mxu0 %v937
    %1551 = vmatpush1.bf16.msra.mxu0 %v936
    %1552 = vmatprep.mubr.bf16.mxu0 %v549
    %1553 = vmatmul.mubr.bf16.gmra.mrb[0].mxu0 %v548
    %v1554 = vpop.f32.mrb[0].mxu0
    %v1555 = vadd.f32 %v1514, %v1554
    %v1556 = vpop.f32.mrb[0].mxu0
    %v1557 = vadd.f32 %v1516, %v1556
    %v1558 = vpop.f32.mrb[0].mxu0
    %v1559 = vpop.f32.mrb[0].mxu0
    %1560 = vdwg.mxu0
    %1561 = vmatprep.subr.bf16.mxu0 %v945
    %1562 = vmatpush1.bf16.msra.mxu0 %v944
    %1563 = vmatprep.subr.bf16.mxu0 %v953
    %1564 = vmatpush1.bf16.msra.mxu0 %v952
    %1565 = vmatprep.subr.bf16.mxu0 %v961
    %1566 = vmatpush1.bf16.msra.mxu0 %v960
    %1567 = vmatprep.subr.bf16.mxu0 %v969
    %1568 = vmatpush1.bf16.msra.mxu0 %v968
    %1569 = vmatprep.subr.bf16.mxu0 %v977
    %1570 = vmatpush1.bf16.msra.mxu0 %v976
    %1571 = vmatprep.subr.bf16.mxu0 %v985
    %1572 = vmatpush1.bf16.msra.mxu0 %v984
    %1573 = vmatprep.subr.bf16.mxu0 %v993
    %1574 = vmatpush1.bf16.msra.mxu0 %v992
    %1575 = vmatprep.subr.bf16.mxu0 %v1001
    %1576 = vmatpush1.bf16.msra.mxu0 %v1000
    %1577 = vmatprep.subr.bf16.mxu0 %v1009
    %1578 = vmatpush1.bf16.msra.mxu0 %v1008
    %1579 = vmatprep.subr.bf16.mxu0 %v1017
    %1580 = vmatpush1.bf16.msra.mxu0 %v1016
    %1581 = vmatprep.subr.bf16.mxu0 %v1025
    %1582 = vmatpush1.bf16.msra.mxu0 %v1024
    %1583 = vmatprep.subr.bf16.mxu0 %v1033
    %1584 = vmatpush1.bf16.msra.mxu0 %v1032
    %1585 = vmatprep.subr.bf16.mxu0 %v1041
    %1586 = vmatpush1.bf16.msra.mxu0 %v1040
    %1587 = vmatprep.subr.bf16.mxu0 %v1049
    %1588 = vmatpush1.bf16.msra.mxu0 %v1048
    %1589 = vmatprep.subr.bf16.mxu0 %v1057
    %1590 = vmatpush1.bf16.msra.mxu0 %v1056
    %1591 = vmatprep.subr.bf16.mxu0 %v1065
    %1592 = vmatpush1.bf16.msra.mxu0 %v1064
    %1593 = vmatprep.mubr.bf16.mxu0 %v551
    %1594 = vmatmul.mubr.bf16.gmra.mrb[0].mxu0 %v550
    %v1595 = vpop.f32.mrb[0].mxu0
    %v1596 = vadd.f32 %v1555, %v1595
    %v1597 = vpop.f32.mrb[0].mxu0
    %v1598 = vadd.f32 %v1557, %v1597
    %v1599 = vpop.f32.mrb[0].mxu0
    %v1600 = vpop.f32.mrb[0].mxu0
    %1601 = vdwg.mxu0
    %1602 = vmatprep.subr.bf16.mxu0 %v563
    %1603 = vmatpush1.bf16.msra.mxu0 %v562
    %1604 = vmatprep.subr.bf16.mxu0 %v571
    %1605 = vmatpush1.bf16.msra.mxu0 %v570
    %1606 = vmatprep.subr.bf16.mxu0 %v579
    %1607 = vmatpush1.bf16.msra.mxu0 %v578
    %1608 = vmatprep.subr.bf16.mxu0 %v587
    %1609 = vmatpush1.bf16.msra.mxu0 %v586
    %1610 = vmatprep.subr.bf16.mxu0 %v595
    %1611 = vmatpush1.bf16.msra.mxu0 %v594
    %1612 = vmatprep.subr.bf16.mxu0 %v603
    %1613 = vmatpush1.bf16.msra.mxu0 %v602
    %1614 = vmatprep.subr.bf16.mxu0 %v611
    %1615 = vmatpush1.bf16.msra.mxu0 %v610
    %1616 = vmatprep.subr.bf16.mxu0 %v619
    %1617 = vmatpush1.bf16.msra.mxu0 %v618
    %1618 = vmatprep.subr.bf16.mxu0 %v627
    %1619 = vmatpush1.bf16.msra.mxu0 %v626
    %1620 = vmatprep.subr.bf16.mxu0 %v635
    %1621 = vmatpush1.bf16.msra.mxu0 %v634
    %1622 = vmatprep.subr.bf16.mxu0 %v643
    %1623 = vmatpush1.bf16.msra.mxu0 %v642
    %1624 = vmatprep.subr.bf16.mxu0 %v651
    %1625 = vmatpush1.bf16.msra.mxu0 %v650
    %1626 = vmatprep.subr.bf16.mxu0 %v659
    %1627 = vmatpush1.bf16.msra.mxu0 %v658
    %1628 = vmatprep.subr.bf16.mxu0 %v667
    %1629 = vmatpush1.bf16.msra.mxu0 %v666
    %1630 = vmatprep.subr.bf16.mxu0 %v675
    %1631 = vmatpush1.bf16.msra.mxu0 %v674
    %1632 = vmatprep.subr.bf16.mxu0 %v683
    %1633 = vmatpush1.bf16.msra.mxu0 %v682
    %1634 = vmatprep.mubr.bf16.mxu0 %v545
    %1635 = vmatmul.mubr.bf16.gmra.mrb[0].mxu0 %v544
    %v1636 = vpop.f32.mrb[0].mxu0
    %v1637 = vadd.f32 %v1097, %v1636
    %v1638 = vpop.f32.mrb[0].mxu0
    %v1639 = vadd.f32 %v1101, %v1638
    %v1640 = vpop.f32.mrb[0].mxu0
    %v1641 = vpop.f32.mrb[0].mxu0
    %1642 = vdwg.mxu0
    %1643 = vmatprep.subr.bf16.mxu0 %v691
    %1644 = vmatpush1.bf16.msra.mxu0 %v690
    %1645 = vmatprep.subr.bf16.mxu0 %v699
    %1646 = vmatpush1.bf16.msra.mxu0 %v698
    %1647 = vmatprep.subr.bf16.mxu0 %v707
    %1648 = vmatpush1.bf16.msra.mxu0 %v706
    %1649 = vmatprep.subr.bf16.mxu0 %v715
    %1650 = vmatpush1.bf16.msra.mxu0 %v714
    %1651 = vmatprep.subr.bf16.mxu0 %v723
    %1652 = vmatpush1.bf16.msra.mxu0 %v722
    %1653 = vmatprep.subr.bf16.mxu0 %v731
    %1654 = vmatpush1.bf16.msra.mxu0 %v730
    %1655 = vmatprep.subr.bf16.mxu0 %v739
    %1656 = vmatpush1.bf16.msra.mxu0 %v738
    %1657 = vmatprep.subr.bf16.mxu0 %v747
    %1658 = vmatpush1.bf16.msra.mxu0 %v746
    %1659 = vmatprep.subr.bf16.mxu0 %v755
    %1660 = vmatpush1.bf16.msra.mxu0 %v754
    %1661 = vmatprep.subr.bf16.mxu0 %v763
    %1662 = vmatpush1.bf16.msra.mxu0 %v762
    %1663 = vmatprep.subr.bf16.mxu0 %v771
    %1664 = vmatpush1.bf16.msra.mxu0 %v770
    %1665 = vmatprep.subr.bf16.mxu0 %v779
    %1666 = vmatpush1.bf16.msra.mxu0 %v778
    %1667 = vmatprep.subr.bf16.mxu0 %v787
    %1668 = vmatpush1.bf16.msra.mxu0 %v786
    %1669 = vmatprep.subr.bf16.mxu0 %v795
    %1670 = vmatpush1.bf16.msra.mxu0 %v794
    %1671 = vmatprep.subr.bf16.mxu0 %v803
    %1672 = vmatpush1.bf16.msra.mxu0 %v802
    %1673 = vmatprep.subr.bf16.mxu0 %v811
    %1674 = vmatpush1.bf16.msra.mxu0 %v810
    %1675 = vmatprep.mubr.bf16.mxu0 %v547
    %1676 = vmatmul.mubr.bf16.gmra.mrb[0].mxu0 %v546
    %v1677 = vpop.f32.mrb[0].mxu0
    %v1678 = vadd.f32 %v1637, %v1677
    %v1679 = vpop.f32.mrb[0].mxu0
    %v1680 = vadd.f32 %v1639, %v1679
    %v1681 = vpop.f32.mrb[0].mxu0
    %v1682 = vpop.f32.mrb[0].mxu0
    %1683 = vdwg.mxu0
    %1684 = vmatprep.subr.bf16.mxu0 %v819
    %1685 = vmatpush1.bf16.msra.mxu0 %v818
    %1686 = vmatprep.subr.bf16.mxu0 %v827
    %1687 = vmatpush1.bf16.msra.mxu0 %v826
    %1688 = vmatprep.subr.bf16.mxu0 %v835
    %1689 = vmatpush1.bf16.msra.mxu0 %v834
    %1690 = vmatprep.subr.bf16.mxu0 %v843
    %1691 = vmatpush1.bf16.msra.mxu0 %v842
    %1692 = vmatprep.subr.bf16.mxu0 %v851
    %1693 = vmatpush1.bf16.msra.mxu0 %v850
    %1694 = vmatprep.subr.bf16.mxu0 %v859
    %1695 = vmatpush1.bf16.msra.mxu0 %v858
    %1696 = vmatprep.subr.bf16.mxu0 %v867
    %1697 = vmatpush1.bf16.msra.mxu0 %v866
    %1698 = vmatprep.subr.bf16.mxu0 %v875
    %1699 = vmatpush1.bf16.msra.mxu0 %v874
    %1700 = vmatprep.subr.bf16.mxu0 %v883
    %1701 = vmatpush1.bf16.msra.mxu0 %v882
    %1702 = vmatprep.subr.bf16.mxu0 %v891
    %1703 = vmatpush1.bf16.msra.mxu0 %v890
    %1704 = vmatprep.subr.bf16.mxu0 %v899
    %1705 = vmatpush1.bf16.msra.mxu0 %v898
    %1706 = vmatprep.subr.bf16.mxu0 %v907
    %1707 = vmatpush1.bf16.msra.mxu0 %v906
    %1708 = vmatprep.subr.bf16.mxu0 %v915
    %1709 = vmatpush1.bf16.msra.mxu0 %v914
    %1710 = vmatprep.subr.bf16.mxu0 %v923
    %1711 = vmatpush1.bf16.msra.mxu0 %v922
    %1712 = vmatprep.subr.bf16.mxu0 %v931
    %1713 = vmatpush1.bf16.msra.mxu0 %v930
    %1714 = vmatprep.subr.bf16.mxu0 %v939
    %1715 = vmatpush1.bf16.msra.mxu0 %v938
    %1716 = vmatprep.mubr.bf16.mxu0 %v549
    %1717 = vmatmul.mubr.bf16.gmra.mrb[0].mxu0 %v548
    %v1718 = vpop.f32.mrb[0].mxu0
    %v1719 = vadd.f32 %v1678, %v1718
    %v1720 = vpop.f32.mrb[0].mxu0
    %v1721 = vadd.f32 %v1680, %v1720
    %v1722 = vpop.f32.mrb[0].mxu0
    %v1723 = vpop.f32.mrb[0].mxu0
    %1724 = vdwg.mxu0
    %1725 = vmatprep.subr.bf16.mxu0 %v947
    %1726 = vmatpush1.bf16.msra.mxu0 %v946
    %1727 = vmatprep.subr.bf16.mxu0 %v955
    %1728 = vmatpush1.bf16.msra.mxu0 %v954
    %1729 = vmatprep.subr.bf16.mxu0 %v963
    %1730 = vmatpush1.bf16.msra.mxu0 %v962
    %1731 = vmatprep.subr.bf16.mxu0 %v971
    %1732 = vmatpush1.bf16.msra.mxu0 %v970
    %1733 = vmatprep.subr.bf16.mxu0 %v979
    %1734 = vmatpush1.bf16.msra.mxu0 %v978
    %1735 = vmatprep.subr.bf16.mxu0 %v987
    %1736 = vmatpush1.bf16.msra.mxu0 %v986
    %1737 = vmatprep.subr.bf16.mxu0 %v995
    %1738 = vmatpush1.bf16.msra.mxu0 %v994
    %1739 = vmatprep.subr.bf16.mxu0 %v1003
    %1740 = vmatpush1.bf16.msra.mxu0 %v1002
    %1741 = vmatprep.subr.bf16.mxu0 %v1011
    %1742 = vmatpush1.bf16.msra.mxu0 %v1010
    %1743 = vmatprep.subr.bf16.mxu0 %v1019
    %1744 = vmatpush1.bf16.msra.mxu0 %v1018
    %1745 = vmatprep.subr.bf16.mxu0 %v1027
    %1746 = vmatpush1.bf16.msra.mxu0 %v1026
    %1747 = vmatprep.subr.bf16.mxu0 %v1035
    %1748 = vmatpush1.bf16.msra.mxu0 %v1034
    %1749 = vmatprep.subr.bf16.mxu0 %v1043
    %1750 = vmatpush1.bf16.msra.mxu0 %v1042
    %1751 = vmatprep.subr.bf16.mxu0 %v1051
    %1752 = vmatpush1.bf16.msra.mxu0 %v1050
    %1753 = vmatprep.subr.bf16.mxu0 %v1059
    %1754 = vmatpush1.bf16.msra.mxu0 %v1058
    %1755 = vmatprep.subr.bf16.mxu0 %v1067
    %1756 = vmatpush1.bf16.msra.mxu0 %v1066
    %1757 = vmatprep.mubr.bf16.mxu0 %v551
    %1758 = vmatmul.mubr.bf16.gmra.mrb[0].mxu0 %v550
    %v1759 = vpop.f32.mrb[0].mxu0
    %v1760 = vadd.f32 %v1719, %v1759
    %v1761 = vpop.f32.mrb[0].mxu0
    %v1762 = vadd.f32 %v1721, %v1761
    %v1763 = vpop.f32.mrb[0].mxu0
    %v1764 = vpop.f32.mrb[0].mxu0
    %1765 = vdwg.mxu0
    %v1766 = vmax.f32 %v1268, 0.0
    %v1767 = vmax.f32 %v1270, 0.0
    %v1768 = vmax.f32 %v1432, 0.0
    %v1769 = vmax.f32 %v1434, 0.0
    %v1770 = vmax.f32 %v1596, 0.0
    %v1771 = vmax.f32 %v1598, 0.0
    %v1772 = vmax.f32 %v1760, 0.0
    %v1773 = vmax.f32 %v1762, 0.0
    %v1774 = vpack.c.bf16 %v1766, %v1766
    %v1775 = vpack.c.bf16 %v1767, %v1767
    %v1776 = vpack.c.bf16 %v1768, %v1768
    %v1777 = vpack.c.bf16 %v1769, %v1769
    %v1778 = vpack.c.bf16 %v1770, %v1770
    %v1779 = vpack.c.bf16 %v1771, %v1771
    %v1780 = vpack.c.bf16 %v1772, %v1772
    %v1781 = vpack.c.bf16 %v1773, %v1773
    %s1782 = smul.u32 %s552, 16
    %s1783 = sshll.u32 %s1782, 4
    %1784 = dma.done %s143, %s1783
    %v1785 = vld [vmem:[#allocation4] sm:$0xff]
    %v1786 = vld [vmem:[#allocation4 + $0x8] sm:$0xff]
    %v1787 = vld [vmem:[#allocation4 + $0x10] sm:$0xff]
    %v1788 = vld [vmem:[#allocation4 + $0x18] sm:$0xff]
    %v1789 = vld [vmem:[#allocation4 + $0x20] sm:$0xff]
    %v1790 = vld [vmem:[#allocation4 + $0x28] sm:$0xff]
    %v1791 = vld [vmem:[#allocation4 + $0x30] sm:$0xff]
    %v1792 = vld [vmem:[#allocation4 + $0x38] sm:$0xff]
    %v1793 = vld [vmem:[#allocation4 + $0x40] sm:$0xff]
    %v1794 = vld [vmem:[#allocation4 + $0x48] sm:$0xff]
    %v1795 = vld [vmem:[#allocation4 + $0x50] sm:$0xff]
    %v1796 = vld [vmem:[#allocation4 + $0x58] sm:$0xff]
    %v1797 = vld [vmem:[#allocation4 + $0x60] sm:$0xff]
    %v1798 = vld [vmem:[#allocation4 + $0x68] sm:$0xff]
    %v1799 = vld [vmem:[#allocation4 + $0x70] sm:$0xff]
    %v1800 = vld [vmem:[#allocation4 + $0x78] sm:$0xff]
    %v1801 = vld [vmem:[#allocation4 + $0x80] sm:$0xff]
    %v1802 = vld [vmem:[#allocation4 + $0x88] sm:$0xff]
    %v1803 = vld [vmem:[#allocation4 + $0x90] sm:$0xff]
    %v1804 = vld [vmem:[#allocation4 + $0x98] sm:$0xff]
    %v1805 = vld [vmem:[#allocation4 + $0xa0] sm:$0xff]
    %v1806 = vld [vmem:[#allocation4 + $0xa8] sm:$0xff]
    %v1807 = vld [vmem:[#allocation4 + $0xb0] sm:$0xff]
    %v1808 = vld [vmem:[#allocation4 + $0xb8] sm:$0xff]
    %v1809 = vld [vmem:[#allocation4 + $0xc0] sm:$0xff]
    %v1810 = vld [vmem:[#allocation4 + $0xc8] sm:$0xff]
    %v1811 = vld [vmem:[#allocation4 + $0xd0] sm:$0xff]
    %v1812 = vld [vmem:[#allocation4 + $0xd8] sm:$0xff]
    %v1813 = vld [vmem:[#allocation4 + $0xe0] sm:$0xff]
    %v1814 = vld [vmem:[#allocation4 + $0xe8] sm:$0xff]
    %v1815 = vld [vmem:[#allocation4 + $0xf0] sm:$0xff]
    %v1816 = vld [vmem:[#allocation4 + $0xf8] sm:$0xff]
    %v1817 = vld [vmem:[#allocation4 + $0x100] sm:$0xff]
    %v1818 = vld [vmem:[#allocation4 + $0x108] sm:$0xff]
    %v1819 = vld [vmem:[#allocation4 + $0x110] sm:$0xff]
    %v1820 = vld [vmem:[#allocation4 + $0x118] sm:$0xff]
    %v1821 = vld [vmem:[#allocation4 + $0x120] sm:$0xff]
    %v1822 = vld [vmem:[#allocation4 + $0x128] sm:$0xff]
    %v1823 = vld [vmem:[#allocation4 + $0x130] sm:$0xff]
    %v1824 = vld [vmem:[#allocation4 + $0x138] sm:$0xff]
    %v1825 = vld [vmem:[#allocation4 + $0x140] sm:$0xff]
    %v1826 = vld [vmem:[#allocation4 + $0x148] sm:$0xff]
    %v1827 = vld [vmem:[#allocation4 + $0x150] sm:$0xff]
    %v1828 = vld [vmem:[#allocation4 + $0x158] sm:$0xff]
    %v1829 = vld [vmem:[#allocation4 + $0x160] sm:$0xff]
    %v1830 = vld [vmem:[#allocation4 + $0x168] sm:$0xff]
    %v1831 = vld [vmem:[#allocation4 + $0x170] sm:$0xff]
    %v1832 = vld [vmem:[#allocation4 + $0x178] sm:$0xff]
    %v1833 = vld [vmem:[#allocation4 + $0x180] sm:$0xff]
    %v1834 = vld [vmem:[#allocation4 + $0x188] sm:$0xff]
    %v1835 = vld [vmem:[#allocation4 + $0x190] sm:$0xff]
    %v1836 = vld [vmem:[#allocation4 + $0x198] sm:$0xff]
    %v1837 = vld [vmem:[#allocation4 + $0x1a0] sm:$0xff]
    %v1838 = vld [vmem:[#allocation4 + $0x1a8] sm:$0xff]
    %v1839 = vld [vmem:[#allocation4 + $0x1b0] sm:$0xff]
    %v1840 = vld [vmem:[#allocation4 + $0x1b8] sm:$0xff]
    %v1841 = vld [vmem:[#allocation4 + $0x1c0] sm:$0xff]
    %v1842 = vld [vmem:[#allocation4 + $0x1c8] sm:$0xff]
    %v1843 = vld [vmem:[#allocation4 + $0x1d0] sm:$0xff]
    %v1844 = vld [vmem:[#allocation4 + $0x1d8] sm:$0xff]
    %v1845 = vld [vmem:[#allocation4 + $0x1e0] sm:$0xff]
    %v1846 = vld [vmem:[#allocation4 + $0x1e8] sm:$0xff]
    %v1847 = vld [vmem:[#allocation4 + $0x1f0] sm:$0xff]
    %v1848 = vld [vmem:[#allocation4 + $0x1f8] sm:$0xff]
    %v1849 = vld [vmem:[#allocation4 + $0x200] sm:$0xff]
    %v1850 = vld [vmem:[#allocation4 + $0x208] sm:$0xff]
    %v1851 = vld [vmem:[#allocation4 + $0x210] sm:$0xff]
    %v1852 = vld [vmem:[#allocation4 + $0x218] sm:$0xff]
    %v1853 = vld [vmem:[#allocation4 + $0x220] sm:$0xff]
    %v1854 = vld [vmem:[#allocation4 + $0x228] sm:$0xff]
    %v1855 = vld [vmem:[#allocation4 + $0x230] sm:$0xff]
    %v1856 = vld [vmem:[#allocation4 + $0x238] sm:$0xff]
    %v1857 = vld [vmem:[#allocation4 + $0x240] sm:$0xff]
    %v1858 = vld [vmem:[#allocation4 + $0x248] sm:$0xff]
    %v1859 = vld [vmem:[#allocation4 + $0x250] sm:$0xff]
    %v1860 = vld [vmem:[#allocation4 + $0x258] sm:$0xff]
    %v1861 = vld [vmem:[#allocation4 + $0x260] sm:$0xff]
    %v1862 = vld [vmem:[#allocation4 + $0x268] sm:$0xff]
    %v1863 = vld [vmem:[#allocation4 + $0x270] sm:$0xff]
    %v1864 = vld [vmem:[#allocation4 + $0x278] sm:$0xff]
    %v1865 = vld [vmem:[#allocation4 + $0x280] sm:$0xff]
    %v1866 = vld [vmem:[#allocation4 + $0x288] sm:$0xff]
    %v1867 = vld [vmem:[#allocation4 + $0x290] sm:$0xff]
    %v1868 = vld [vmem:[#allocation4 + $0x298] sm:$0xff]
    %v1869 = vld [vmem:[#allocation4 + $0x2a0] sm:$0xff]
    %v1870 = vld [vmem:[#allocation4 + $0x2a8] sm:$0xff]
    %v1871 = vld [vmem:[#allocation4 + $0x2b0] sm:$0xff]
    %v1872 = vld [vmem:[#allocation4 + $0x2b8] sm:$0xff]
    %v1873 = vld [vmem:[#allocation4 + $0x2c0] sm:$0xff]
    %v1874 = vld [vmem:[#allocation4 + $0x2c8] sm:$0xff]
    %v1875 = vld [vmem:[#allocation4 + $0x2d0] sm:$0xff]
    %v1876 = vld [vmem:[#allocation4 + $0x2d8] sm:$0xff]
    %v1877 = vld [vmem:[#allocation4 + $0x2e0] sm:$0xff]
    %v1878 = vld [vmem:[#allocation4 + $0x2e8] sm:$0xff]
    %v1879 = vld [vmem:[#allocation4 + $0x2f0] sm:$0xff]
    %v1880 = vld [vmem:[#allocation4 + $0x2f8] sm:$0xff]
    %v1881 = vld [vmem:[#allocation4 + $0x300] sm:$0xff]
    %v1882 = vld [vmem:[#allocation4 + $0x308] sm:$0xff]
    %v1883 = vld [vmem:[#allocation4 + $0x310] sm:$0xff]
    %v1884 = vld [vmem:[#allocation4 + $0x318] sm:$0xff]
    %v1885 = vld [vmem:[#allocation4 + $0x320] sm:$0xff]
    %v1886 = vld [vmem:[#allocation4 + $0x328] sm:$0xff]
    %v1887 = vld [vmem:[#allocation4 + $0x330] sm:$0xff]
    %v1888 = vld [vmem:[#allocation4 + $0x338] sm:$0xff]
    %v1889 = vld [vmem:[#allocation4 + $0x340] sm:$0xff]
    %v1890 = vld [vmem:[#allocation4 + $0x348] sm:$0xff]
    %v1891 = vld [vmem:[#allocation4 + $0x350] sm:$0xff]
    %v1892 = vld [vmem:[#allocation4 + $0x358] sm:$0xff]
    %v1893 = vld [vmem:[#allocation4 + $0x360] sm:$0xff]
    %v1894 = vld [vmem:[#allocation4 + $0x368] sm:$0xff]
    %v1895 = vld [vmem:[#allocation4 + $0x370] sm:$0xff]
    %v1896 = vld [vmem:[#allocation4 + $0x378] sm:$0xff]
    %v1897 = vld [vmem:[#allocation4 + $0x380] sm:$0xff]
    %v1898 = vld [vmem:[#allocation4 + $0x388] sm:$0xff]
    %v1899 = vld [vmem:[#allocation4 + $0x390] sm:$0xff]
    %v1900 = vld [vmem:[#allocation4 + $0x398] sm:$0xff]
    %v1901 = vld [vmem:[#allocation4 + $0x3a0] sm:$0xff]
    %v1902 = vld [vmem:[#allocation4 + $0x3a8] sm:$0xff]
    %v1903 = vld [vmem:[#allocation4 + $0x3b0] sm:$0xff]
    %v1904 = vld [vmem:[#allocation4 + $0x3b8] sm:$0xff]
    %v1905 = vld [vmem:[#allocation4 + $0x3c0] sm:$0xff]
    %v1906 = vld [vmem:[#allocation4 + $0x3c8] sm:$0xff]
    %v1907 = vld [vmem:[#allocation4 + $0x3d0] sm:$0xff]
    %v1908 = vld [vmem:[#allocation4 + $0x3d8] sm:$0xff]
    %v1909 = vld [vmem:[#allocation4 + $0x3e0] sm:$0xff]
    %v1910 = vld [vmem:[#allocation4 + $0x3e8] sm:$0xff]
    %v1911 = vld [vmem:[#allocation4 + $0x3f0] sm:$0xff]
    %v1912 = vld [vmem:[#allocation4 + $0x3f8] sm:$0xff]
    %v1913 = vld [vmem:[#allocation4 + $0x400] sm:$0xff]
    %v1914 = vld [vmem:[#allocation4 + $0x408] sm:$0xff]
    %v1915 = vld [vmem:[#allocation4 + $0x410] sm:$0xff]
    %v1916 = vld [vmem:[#allocation4 + $0x418] sm:$0xff]
    %v1917 = vld [vmem:[#allocation4 + $0x420] sm:$0xff]
    %v1918 = vld [vmem:[#allocation4 + $0x428] sm:$0xff]
    %v1919 = vld [vmem:[#allocation4 + $0x430] sm:$0xff]
    %v1920 = vld [vmem:[#allocation4 + $0x438] sm:$0xff]
    %v1921 = vld [vmem:[#allocation4 + $0x440] sm:$0xff]
    %v1922 = vld [vmem:[#allocation4 + $0x448] sm:$0xff]
    %v1923 = vld [vmem:[#allocation4 + $0x450] sm:$0xff]
    %v1924 = vld [vmem:[#allocation4 + $0x458] sm:$0xff]
    %v1925 = vld [vmem:[#allocation4 + $0x460] sm:$0xff]
    %v1926 = vld [vmem:[#allocation4 + $0x468] sm:$0xff]
    %v1927 = vld [vmem:[#allocation4 + $0x470] sm:$0xff]
    %v1928 = vld [vmem:[#allocation4 + $0x478] sm:$0xff]
    %v1929 = vld [vmem:[#allocation4 + $0x480] sm:$0xff]
    %v1930 = vld [vmem:[#allocation4 + $0x488] sm:$0xff]
    %v1931 = vld [vmem:[#allocation4 + $0x490] sm:$0xff]
    %v1932 = vld [vmem:[#allocation4 + $0x498] sm:$0xff]
    %v1933 = vld [vmem:[#allocation4 + $0x4a0] sm:$0xff]
    %v1934 = vld [vmem:[#allocation4 + $0x4a8] sm:$0xff]
    %v1935 = vld [vmem:[#allocation4 + $0x4b0] sm:$0xff]
    %v1936 = vld [vmem:[#allocation4 + $0x4b8] sm:$0xff]
    %v1937 = vld [vmem:[#allocation4 + $0x4c0] sm:$0xff]
    %v1938 = vld [vmem:[#allocation4 + $0x4c8] sm:$0xff]
    %v1939 = vld [vmem:[#allocation4 + $0x4d0] sm:$0xff]
    %v1940 = vld [vmem:[#allocation4 + $0x4d8] sm:$0xff]
    %v1941 = vld [vmem:[#allocation4 + $0x4e0] sm:$0xff]
    %v1942 = vld [vmem:[#allocation4 + $0x4e8] sm:$0xff]
    %v1943 = vld [vmem:[#allocation4 + $0x4f0] sm:$0xff]
    %v1944 = vld [vmem:[#allocation4 + $0x4f8] sm:$0xff]
    %v1945 = vld [vmem:[#allocation4 + $0x500] sm:$0xff]
    %v1946 = vld [vmem:[#allocation4 + $0x508] sm:$0xff]
    %v1947 = vld [vmem:[#allocation4 + $0x510] sm:$0xff]
    %v1948 = vld [vmem:[#allocation4 + $0x518] sm:$0xff]
    %v1949 = vld [vmem:[#allocation4 + $0x520] sm:$0xff]
    %v1950 = vld [vmem:[#allocation4 + $0x528] sm:$0xff]
    %v1951 = vld [vmem:[#allocation4 + $0x530] sm:$0xff]
    %v1952 = vld [vmem:[#allocation4 + $0x538] sm:$0xff]
    %v1953 = vld [vmem:[#allocation4 + $0x540] sm:$0xff]
    %v1954 = vld [vmem:[#allocation4 + $0x548] sm:$0xff]
    %v1955 = vld [vmem:[#allocation4 + $0x550] sm:$0xff]
    %v1956 = vld [vmem:[#allocation4 + $0x558] sm:$0xff]
    %v1957 = vld [vmem:[#allocation4 + $0x560] sm:$0xff]
    %v1958 = vld [vmem:[#allocation4 + $0x568] sm:$0xff]
    %v1959 = vld [vmem:[#allocation4 + $0x570] sm:$0xff]
    %v1960 = vld [vmem:[#allocation4 + $0x578] sm:$0xff]
    %v1961 = vld [vmem:[#allocation4 + $0x580] sm:$0xff]
    %v1962 = vld [vmem:[#allocation4 + $0x588] sm:$0xff]
    %v1963 = vld [vmem:[#allocation4 + $0x590] sm:$0xff]
    %v1964 = vld [vmem:[#allocation4 + $0x598] sm:$0xff]
    %v1965 = vld [vmem:[#allocation4 + $0x5a0] sm:$0xff]
    %v1966 = vld [vmem:[#allocation4 + $0x5a8] sm:$0xff]
    %v1967 = vld [vmem:[#allocation4 + $0x5b0] sm:$0xff]
    %v1968 = vld [vmem:[#allocation4 + $0x5b8] sm:$0xff]
    %v1969 = vld [vmem:[#allocation4 + $0x5c0] sm:$0xff]
    %v1970 = vld [vmem:[#allocation4 + $0x5c8] sm:$0xff]
    %v1971 = vld [vmem:[#allocation4 + $0x5d0] sm:$0xff]
    %v1972 = vld [vmem:[#allocation4 + $0x5d8] sm:$0xff]
    %v1973 = vld [vmem:[#allocation4 + $0x5e0] sm:$0xff]
    %v1974 = vld [vmem:[#allocation4 + $0x5e8] sm:$0xff]
    %v1975 = vld [vmem:[#allocation4 + $0x5f0] sm:$0xff]
    %v1976 = vld [vmem:[#allocation4 + $0x5f8] sm:$0xff]
    %v1977 = vld [vmem:[#allocation4 + $0x600] sm:$0xff]
    %v1978 = vld [vmem:[#allocation4 + $0x608] sm:$0xff]
    %v1979 = vld [vmem:[#allocation4 + $0x610] sm:$0xff]
    %v1980 = vld [vmem:[#allocation4 + $0x618] sm:$0xff]
    %v1981 = vld [vmem:[#allocation4 + $0x620] sm:$0xff]
    %v1982 = vld [vmem:[#allocation4 + $0x628] sm:$0xff]
    %v1983 = vld [vmem:[#allocation4 + $0x630] sm:$0xff]
    %v1984 = vld [vmem:[#allocation4 + $0x638] sm:$0xff]
    %v1985 = vld [vmem:[#allocation4 + $0x640] sm:$0xff]
    %v1986 = vld [vmem:[#allocation4 + $0x648] sm:$0xff]
    %v1987 = vld [vmem:[#allocation4 + $0x650] sm:$0xff]
    %v1988 = vld [vmem:[#allocation4 + $0x658] sm:$0xff]
    %v1989 = vld [vmem:[#allocation4 + $0x660] sm:$0xff]
    %v1990 = vld [vmem:[#allocation4 + $0x668] sm:$0xff]
    %v1991 = vld [vmem:[#allocation4 + $0x670] sm:$0xff]
    %v1992 = vld [vmem:[#allocation4 + $0x678] sm:$0xff]
    %v1993 = vld [vmem:[#allocation4 + $0x680] sm:$0xff]
    %v1994 = vld [vmem:[#allocation4 + $0x688] sm:$0xff]
    %v1995 = vld [vmem:[#allocation4 + $0x690] sm:$0xff]
    %v1996 = vld [vmem:[#allocation4 + $0x698] sm:$0xff]
    %v1997 = vld [vmem:[#allocation4 + $0x6a0] sm:$0xff]
    %v1998 = vld [vmem:[#allocation4 + $0x6a8] sm:$0xff]
    %v1999 = vld [vmem:[#allocation4 + $0x6b0] sm:$0xff]
    %v2000 = vld [vmem:[#allocation4 + $0x6b8] sm:$0xff]
    %v2001 = vld [vmem:[#allocation4 + $0x6c0] sm:$0xff]
    %v2002 = vld [vmem:[#allocation4 + $0x6c8] sm:$0xff]
    %v2003 = vld [vmem:[#allocation4 + $0x6d0] sm:$0xff]
    %v2004 = vld [vmem:[#allocation4 + $0x6d8] sm:$0xff]
    %v2005 = vld [vmem:[#allocation4 + $0x6e0] sm:$0xff]
    %v2006 = vld [vmem:[#allocation4 + $0x6e8] sm:$0xff]
    %v2007 = vld [vmem:[#allocation4 + $0x6f0] sm:$0xff]
    %v2008 = vld [vmem:[#allocation4 + $0x6f8] sm:$0xff]
    %v2009 = vld [vmem:[#allocation4 + $0x700] sm:$0xff]
    %v2010 = vld [vmem:[#allocation4 + $0x708] sm:$0xff]
    %v2011 = vld [vmem:[#allocation4 + $0x710] sm:$0xff]
    %v2012 = vld [vmem:[#allocation4 + $0x718] sm:$0xff]
    %v2013 = vld [vmem:[#allocation4 + $0x720] sm:$0xff]
    %v2014 = vld [vmem:[#allocation4 + $0x728] sm:$0xff]
    %v2015 = vld [vmem:[#allocation4 + $0x730] sm:$0xff]
    %v2016 = vld [vmem:[#allocation4 + $0x738] sm:$0xff]
    %v2017 = vld [vmem:[#allocation4 + $0x740] sm:$0xff]
    %v2018 = vld [vmem:[#allocation4 + $0x748] sm:$0xff]
    %v2019 = vld [vmem:[#allocation4 + $0x750] sm:$0xff]
    %v2020 = vld [vmem:[#allocation4 + $0x758] sm:$0xff]
    %v2021 = vld [vmem:[#allocation4 + $0x760] sm:$0xff]
    %v2022 = vld [vmem:[#allocation4 + $0x768] sm:$0xff]
    %v2023 = vld [vmem:[#allocation4 + $0x770] sm:$0xff]
    %v2024 = vld [vmem:[#allocation4 + $0x778] sm:$0xff]
    %v2025 = vld [vmem:[#allocation4 + $0x780] sm:$0xff]
    %v2026 = vld [vmem:[#allocation4 + $0x788] sm:$0xff]
    %v2027 = vld [vmem:[#allocation4 + $0x790] sm:$0xff]
    %v2028 = vld [vmem:[#allocation4 + $0x798] sm:$0xff]
    %v2029 = vld [vmem:[#allocation4 + $0x7a0] sm:$0xff]
    %v2030 = vld [vmem:[#allocation4 + $0x7a8] sm:$0xff]
    %v2031 = vld [vmem:[#allocation4 + $0x7b0] sm:$0xff]
    %v2032 = vld [vmem:[#allocation4 + $0x7b8] sm:$0xff]
    %v2033 = vld [vmem:[#allocation4 + $0x7c0] sm:$0xff]
    %v2034 = vld [vmem:[#allocation4 + $0x7c8] sm:$0xff]
    %v2035 = vld [vmem:[#allocation4 + $0x7d0] sm:$0xff]
    %v2036 = vld [vmem:[#allocation4 + $0x7d8] sm:$0xff]
    %v2037 = vld [vmem:[#allocation4 + $0x7e0] sm:$0xff]
    %v2038 = vld [vmem:[#allocation4 + $0x7e8] sm:$0xff]
    %v2039 = vld [vmem:[#allocation4 + $0x7f0] sm:$0xff]
    %v2040 = vld [vmem:[#allocation4 + $0x7f8] sm:$0xff]
    %v2041 = vld [vmem:[#allocation4 + $0x800] sm:$0xff]
    %v2042 = vld [vmem:[#allocation4 + $0x808] sm:$0xff]
    %v2043 = vld [vmem:[#allocation4 + $0x810] sm:$0xff]
    %v2044 = vld [vmem:[#allocation4 + $0x818] sm:$0xff]
    %v2045 = vld [vmem:[#allocation4 + $0x820] sm:$0xff]
    %v2046 = vld [vmem:[#allocation4 + $0x828] sm:$0xff]
    %v2047 = vld [vmem:[#allocation4 + $0x830] sm:$0xff]
    %v2048 = vld [vmem:[#allocation4 + $0x838] sm:$0xff]
    %v2049 = vld [vmem:[#allocation4 + $0x840] sm:$0xff]
    %v2050 = vld [vmem:[#allocation4 + $0x848] sm:$0xff]
    %v2051 = vld [vmem:[#allocation4 + $0x850] sm:$0xff]
    %v2052 = vld [vmem:[#allocation4 + $0x858] sm:$0xff]
    %v2053 = vld [vmem:[#allocation4 + $0x860] sm:$0xff]
    %v2054 = vld [vmem:[#allocation4 + $0x868] sm:$0xff]
    %v2055 = vld [vmem:[#allocation4 + $0x870] sm:$0xff]
    %v2056 = vld [vmem:[#allocation4 + $0x878] sm:$0xff]
    %v2057 = vld [vmem:[#allocation4 + $0x880] sm:$0xff]
    %v2058 = vld [vmem:[#allocation4 + $0x888] sm:$0xff]
    %v2059 = vld [vmem:[#allocation4 + $0x890] sm:$0xff]
    %v2060 = vld [vmem:[#allocation4 + $0x898] sm:$0xff]
    %v2061 = vld [vmem:[#allocation4 + $0x8a0] sm:$0xff]
    %v2062 = vld [vmem:[#allocation4 + $0x8a8] sm:$0xff]
    %v2063 = vld [vmem:[#allocation4 + $0x8b0] sm:$0xff]
    %v2064 = vld [vmem:[#allocation4 + $0x8b8] sm:$0xff]
    %v2065 = vld [vmem:[#allocation4 + $0x8c0] sm:$0xff]
    %v2066 = vld [vmem:[#allocation4 + $0x8c8] sm:$0xff]
    %v2067 = vld [vmem:[#allocation4 + $0x8d0] sm:$0xff]
    %v2068 = vld [vmem:[#allocation4 + $0x8d8] sm:$0xff]
    %v2069 = vld [vmem:[#allocation4 + $0x8e0] sm:$0xff]
    %v2070 = vld [vmem:[#allocation4 + $0x8e8] sm:$0xff]
    %v2071 = vld [vmem:[#allocation4 + $0x8f0] sm:$0xff]
    %v2072 = vld [vmem:[#allocation4 + $0x8f8] sm:$0xff]
    %v2073 = vld [vmem:[#allocation4 + $0x900] sm:$0xff]
    %v2074 = vld [vmem:[#allocation4 + $0x908] sm:$0xff]
    %v2075 = vld [vmem:[#allocation4 + $0x910] sm:$0xff]
    %v2076 = vld [vmem:[#allocation4 + $0x918] sm:$0xff]
    %v2077 = vld [vmem:[#allocation4 + $0x920] sm:$0xff]
    %v2078 = vld [vmem:[#allocation4 + $0x928] sm:$0xff]
    %v2079 = vld [vmem:[#allocation4 + $0x930] sm:$0xff]
    %v2080 = vld [vmem:[#allocation4 + $0x938] sm:$0xff]
    %v2081 = vld [vmem:[#allocation4 + $0x940] sm:$0xff]
    %v2082 = vld [vmem:[#allocation4 + $0x948] sm:$0xff]
    %v2083 = vld [vmem:[#allocation4 + $0x950] sm:$0xff]
    %v2084 = vld [vmem:[#allocation4 + $0x958] sm:$0xff]
    %v2085 = vld [vmem:[#allocation4 + $0x960] sm:$0xff]
    %v2086 = vld [vmem:[#allocation4 + $0x968] sm:$0xff]
    %v2087 = vld [vmem:[#allocation4 + $0x970] sm:$0xff]
    %v2088 = vld [vmem:[#allocation4 + $0x978] sm:$0xff]
    %v2089 = vld [vmem:[#allocation4 + $0x980] sm:$0xff]
    %v2090 = vld [vmem:[#allocation4 + $0x988] sm:$0xff]
    %v2091 = vld [vmem:[#allocation4 + $0x990] sm:$0xff]
    %v2092 = vld [vmem:[#allocation4 + $0x998] sm:$0xff]
    %v2093 = vld [vmem:[#allocation4 + $0x9a0] sm:$0xff]
    %v2094 = vld [vmem:[#allocation4 + $0x9a8] sm:$0xff]
    %v2095 = vld [vmem:[#allocation4 + $0x9b0] sm:$0xff]
    %v2096 = vld [vmem:[#allocation4 + $0x9b8] sm:$0xff]
    %v2097 = vld [vmem:[#allocation4 + $0x9c0] sm:$0xff]
    %v2098 = vld [vmem:[#allocation4 + $0x9c8] sm:$0xff]
    %v2099 = vld [vmem:[#allocation4 + $0x9d0] sm:$0xff]
    %v2100 = vld [vmem:[#allocation4 + $0x9d8] sm:$0xff]
    %v2101 = vld [vmem:[#allocation4 + $0x9e0] sm:$0xff]
    %v2102 = vld [vmem:[#allocation4 + $0x9e8] sm:$0xff]
    %v2103 = vld [vmem:[#allocation4 + $0x9f0] sm:$0xff]
    %v2104 = vld [vmem:[#allocation4 + $0x9f8] sm:$0xff]
    %v2105 = vld [vmem:[#allocation4 + $0xa00] sm:$0xff]
    %v2106 = vld [vmem:[#allocation4 + $0xa08] sm:$0xff]
    %v2107 = vld [vmem:[#allocation4 + $0xa10] sm:$0xff]
    %v2108 = vld [vmem:[#allocation4 + $0xa18] sm:$0xff]
    %v2109 = vld [vmem:[#allocation4 + $0xa20] sm:$0xff]
    %v2110 = vld [vmem:[#allocation4 + $0xa28] sm:$0xff]
    %v2111 = vld [vmem:[#allocation4 + $0xa30] sm:$0xff]
    %v2112 = vld [vmem:[#allocation4 + $0xa38] sm:$0xff]
    %v2113 = vld [vmem:[#allocation4 + $0xa40] sm:$0xff]
    %v2114 = vld [vmem:[#allocation4 + $0xa48] sm:$0xff]
    %v2115 = vld [vmem:[#allocation4 + $0xa50] sm:$0xff]
    %v2116 = vld [vmem:[#allocation4 + $0xa58] sm:$0xff]
    %v2117 = vld [vmem:[#allocation4 + $0xa60] sm:$0xff]
    %v2118 = vld [vmem:[#allocation4 + $0xa68] sm:$0xff]
    %v2119 = vld [vmem:[#allocation4 + $0xa70] sm:$0xff]
    %v2120 = vld [vmem:[#allocation4 + $0xa78] sm:$0xff]
    %v2121 = vld [vmem:[#allocation4 + $0xa80] sm:$0xff]
    %v2122 = vld [vmem:[#allocation4 + $0xa88] sm:$0xff]
    %v2123 = vld [vmem:[#allocation4 + $0xa90] sm:$0xff]
    %v2124 = vld [vmem:[#allocation4 + $0xa98] sm:$0xff]
    %v2125 = vld [vmem:[#allocation4 + $0xaa0] sm:$0xff]
    %v2126 = vld [vmem:[#allocation4 + $0xaa8] sm:$0xff]
    %v2127 = vld [vmem:[#allocation4 + $0xab0] sm:$0xff]
    %v2128 = vld [vmem:[#allocation4 + $0xab8] sm:$0xff]
    %v2129 = vld [vmem:[#allocation4 + $0xac0] sm:$0xff]
    %v2130 = vld [vmem:[#allocation4 + $0xac8] sm:$0xff]
    %v2131 = vld [vmem:[#allocation4 + $0xad0] sm:$0xff]
    %v2132 = vld [vmem:[#allocation4 + $0xad8] sm:$0xff]
    %v2133 = vld [vmem:[#allocation4 + $0xae0] sm:$0xff]
    %v2134 = vld [vmem:[#allocation4 + $0xae8] sm:$0xff]
    %v2135 = vld [vmem:[#allocation4 + $0xaf0] sm:$0xff]
    %v2136 = vld [vmem:[#allocation4 + $0xaf8] sm:$0xff]
    %v2137 = vld [vmem:[#allocation4 + $0xb00] sm:$0xff]
    %v2138 = vld [vmem:[#allocation4 + $0xb08] sm:$0xff]
    %v2139 = vld [vmem:[#allocation4 + $0xb10] sm:$0xff]
    %v2140 = vld [vmem:[#allocation4 + $0xb18] sm:$0xff]
    %v2141 = vld [vmem:[#allocation4 + $0xb20] sm:$0xff]
    %v2142 = vld [vmem:[#allocation4 + $0xb28] sm:$0xff]
    %v2143 = vld [vmem:[#allocation4 + $0xb30] sm:$0xff]
    %v2144 = vld [vmem:[#allocation4 + $0xb38] sm:$0xff]
    %v2145 = vld [vmem:[#allocation4 + $0xb40] sm:$0xff]
    %v2146 = vld [vmem:[#allocation4 + $0xb48] sm:$0xff]
    %v2147 = vld [vmem:[#allocation4 + $0xb50] sm:$0xff]
    %v2148 = vld [vmem:[#allocation4 + $0xb58] sm:$0xff]
    %v2149 = vld [vmem:[#allocation4 + $0xb60] sm:$0xff]
    %v2150 = vld [vmem:[#allocation4 + $0xb68] sm:$0xff]
    %v2151 = vld [vmem:[#allocation4 + $0xb70] sm:$0xff]
    %v2152 = vld [vmem:[#allocation4 + $0xb78] sm:$0xff]
    %v2153 = vld [vmem:[#allocation4 + $0xb80] sm:$0xff]
    %v2154 = vld [vmem:[#allocation4 + $0xb88] sm:$0xff]
    %v2155 = vld [vmem:[#allocation4 + $0xb90] sm:$0xff]
    %v2156 = vld [vmem:[#allocation4 + $0xb98] sm:$0xff]
    %v2157 = vld [vmem:[#allocation4 + $0xba0] sm:$0xff]
    %v2158 = vld [vmem:[#allocation4 + $0xba8] sm:$0xff]
    %v2159 = vld [vmem:[#allocation4 + $0xbb0] sm:$0xff]
    %v2160 = vld [vmem:[#allocation4 + $0xbb8] sm:$0xff]
    %v2161 = vld [vmem:[#allocation4 + $0xbc0] sm:$0xff]
    %v2162 = vld [vmem:[#allocation4 + $0xbc8] sm:$0xff]
    %v2163 = vld [vmem:[#allocation4 + $0xbd0] sm:$0xff]
    %v2164 = vld [vmem:[#allocation4 + $0xbd8] sm:$0xff]
    %v2165 = vld [vmem:[#allocation4 + $0xbe0] sm:$0xff]
    %v2166 = vld [vmem:[#allocation4 + $0xbe8] sm:$0xff]
    %v2167 = vld [vmem:[#allocation4 + $0xbf0] sm:$0xff]
    %v2168 = vld [vmem:[#allocation4 + $0xbf8] sm:$0xff]
    %v2169 = vld [vmem:[#allocation4 + $0xc00] sm:$0xff]
    %v2170 = vld [vmem:[#allocation4 + $0xc08] sm:$0xff]
    %v2171 = vld [vmem:[#allocation4 + $0xc10] sm:$0xff]
    %v2172 = vld [vmem:[#allocation4 + $0xc18] sm:$0xff]
    %v2173 = vld [vmem:[#allocation4 + $0xc20] sm:$0xff]
    %v2174 = vld [vmem:[#allocation4 + $0xc28] sm:$0xff]
    %v2175 = vld [vmem:[#allocation4 + $0xc30] sm:$0xff]
    %v2176 = vld [vmem:[#allocation4 + $0xc38] sm:$0xff]
    %v2177 = vld [vmem:[#allocation4 + $0xc40] sm:$0xff]
    %v2178 = vld [vmem:[#allocation4 + $0xc48] sm:$0xff]
    %v2179 = vld [vmem:[#allocation4 + $0xc50] sm:$0xff]
    %v2180 = vld [vmem:[#allocation4 + $0xc58] sm:$0xff]
    %v2181 = vld [vmem:[#allocation4 + $0xc60] sm:$0xff]
    %v2182 = vld [vmem:[#allocation4 + $0xc68] sm:$0xff]
    %v2183 = vld [vmem:[#allocation4 + $0xc70] sm:$0xff]
    %v2184 = vld [vmem:[#allocation4 + $0xc78] sm:$0xff]
    %v2185 = vld [vmem:[#allocation4 + $0xc80] sm:$0xff]
    %v2186 = vld [vmem:[#allocation4 + $0xc88] sm:$0xff]
    %v2187 = vld [vmem:[#allocation4 + $0xc90] sm:$0xff]
    %v2188 = vld [vmem:[#allocation4 + $0xc98] sm:$0xff]
    %v2189 = vld [vmem:[#allocation4 + $0xca0] sm:$0xff]
    %v2190 = vld [vmem:[#allocation4 + $0xca8] sm:$0xff]
    %v2191 = vld [vmem:[#allocation4 + $0xcb0] sm:$0xff]
    %v2192 = vld [vmem:[#allocation4 + $0xcb8] sm:$0xff]
    %v2193 = vld [vmem:[#allocation4 + $0xcc0] sm:$0xff]
    %v2194 = vld [vmem:[#allocation4 + $0xcc8] sm:$0xff]
    %v2195 = vld [vmem:[#allocation4 + $0xcd0] sm:$0xff]
    %v2196 = vld [vmem:[#allocation4 + $0xcd8] sm:$0xff]
    %v2197 = vld [vmem:[#allocation4 + $0xce0] sm:$0xff]
    %v2198 = vld [vmem:[#allocation4 + $0xce8] sm:$0xff]
    %v2199 = vld [vmem:[#allocation4 + $0xcf0] sm:$0xff]
    %v2200 = vld [vmem:[#allocation4 + $0xcf8] sm:$0xff]
    %v2201 = vld [vmem:[#allocation4 + $0xd00] sm:$0xff]
    %v2202 = vld [vmem:[#allocation4 + $0xd08] sm:$0xff]
    %v2203 = vld [vmem:[#allocation4 + $0xd10] sm:$0xff]
    %v2204 = vld [vmem:[#allocation4 + $0xd18] sm:$0xff]
    %v2205 = vld [vmem:[#allocation4 + $0xd20] sm:$0xff]
    %v2206 = vld [vmem:[#allocation4 + $0xd28] sm:$0xff]
    %v2207 = vld [vmem:[#allocation4 + $0xd30] sm:$0xff]
    %v2208 = vld [vmem:[#allocation4 + $0xd38] sm:$0xff]
    %v2209 = vld [vmem:[#allocation4 + $0xd40] sm:$0xff]
    %v2210 = vld [vmem:[#allocation4 + $0xd48] sm:$0xff]
    %v2211 = vld [vmem:[#allocation4 + $0xd50] sm:$0xff]
    %v2212 = vld [vmem:[#allocation4 + $0xd58] sm:$0xff]
    %v2213 = vld [vmem:[#allocation4 + $0xd60] sm:$0xff]
    %v2214 = vld [vmem:[#allocation4 + $0xd68] sm:$0xff]
    %v2215 = vld [vmem:[#allocation4 + $0xd70] sm:$0xff]
    %v2216 = vld [vmem:[#allocation4 + $0xd78] sm:$0xff]
    %v2217 = vld [vmem:[#allocation4 + $0xd80] sm:$0xff]
    %v2218 = vld [vmem:[#allocation4 + $0xd88] sm:$0xff]
    %v2219 = vld [vmem:[#allocation4 + $0xd90] sm:$0xff]
    %v2220 = vld [vmem:[#allocation4 + $0xd98] sm:$0xff]
    %v2221 = vld [vmem:[#allocation4 + $0xda0] sm:$0xff]
    %v2222 = vld [vmem:[#allocation4 + $0xda8] sm:$0xff]
    %v2223 = vld [vmem:[#allocation4 + $0xdb0] sm:$0xff]
    %v2224 = vld [vmem:[#allocation4 + $0xdb8] sm:$0xff]
    %v2225 = vld [vmem:[#allocation4 + $0xdc0] sm:$0xff]
    %v2226 = vld [vmem:[#allocation4 + $0xdc8] sm:$0xff]
    %v2227 = vld [vmem:[#allocation4 + $0xdd0] sm:$0xff]
    %v2228 = vld [vmem:[#allocation4 + $0xdd8] sm:$0xff]
    %v2229 = vld [vmem:[#allocation4 + $0xde0] sm:$0xff]
    %v2230 = vld [vmem:[#allocation4 + $0xde8] sm:$0xff]
    %v2231 = vld [vmem:[#allocation4 + $0xdf0] sm:$0xff]
    %v2232 = vld [vmem:[#allocation4 + $0xdf8] sm:$0xff]
    %v2233 = vld [vmem:[#allocation4 + $0xe00] sm:$0xff]
    %v2234 = vld [vmem:[#allocation4 + $0xe08] sm:$0xff]
    %v2235 = vld [vmem:[#allocation4 + $0xe10] sm:$0xff]
    %v2236 = vld [vmem:[#allocation4 + $0xe18] sm:$0xff]
    %v2237 = vld [vmem:[#allocation4 + $0xe20] sm:$0xff]
    %v2238 = vld [vmem:[#allocation4 + $0xe28] sm:$0xff]
    %v2239 = vld [vmem:[#allocation4 + $0xe30] sm:$0xff]
    %v2240 = vld [vmem:[#allocation4 + $0xe38] sm:$0xff]
    %v2241 = vld [vmem:[#allocation4 + $0xe40] sm:$0xff]
    %v2242 = vld [vmem:[#allocation4 + $0xe48] sm:$0xff]
    %v2243 = vld [vmem:[#allocation4 + $0xe50] sm:$0xff]
    %v2244 = vld [vmem:[#allocation4 + $0xe58] sm:$0xff]
    %v2245 = vld [vmem:[#allocation4 + $0xe60] sm:$0xff]
    %v2246 = vld [vmem:[#allocation4 + $0xe68] sm:$0xff]
    %v2247 = vld [vmem:[#allocation4 + $0xe70] sm:$0xff]
    %v2248 = vld [vmem:[#allocation4 + $0xe78] sm:$0xff]
    %v2249 = vld [vmem:[#allocation4 + $0xe80] sm:$0xff]
    %v2250 = vld [vmem:[#allocation4 + $0xe88] sm:$0xff]
    %v2251 = vld [vmem:[#allocation4 + $0xe90] sm:$0xff]
    %v2252 = vld [vmem:[#allocation4 + $0xe98] sm:$0xff]
    %v2253 = vld [vmem:[#allocation4 + $0xea0] sm:$0xff]
    %v2254 = vld [vmem:[#allocation4 + $0xea8] sm:$0xff]
    %v2255 = vld [vmem:[#allocation4 + $0xeb0] sm:$0xff]
    %v2256 = vld [vmem:[#allocation4 + $0xeb8] sm:$0xff]
    %v2257 = vld [vmem:[#allocation4 + $0xec0] sm:$0xff]
    %v2258 = vld [vmem:[#allocation4 + $0xec8] sm:$0xff]
    %v2259 = vld [vmem:[#allocation4 + $0xed0] sm:$0xff]
    %v2260 = vld [vmem:[#allocation4 + $0xed8] sm:$0xff]
    %v2261 = vld [vmem:[#allocation4 + $0xee0] sm:$0xff]
    %v2262 = vld [vmem:[#allocation4 + $0xee8] sm:$0xff]
    %v2263 = vld [vmem:[#allocation4 + $0xef0] sm:$0xff]
    %v2264 = vld [vmem:[#allocation4 + $0xef8] sm:$0xff]
    %v2265 = vld [vmem:[#allocation4 + $0xf00] sm:$0xff]
    %v2266 = vld [vmem:[#allocation4 + $0xf08] sm:$0xff]
    %v2267 = vld [vmem:[#allocation4 + $0xf10] sm:$0xff]
    %v2268 = vld [vmem:[#allocation4 + $0xf18] sm:$0xff]
    %v2269 = vld [vmem:[#allocation4 + $0xf20] sm:$0xff]
    %v2270 = vld [vmem:[#allocation4 + $0xf28] sm:$0xff]
    %v2271 = vld [vmem:[#allocation4 + $0xf30] sm:$0xff]
    %v2272 = vld [vmem:[#allocation4 + $0xf38] sm:$0xff]
    %v2273 = vld [vmem:[#allocation4 + $0xf40] sm:$0xff]
    %v2274 = vld [vmem:[#allocation4 + $0xf48] sm:$0xff]
    %v2275 = vld [vmem:[#allocation4 + $0xf50] sm:$0xff]
    %v2276 = vld [vmem:[#allocation4 + $0xf58] sm:$0xff]
    %v2277 = vld [vmem:[#allocation4 + $0xf60] sm:$0xff]
    %v2278 = vld [vmem:[#allocation4 + $0xf68] sm:$0xff]
    %v2279 = vld [vmem:[#allocation4 + $0xf70] sm:$0xff]
    %v2280 = vld [vmem:[#allocation4 + $0xf78] sm:$0xff]
    %v2281 = vld [vmem:[#allocation4 + $0xf80] sm:$0xff]
    %v2282 = vld [vmem:[#allocation4 + $0xf88] sm:$0xff]
    %v2283 = vld [vmem:[#allocation4 + $0xf90] sm:$0xff]
    %v2284 = vld [vmem:[#allocation4 + $0xf98] sm:$0xff]
    %v2285 = vld [vmem:[#allocation4 + $0xfa0] sm:$0xff]
    %v2286 = vld [vmem:[#allocation4 + $0xfa8] sm:$0xff]
    %v2287 = vld [vmem:[#allocation4 + $0xfb0] sm:$0xff]
    %v2288 = vld [vmem:[#allocation4 + $0xfb8] sm:$0xff]
    %v2289 = vld [vmem:[#allocation4 + $0xfc0] sm:$0xff]
    %v2290 = vld [vmem:[#allocation4 + $0xfc8] sm:$0xff]
    %v2291 = vld [vmem:[#allocation4 + $0xfd0] sm:$0xff]
    %v2292 = vld [vmem:[#allocation4 + $0xfd8] sm:$0xff]
    %v2293 = vld [vmem:[#allocation4 + $0xfe0] sm:$0xff]
    %v2294 = vld [vmem:[#allocation4 + $0xfe8] sm:$0xff]
    %v2295 = vld [vmem:[#allocation4 + $0xff0] sm:$0xff]
    %v2296 = vld [vmem:[#allocation4 + $0xff8] sm:$0xff]
    %v2297 = vld [vmem:[#allocation4 + $0x1000] sm:$0xff]
    %v2298 = vld [vmem:[#allocation4 + $0x1008] sm:$0xff]
    %v2299 = vld [vmem:[#allocation4 + $0x1010] sm:$0xff]
    %v2300 = vld [vmem:[#allocation4 + $0x1018] sm:$0xff]
    %v2301 = vld [vmem:[#allocation4 + $0x1020] sm:$0xff]
    %v2302 = vld [vmem:[#allocation4 + $0x1028] sm:$0xff]
    %v2303 = vld [vmem:[#allocation4 + $0x1030] sm:$0xff]
    %v2304 = vld [vmem:[#allocation4 + $0x1038] sm:$0xff]
    %v2305 = vld [vmem:[#allocation4 + $0x1040] sm:$0xff]
    %v2306 = vld [vmem:[#allocation4 + $0x1048] sm:$0xff]
    %v2307 = vld [vmem:[#allocation4 + $0x1050] sm:$0xff]
    %v2308 = vld [vmem:[#allocation4 + $0x1058] sm:$0xff]
    %v2309 = vld [vmem:[#allocation4 + $0x1060] sm:$0xff]
    %v2310 = vld [vmem:[#allocation4 + $0x1068] sm:$0xff]
    %v2311 = vld [vmem:[#allocation4 + $0x1070] sm:$0xff]
    %v2312 = vld [vmem:[#allocation4 + $0x1078] sm:$0xff]
    %v2313 = vld [vmem:[#allocation4 + $0x1080] sm:$0xff]
    %v2314 = vld [vmem:[#allocation4 + $0x1088] sm:$0xff]
    %v2315 = vld [vmem:[#allocation4 + $0x1090] sm:$0xff]
    %v2316 = vld [vmem:[#allocation4 + $0x1098] sm:$0xff]
    %v2317 = vld [vmem:[#allocation4 + $0x10a0] sm:$0xff]
    %v2318 = vld [vmem:[#allocation4 + $0x10a8] sm:$0xff]
    %v2319 = vld [vmem:[#allocation4 + $0x10b0] sm:$0xff]
    %v2320 = vld [vmem:[#allocation4 + $0x10b8] sm:$0xff]
    %v2321 = vld [vmem:[#allocation4 + $0x10c0] sm:$0xff]
    %v2322 = vld [vmem:[#allocation4 + $0x10c8] sm:$0xff]
    %v2323 = vld [vmem:[#allocation4 + $0x10d0] sm:$0xff]
    %v2324 = vld [vmem:[#allocation4 + $0x10d8] sm:$0xff]
    %v2325 = vld [vmem:[#allocation4 + $0x10e0] sm:$0xff]
    %v2326 = vld [vmem:[#allocation4 + $0x10e8] sm:$0xff]
    %v2327 = vld [vmem:[#allocation4 + $0x10f0] sm:$0xff]
    %v2328 = vld [vmem:[#allocation4 + $0x10f8] sm:$0xff]
    %v2329 = vld [vmem:[#allocation4 + $0x1100] sm:$0xff]
    %v2330 = vld [vmem:[#allocation4 + $0x1108] sm:$0xff]
    %v2331 = vld [vmem:[#allocation4 + $0x1110] sm:$0xff]
    %v2332 = vld [vmem:[#allocation4 + $0x1118] sm:$0xff]
    %v2333 = vld [vmem:[#allocation4 + $0x1120] sm:$0xff]
    %v2334 = vld [vmem:[#allocation4 + $0x1128] sm:$0xff]
    %v2335 = vld [vmem:[#allocation4 + $0x1130] sm:$0xff]
    %v2336 = vld [vmem:[#allocation4 + $0x1138] sm:$0xff]
    %v2337 = vld [vmem:[#allocation4 + $0x1140] sm:$0xff]
    %v2338 = vld [vmem:[#allocation4 + $0x1148] sm:$0xff]
    %v2339 = vld [vmem:[#allocation4 + $0x1150] sm:$0xff]
    %v2340 = vld [vmem:[#allocation4 + $0x1158] sm:$0xff]
    %v2341 = vld [vmem:[#allocation4 + $0x1160] sm:$0xff]
    %v2342 = vld [vmem:[#allocation4 + $0x1168] sm:$0xff]
    %v2343 = vld [vmem:[#allocation4 + $0x1170] sm:$0xff]
    %v2344 = vld [vmem:[#allocation4 + $0x1178] sm:$0xff]
    %v2345 = vld [vmem:[#allocation4 + $0x1180] sm:$0xff]
    %v2346 = vld [vmem:[#allocation4 + $0x1188] sm:$0xff]
    %v2347 = vld [vmem:[#allocation4 + $0x1190] sm:$0xff]
    %v2348 = vld [vmem:[#allocation4 + $0x1198] sm:$0xff]
    %v2349 = vld [vmem:[#allocation4 + $0x11a0] sm:$0xff]
    %v2350 = vld [vmem:[#allocation4 + $0x11a8] sm:$0xff]
    %v2351 = vld [vmem:[#allocation4 + $0x11b0] sm:$0xff]
    %v2352 = vld [vmem:[#allocation4 + $0x11b8] sm:$0xff]
    %v2353 = vld [vmem:[#allocation4 + $0x11c0] sm:$0xff]
    %v2354 = vld [vmem:[#allocation4 + $0x11c8] sm:$0xff]
    %v2355 = vld [vmem:[#allocation4 + $0x11d0] sm:$0xff]
    %v2356 = vld [vmem:[#allocation4 + $0x11d8] sm:$0xff]
    %v2357 = vld [vmem:[#allocation4 + $0x11e0] sm:$0xff]
    %v2358 = vld [vmem:[#allocation4 + $0x11e8] sm:$0xff]
    %v2359 = vld [vmem:[#allocation4 + $0x11f0] sm:$0xff]
    %v2360 = vld [vmem:[#allocation4 + $0x11f8] sm:$0xff]
    %v2361 = vld [vmem:[#allocation4 + $0x1200] sm:$0xff]
    %v2362 = vld [vmem:[#allocation4 + $0x1208] sm:$0xff]
    %v2363 = vld [vmem:[#allocation4 + $0x1210] sm:$0xff]
    %v2364 = vld [vmem:[#allocation4 + $0x1218] sm:$0xff]
    %v2365 = vld [vmem:[#allocation4 + $0x1220] sm:$0xff]
    %v2366 = vld [vmem:[#allocation4 + $0x1228] sm:$0xff]
    %v2367 = vld [vmem:[#allocation4 + $0x1230] sm:$0xff]
    %v2368 = vld [vmem:[#allocation4 + $0x1238] sm:$0xff]
    %v2369 = vld [vmem:[#allocation4 + $0x1240] sm:$0xff]
    %v2370 = vld [vmem:[#allocation4 + $0x1248] sm:$0xff]
    %v2371 = vld [vmem:[#allocation4 + $0x1250] sm:$0xff]
    %v2372 = vld [vmem:[#allocation4 + $0x1258] sm:$0xff]
    %v2373 = vld [vmem:[#allocation4 + $0x1260] sm:$0xff]
    %v2374 = vld [vmem:[#allocation4 + $0x1268] sm:$0xff]
    %v2375 = vld [vmem:[#allocation4 + $0x1270] sm:$0xff]
    %v2376 = vld [vmem:[#allocation4 + $0x1278] sm:$0xff]
    %v2377 = vld [vmem:[#allocation4 + $0x1280] sm:$0xff]
    %v2378 = vld [vmem:[#allocation4 + $0x1288] sm:$0xff]
    %v2379 = vld [vmem:[#allocation4 + $0x1290] sm:$0xff]
    %v2380 = vld [vmem:[#allocation4 + $0x1298] sm:$0xff]
    %v2381 = vld [vmem:[#allocation4 + $0x12a0] sm:$0xff]
    %v2382 = vld [vmem:[#allocation4 + $0x12a8] sm:$0xff]
    %v2383 = vld [vmem:[#allocation4 + $0x12b0] sm:$0xff]
    %v2384 = vld [vmem:[#allocation4 + $0x12b8] sm:$0xff]
    %v2385 = vld [vmem:[#allocation4 + $0x12c0] sm:$0xff]
    %v2386 = vld [vmem:[#allocation4 + $0x12c8] sm:$0xff]
    %v2387 = vld [vmem:[#allocation4 + $0x12d0] sm:$0xff]
    %v2388 = vld [vmem:[#allocation4 + $0x12d8] sm:$0xff]
    %v2389 = vld [vmem:[#allocation4 + $0x12e0] sm:$0xff]
    %v2390 = vld [vmem:[#allocation4 + $0x12e8] sm:$0xff]
    %v2391 = vld [vmem:[#allocation4 + $0x12f0] sm:$0xff]
    %v2392 = vld [vmem:[#allocation4 + $0x12f8] sm:$0xff]
    %v2393 = vld [vmem:[#allocation4 + $0x1300] sm:$0xff]
    %v2394 = vld [vmem:[#allocation4 + $0x1308] sm:$0xff]
    %v2395 = vld [vmem:[#allocation4 + $0x1310] sm:$0xff]
    %v2396 = vld [vmem:[#allocation4 + $0x1318] sm:$0xff]
    %v2397 = vld [vmem:[#allocation4 + $0x1320] sm:$0xff]
    %v2398 = vld [vmem:[#allocation4 + $0x1328] sm:$0xff]
    %v2399 = vld [vmem:[#allocation4 + $0x1330] sm:$0xff]
    %v2400 = vld [vmem:[#allocation4 + $0x1338] sm:$0xff]
    %v2401 = vld [vmem:[#allocation4 + $0x1340] sm:$0xff]
    %v2402 = vld [vmem:[#allocation4 + $0x1348] sm:$0xff]
    %v2403 = vld [vmem:[#allocation4 + $0x1350] sm:$0xff]
    %v2404 = vld [vmem:[#allocation4 + $0x1358] sm:$0xff]
    %v2405 = vld [vmem:[#allocation4 + $0x1360] sm:$0xff]
    %v2406 = vld [vmem:[#allocation4 + $0x1368] sm:$0xff]
    %v2407 = vld [vmem:[#allocation4 + $0x1370] sm:$0xff]
    %v2408 = vld [vmem:[#allocation4 + $0x1378] sm:$0xff]
    %v2409 = vld [vmem:[#allocation4 + $0x1380] sm:$0xff]
    %v2410 = vld [vmem:[#allocation4 + $0x1388] sm:$0xff]
    %v2411 = vld [vmem:[#allocation4 + $0x1390] sm:$0xff]
    %v2412 = vld [vmem:[#allocation4 + $0x1398] sm:$0xff]
    %v2413 = vld [vmem:[#allocation4 + $0x13a0] sm:$0xff]
    %v2414 = vld [vmem:[#allocation4 + $0x13a8] sm:$0xff]
    %v2415 = vld [vmem:[#allocation4 + $0x13b0] sm:$0xff]
    %v2416 = vld [vmem:[#allocation4 + $0x13b8] sm:$0xff]
    %v2417 = vld [vmem:[#allocation4 + $0x13c0] sm:$0xff]
    %v2418 = vld [vmem:[#allocation4 + $0x13c8] sm:$0xff]
    %v2419 = vld [vmem:[#allocation4 + $0x13d0] sm:$0xff]
    %v2420 = vld [vmem:[#allocation4 + $0x13d8] sm:$0xff]
    %v2421 = vld [vmem:[#allocation4 + $0x13e0] sm:$0xff]
    %v2422 = vld [vmem:[#allocation4 + $0x13e8] sm:$0xff]
    %v2423 = vld [vmem:[#allocation4 + $0x13f0] sm:$0xff]
    %v2424 = vld [vmem:[#allocation4 + $0x13f8] sm:$0xff]
    %v2425 = vld [vmem:[#allocation4 + $0x1400] sm:$0xff]
    %v2426 = vld [vmem:[#allocation4 + $0x1408] sm:$0xff]
    %v2427 = vld [vmem:[#allocation4 + $0x1410] sm:$0xff]
    %v2428 = vld [vmem:[#allocation4 + $0x1418] sm:$0xff]
    %v2429 = vld [vmem:[#allocation4 + $0x1420] sm:$0xff]
    %v2430 = vld [vmem:[#allocation4 + $0x1428] sm:$0xff]
    %v2431 = vld [vmem:[#allocation4 + $0x1430] sm:$0xff]
    %v2432 = vld [vmem:[#allocation4 + $0x1438] sm:$0xff]
    %v2433 = vld [vmem:[#allocation4 + $0x1440] sm:$0xff]
    %v2434 = vld [vmem:[#allocation4 + $0x1448] sm:$0xff]
    %v2435 = vld [vmem:[#allocation4 + $0x1450] sm:$0xff]
    %v2436 = vld [vmem:[#allocation4 + $0x1458] sm:$0xff]
    %v2437 = vld [vmem:[#allocation4 + $0x1460] sm:$0xff]
    %v2438 = vld [vmem:[#allocation4 + $0x1468] sm:$0xff]
    %v2439 = vld [vmem:[#allocation4 + $0x1470] sm:$0xff]
    %v2440 = vld [vmem:[#allocation4 + $0x1478] sm:$0xff]
    %v2441 = vld [vmem:[#allocation4 + $0x1480] sm:$0xff]
    %v2442 = vld [vmem:[#allocation4 + $0x1488] sm:$0xff]
    %v2443 = vld [vmem:[#allocation4 + $0x1490] sm:$0xff]
    %v2444 = vld [vmem:[#allocation4 + $0x1498] sm:$0xff]
    %v2445 = vld [vmem:[#allocation4 + $0x14a0] sm:$0xff]
    %v2446 = vld [vmem:[#allocation4 + $0x14a8] sm:$0xff]
    %v2447 = vld [vmem:[#allocation4 + $0x14b0] sm:$0xff]
    %v2448 = vld [vmem:[#allocation4 + $0x14b8] sm:$0xff]
    %v2449 = vld [vmem:[#allocation4 + $0x14c0] sm:$0xff]
    %v2450 = vld [vmem:[#allocation4 + $0x14c8] sm:$0xff]
    %v2451 = vld [vmem:[#allocation4 + $0x14d0] sm:$0xff]
    %v2452 = vld [vmem:[#allocation4 + $0x14d8] sm:$0xff]
    %v2453 = vld [vmem:[#allocation4 + $0x14e0] sm:$0xff]
    %v2454 = vld [vmem:[#allocation4 + $0x14e8] sm:$0xff]
    %v2455 = vld [vmem:[#allocation4 + $0x14f0] sm:$0xff]
    %v2456 = vld [vmem:[#allocation4 + $0x14f8] sm:$0xff]
    %v2457 = vld [vmem:[#allocation4 + $0x1500] sm:$0xff]
    %v2458 = vld [vmem:[#allocation4 + $0x1508] sm:$0xff]
    %v2459 = vld [vmem:[#allocation4 + $0x1510] sm:$0xff]
    %v2460 = vld [vmem:[#allocation4 + $0x1518] sm:$0xff]
    %v2461 = vld [vmem:[#allocation4 + $0x1520] sm:$0xff]
    %v2462 = vld [vmem:[#allocation4 + $0x1528] sm:$0xff]
    %v2463 = vld [vmem:[#allocation4 + $0x1530] sm:$0xff]
    %v2464 = vld [vmem:[#allocation4 + $0x1538] sm:$0xff]
    %v2465 = vld [vmem:[#allocation4 + $0x1540] sm:$0xff]
    %v2466 = vld [vmem:[#allocation4 + $0x1548] sm:$0xff]
    %v2467 = vld [vmem:[#allocation4 + $0x1550] sm:$0xff]
    %v2468 = vld [vmem:[#allocation4 + $0x1558] sm:$0xff]
    %v2469 = vld [vmem:[#allocation4 + $0x1560] sm:$0xff]
    %v2470 = vld [vmem:[#allocation4 + $0x1568] sm:$0xff]
    %v2471 = vld [vmem:[#allocation4 + $0x1570] sm:$0xff]
    %v2472 = vld [vmem:[#allocation4 + $0x1578] sm:$0xff]
    %v2473 = vld [vmem:[#allocation4 + $0x1580] sm:$0xff]
    %v2474 = vld [vmem:[#allocation4 + $0x1588] sm:$0xff]
    %v2475 = vld [vmem:[#allocation4 + $0x1590] sm:$0xff]
    %v2476 = vld [vmem:[#allocation4 + $0x1598] sm:$0xff]
    %v2477 = vld [vmem:[#allocation4 + $0x15a0] sm:$0xff]
    %v2478 = vld [vmem:[#allocation4 + $0x15a8] sm:$0xff]
    %v2479 = vld [vmem:[#allocation4 + $0x15b0] sm:$0xff]
    %v2480 = vld [vmem:[#allocation4 + $0x15b8] sm:$0xff]
    %v2481 = vld [vmem:[#allocation4 + $0x15c0] sm:$0xff]
    %v2482 = vld [vmem:[#allocation4 + $0x15c8] sm:$0xff]
    %v2483 = vld [vmem:[#allocation4 + $0x15d0] sm:$0xff]
    %v2484 = vld [vmem:[#allocation4 + $0x15d8] sm:$0xff]
    %v2485 = vld [vmem:[#allocation4 + $0x15e0] sm:$0xff]
    %v2486 = vld [vmem:[#allocation4 + $0x15e8] sm:$0xff]
    %v2487 = vld [vmem:[#allocation4 + $0x15f0] sm:$0xff]
    %v2488 = vld [vmem:[#allocation4 + $0x15f8] sm:$0xff]
    %v2489 = vld [vmem:[#allocation4 + $0x1600] sm:$0xff]
    %v2490 = vld [vmem:[#allocation4 + $0x1608] sm:$0xff]
    %v2491 = vld [vmem:[#allocation4 + $0x1610] sm:$0xff]
    %v2492 = vld [vmem:[#allocation4 + $0x1618] sm:$0xff]
    %v2493 = vld [vmem:[#allocation4 + $0x1620] sm:$0xff]
    %v2494 = vld [vmem:[#allocation4 + $0x1628] sm:$0xff]
    %v2495 = vld [vmem:[#allocation4 + $0x1630] sm:$0xff]
    %v2496 = vld [vmem:[#allocation4 + $0x1638] sm:$0xff]
    %v2497 = vld [vmem:[#allocation4 + $0x1640] sm:$0xff]
    %v2498 = vld [vmem:[#allocation4 + $0x1648] sm:$0xff]
    %v2499 = vld [vmem:[#allocation4 + $0x1650] sm:$0xff]
    %v2500 = vld [vmem:[#allocation4 + $0x1658] sm:$0xff]
    %v2501 = vld [vmem:[#allocation4 + $0x1660] sm:$0xff]
    %v2502 = vld [vmem:[#allocation4 + $0x1668] sm:$0xff]
    %v2503 = vld [vmem:[#allocation4 + $0x1670] sm:$0xff]
    %v2504 = vld [vmem:[#allocation4 + $0x1678] sm:$0xff]
    %v2505 = vld [vmem:[#allocation4 + $0x1680] sm:$0xff]
    %v2506 = vld [vmem:[#allocation4 + $0x1688] sm:$0xff]
    %v2507 = vld [vmem:[#allocation4 + $0x1690] sm:$0xff]
    %v2508 = vld [vmem:[#allocation4 + $0x1698] sm:$0xff]
    %v2509 = vld [vmem:[#allocation4 + $0x16a0] sm:$0xff]
    %v2510 = vld [vmem:[#allocation4 + $0x16a8] sm:$0xff]
    %v2511 = vld [vmem:[#allocation4 + $0x16b0] sm:$0xff]
    %v2512 = vld [vmem:[#allocation4 + $0x16b8] sm:$0xff]
    %v2513 = vld [vmem:[#allocation4 + $0x16c0] sm:$0xff]
    %v2514 = vld [vmem:[#allocation4 + $0x16c8] sm:$0xff]
    %v2515 = vld [vmem:[#allocation4 + $0x16d0] sm:$0xff]
    %v2516 = vld [vmem:[#allocation4 + $0x16d8] sm:$0xff]
    %v2517 = vld [vmem:[#allocation4 + $0x16e0] sm:$0xff]
    %v2518 = vld [vmem:[#allocation4 + $0x16e8] sm:$0xff]
    %v2519 = vld [vmem:[#allocation4 + $0x16f0] sm:$0xff]
    %v2520 = vld [vmem:[#allocation4 + $0x16f8] sm:$0xff]
    %v2521 = vld [vmem:[#allocation4 + $0x1700] sm:$0xff]
    %v2522 = vld [vmem:[#allocation4 + $0x1708] sm:$0xff]
    %v2523 = vld [vmem:[#allocation4 + $0x1710] sm:$0xff]
    %v2524 = vld [vmem:[#allocation4 + $0x1718] sm:$0xff]
    %v2525 = vld [vmem:[#allocation4 + $0x1720] sm:$0xff]
    %v2526 = vld [vmem:[#allocation4 + $0x1728] sm:$0xff]
    %v2527 = vld [vmem:[#allocation4 + $0x1730] sm:$0xff]
    %v2528 = vld [vmem:[#allocation4 + $0x1738] sm:$0xff]
    %v2529 = vld [vmem:[#allocation4 + $0x1740] sm:$0xff]
    %v2530 = vld [vmem:[#allocation4 + $0x1748] sm:$0xff]
    %v2531 = vld [vmem:[#allocation4 + $0x1750] sm:$0xff]
    %v2532 = vld [vmem:[#allocation4 + $0x1758] sm:$0xff]
    %v2533 = vld [vmem:[#allocation4 + $0x1760] sm:$0xff]
    %v2534 = vld [vmem:[#allocation4 + $0x1768] sm:$0xff]
    %v2535 = vld [vmem:[#allocation4 + $0x1770] sm:$0xff]
    %v2536 = vld [vmem:[#allocation4 + $0x1778] sm:$0xff]
    %v2537 = vld [vmem:[#allocation4 + $0x1780] sm:$0xff]
    %v2538 = vld [vmem:[#allocation4 + $0x1788] sm:$0xff]
    %v2539 = vld [vmem:[#allocation4 + $0x1790] sm:$0xff]
    %v2540 = vld [vmem:[#allocation4 + $0x1798] sm:$0xff]
    %v2541 = vld [vmem:[#allocation4 + $0x17a0] sm:$0xff]
    %v2542 = vld [vmem:[#allocation4 + $0x17a8] sm:$0xff]
    %v2543 = vld [vmem:[#allocation4 + $0x17b0] sm:$0xff]
    %v2544 = vld [vmem:[#allocation4 + $0x17b8] sm:$0xff]
    %v2545 = vld [vmem:[#allocation4 + $0x17c0] sm:$0xff]
    %v2546 = vld [vmem:[#allocation4 + $0x17c8] sm:$0xff]
    %v2547 = vld [vmem:[#allocation4 + $0x17d0] sm:$0xff]
    %v2548 = vld [vmem:[#allocation4 + $0x17d8] sm:$0xff]
    %v2549 = vld [vmem:[#allocation4 + $0x17e0] sm:$0xff]
    %v2550 = vld [vmem:[#allocation4 + $0x17e8] sm:$0xff]
    %v2551 = vld [vmem:[#allocation4 + $0x17f0] sm:$0xff]
    %v2552 = vld [vmem:[#allocation4 + $0x17f8] sm:$0xff]
    %v2553 = vld [vmem:[#allocation4 + $0x1800] sm:$0xff]
    %v2554 = vld [vmem:[#allocation4 + $0x1808] sm:$0xff]
    %v2555 = vld [vmem:[#allocation4 + $0x1810] sm:$0xff]
    %v2556 = vld [vmem:[#allocation4 + $0x1818] sm:$0xff]
    %v2557 = vld [vmem:[#allocation4 + $0x1820] sm:$0xff]
    %v2558 = vld [vmem:[#allocation4 + $0x1828] sm:$0xff]
    %v2559 = vld [vmem:[#allocation4 + $0x1830] sm:$0xff]
    %v2560 = vld [vmem:[#allocation4 + $0x1838] sm:$0xff]
    %v2561 = vld [vmem:[#allocation4 + $0x1840] sm:$0xff]
    %v2562 = vld [vmem:[#allocation4 + $0x1848] sm:$0xff]
    %v2563 = vld [vmem:[#allocation4 + $0x1850] sm:$0xff]
    %v2564 = vld [vmem:[#allocation4 + $0x1858] sm:$0xff]
    %v2565 = vld [vmem:[#allocation4 + $0x1860] sm:$0xff]
    %v2566 = vld [vmem:[#allocation4 + $0x1868] sm:$0xff]
    %v2567 = vld [vmem:[#allocation4 + $0x1870] sm:$0xff]
    %v2568 = vld [vmem:[#allocation4 + $0x1878] sm:$0xff]
    %v2569 = vld [vmem:[#allocation4 + $0x1880] sm:$0xff]
    %v2570 = vld [vmem:[#allocation4 + $0x1888] sm:$0xff]
    %v2571 = vld [vmem:[#allocation4 + $0x1890] sm:$0xff]
    %v2572 = vld [vmem:[#allocation4 + $0x1898] sm:$0xff]
    %v2573 = vld [vmem:[#allocation4 + $0x18a0] sm:$0xff]
    %v2574 = vld [vmem:[#allocation4 + $0x18a8] sm:$0xff]
    %v2575 = vld [vmem:[#allocation4 + $0x18b0] sm:$0xff]
    %v2576 = vld [vmem:[#allocation4 + $0x18b8] sm:$0xff]
    %v2577 = vld [vmem:[#allocation4 + $0x18c0] sm:$0xff]
    %v2578 = vld [vmem:[#allocation4 + $0x18c8] sm:$0xff]
    %v2579 = vld [vmem:[#allocation4 + $0x18d0] sm:$0xff]
    %v2580 = vld [vmem:[#allocation4 + $0x18d8] sm:$0xff]
    %v2581 = vld [vmem:[#allocation4 + $0x18e0] sm:$0xff]
    %v2582 = vld [vmem:[#allocation4 + $0x18e8] sm:$0xff]
    %v2583 = vld [vmem:[#allocation4 + $0x18f0] sm:$0xff]
    %v2584 = vld [vmem:[#allocation4 + $0x18f8] sm:$0xff]
    %v2585 = vld [vmem:[#allocation4 + $0x1900] sm:$0xff]
    %v2586 = vld [vmem:[#allocation4 + $0x1908] sm:$0xff]
    %v2587 = vld [vmem:[#allocation4 + $0x1910] sm:$0xff]
    %v2588 = vld [vmem:[#allocation4 + $0x1918] sm:$0xff]
    %v2589 = vld [vmem:[#allocation4 + $0x1920] sm:$0xff]
    %v2590 = vld [vmem:[#allocation4 + $0x1928] sm:$0xff]
    %v2591 = vld [vmem:[#allocation4 + $0x1930] sm:$0xff]
    %v2592 = vld [vmem:[#allocation4 + $0x1938] sm:$0xff]
    %v2593 = vld [vmem:[#allocation4 + $0x1940] sm:$0xff]
    %v2594 = vld [vmem:[#allocation4 + $0x1948] sm:$0xff]
    %v2595 = vld [vmem:[#allocation4 + $0x1950] sm:$0xff]
    %v2596 = vld [vmem:[#allocation4 + $0x1958] sm:$0xff]
    %v2597 = vld [vmem:[#allocation4 + $0x1960] sm:$0xff]
    %v2598 = vld [vmem:[#allocation4 + $0x1968] sm:$0xff]
    %v2599 = vld [vmem:[#allocation4 + $0x1970] sm:$0xff]
    %v2600 = vld [vmem:[#allocation4 + $0x1978] sm:$0xff]
    %v2601 = vld [vmem:[#allocation4 + $0x1980] sm:$0xff]
    %v2602 = vld [vmem:[#allocation4 + $0x1988] sm:$0xff]
    %v2603 = vld [vmem:[#allocation4 + $0x1990] sm:$0xff]
    %v2604 = vld [vmem:[#allocation4 + $0x1998] sm:$0xff]
    %v2605 = vld [vmem:[#allocation4 + $0x19a0] sm:$0xff]
    %v2606 = vld [vmem:[#allocation4 + $0x19a8] sm:$0xff]
    %v2607 = vld [vmem:[#allocation4 + $0x19b0] sm:$0xff]
    %v2608 = vld [vmem:[#allocation4 + $0x19b8] sm:$0xff]
    %v2609 = vld [vmem:[#allocation4 + $0x19c0] sm:$0xff]
    %v2610 = vld [vmem:[#allocation4 + $0x19c8] sm:$0xff]
    %v2611 = vld [vmem:[#allocation4 + $0x19d0] sm:$0xff]
    %v2612 = vld [vmem:[#allocation4 + $0x19d8] sm:$0xff]
    %v2613 = vld [vmem:[#allocation4 + $0x19e0] sm:$0xff]
    %v2614 = vld [vmem:[#allocation4 + $0x19e8] sm:$0xff]
    %v2615 = vld [vmem:[#allocation4 + $0x19f0] sm:$0xff]
    %v2616 = vld [vmem:[#allocation4 + $0x19f8] sm:$0xff]
    %v2617 = vld [vmem:[#allocation4 + $0x1a00] sm:$0xff]
    %v2618 = vld [vmem:[#allocation4 + $0x1a08] sm:$0xff]
    %v2619 = vld [vmem:[#allocation4 + $0x1a10] sm:$0xff]
    %v2620 = vld [vmem:[#allocation4 + $0x1a18] sm:$0xff]
    %v2621 = vld [vmem:[#allocation4 + $0x1a20] sm:$0xff]
    %v2622 = vld [vmem:[#allocation4 + $0x1a28] sm:$0xff]
    %v2623 = vld [vmem:[#allocation4 + $0x1a30] sm:$0xff]
    %v2624 = vld [vmem:[#allocation4 + $0x1a38] sm:$0xff]
    %v2625 = vld [vmem:[#allocation4 + $0x1a40] sm:$0xff]
    %v2626 = vld [vmem:[#allocation4 + $0x1a48] sm:$0xff]
    %v2627 = vld [vmem:[#allocation4 + $0x1a50] sm:$0xff]
    %v2628 = vld [vmem:[#allocation4 + $0x1a58] sm:$0xff]
    %v2629 = vld [vmem:[#allocation4 + $0x1a60] sm:$0xff]
    %v2630 = vld [vmem:[#allocation4 + $0x1a68] sm:$0xff]
    %v2631 = vld [vmem:[#allocation4 + $0x1a70] sm:$0xff]
    %v2632 = vld [vmem:[#allocation4 + $0x1a78] sm:$0xff]
    %v2633 = vld [vmem:[#allocation4 + $0x1a80] sm:$0xff]
    %v2634 = vld [vmem:[#allocation4 + $0x1a88] sm:$0xff]
    %v2635 = vld [vmem:[#allocation4 + $0x1a90] sm:$0xff]
    %v2636 = vld [vmem:[#allocation4 + $0x1a98] sm:$0xff]
    %v2637 = vld [vmem:[#allocation4 + $0x1aa0] sm:$0xff]
    %v2638 = vld [vmem:[#allocation4 + $0x1aa8] sm:$0xff]
    %v2639 = vld [vmem:[#allocation4 + $0x1ab0] sm:$0xff]
    %v2640 = vld [vmem:[#allocation4 + $0x1ab8] sm:$0xff]
    %v2641 = vld [vmem:[#allocation4 + $0x1ac0] sm:$0xff]
    %v2642 = vld [vmem:[#allocation4 + $0x1ac8] sm:$0xff]
    %v2643 = vld [vmem:[#allocation4 + $0x1ad0] sm:$0xff]
    %v2644 = vld [vmem:[#allocation4 + $0x1ad8] sm:$0xff]
    %v2645 = vld [vmem:[#allocation4 + $0x1ae0] sm:$0xff]
    %v2646 = vld [vmem:[#allocation4 + $0x1ae8] sm:$0xff]
    %v2647 = vld [vmem:[#allocation4 + $0x1af0] sm:$0xff]
    %v2648 = vld [vmem:[#allocation4 + $0x1af8] sm:$0xff]
    %v2649 = vld [vmem:[#allocation4 + $0x1b00] sm:$0xff]
    %v2650 = vld [vmem:[#allocation4 + $0x1b08] sm:$0xff]
    %v2651 = vld [vmem:[#allocation4 + $0x1b10] sm:$0xff]
    %v2652 = vld [vmem:[#allocation4 + $0x1b18] sm:$0xff]
    %v2653 = vld [vmem:[#allocation4 + $0x1b20] sm:$0xff]
    %v2654 = vld [vmem:[#allocation4 + $0x1b28] sm:$0xff]
    %v2655 = vld [vmem:[#allocation4 + $0x1b30] sm:$0xff]
    %v2656 = vld [vmem:[#allocation4 + $0x1b38] sm:$0xff]
    %v2657 = vld [vmem:[#allocation4 + $0x1b40] sm:$0xff]
    %v2658 = vld [vmem:[#allocation4 + $0x1b48] sm:$0xff]
    %v2659 = vld [vmem:[#allocation4 + $0x1b50] sm:$0xff]
    %v2660 = vld [vmem:[#allocation4 + $0x1b58] sm:$0xff]
    %v2661 = vld [vmem:[#allocation4 + $0x1b60] sm:$0xff]
    %v2662 = vld [vmem:[#allocation4 + $0x1b68] sm:$0xff]
    %v2663 = vld [vmem:[#allocation4 + $0x1b70] sm:$0xff]
    %v2664 = vld [vmem:[#allocation4 + $0x1b78] sm:$0xff]
    %v2665 = vld [vmem:[#allocation4 + $0x1b80] sm:$0xff]
    %v2666 = vld [vmem:[#allocation4 + $0x1b88] sm:$0xff]
    %v2667 = vld [vmem:[#allocation4 + $0x1b90] sm:$0xff]
    %v2668 = vld [vmem:[#allocation4 + $0x1b98] sm:$0xff]
    %v2669 = vld [vmem:[#allocation4 + $0x1ba0] sm:$0xff]
    %v2670 = vld [vmem:[#allocation4 + $0x1ba8] sm:$0xff]
    %v2671 = vld [vmem:[#allocation4 + $0x1bb0] sm:$0xff]
    %v2672 = vld [vmem:[#allocation4 + $0x1bb8] sm:$0xff]
    %v2673 = vld [vmem:[#allocation4 + $0x1bc0] sm:$0xff]
    %v2674 = vld [vmem:[#allocation4 + $0x1bc8] sm:$0xff]
    %v2675 = vld [vmem:[#allocation4 + $0x1bd0] sm:$0xff]
    %v2676 = vld [vmem:[#allocation4 + $0x1bd8] sm:$0xff]
    %v2677 = vld [vmem:[#allocation4 + $0x1be0] sm:$0xff]
    %v2678 = vld [vmem:[#allocation4 + $0x1be8] sm:$0xff]
    %v2679 = vld [vmem:[#allocation4 + $0x1bf0] sm:$0xff]
    %v2680 = vld [vmem:[#allocation4 + $0x1bf8] sm:$0xff]
    %v2681 = vld [vmem:[#allocation4 + $0x1c00] sm:$0xff]
    %v2682 = vld [vmem:[#allocation4 + $0x1c08] sm:$0xff]
    %v2683 = vld [vmem:[#allocation4 + $0x1c10] sm:$0xff]
    %v2684 = vld [vmem:[#allocation4 + $0x1c18] sm:$0xff]
    %v2685 = vld [vmem:[#allocation4 + $0x1c20] sm:$0xff]
    %v2686 = vld [vmem:[#allocation4 + $0x1c28] sm:$0xff]
    %v2687 = vld [vmem:[#allocation4 + $0x1c30] sm:$0xff]
    %v2688 = vld [vmem:[#allocation4 + $0x1c38] sm:$0xff]
    %v2689 = vld [vmem:[#allocation4 + $0x1c40] sm:$0xff]
    %v2690 = vld [vmem:[#allocation4 + $0x1c48] sm:$0xff]
    %v2691 = vld [vmem:[#allocation4 + $0x1c50] sm:$0xff]
    %v2692 = vld [vmem:[#allocation4 + $0x1c58] sm:$0xff]
    %v2693 = vld [vmem:[#allocation4 + $0x1c60] sm:$0xff]
    %v2694 = vld [vmem:[#allocation4 + $0x1c68] sm:$0xff]
    %v2695 = vld [vmem:[#allocation4 + $0x1c70] sm:$0xff]
    %v2696 = vld [vmem:[#allocation4 + $0x1c78] sm:$0xff]
    %v2697 = vld [vmem:[#allocation4 + $0x1c80] sm:$0xff]
    %v2698 = vld [vmem:[#allocation4 + $0x1c88] sm:$0xff]
    %v2699 = vld [vmem:[#allocation4 + $0x1c90] sm:$0xff]
    %v2700 = vld [vmem:[#allocation4 + $0x1c98] sm:$0xff]
    %v2701 = vld [vmem:[#allocation4 + $0x1ca0] sm:$0xff]
    %v2702 = vld [vmem:[#allocation4 + $0x1ca8] sm:$0xff]
    %v2703 = vld [vmem:[#allocation4 + $0x1cb0] sm:$0xff]
    %v2704 = vld [vmem:[#allocation4 + $0x1cb8] sm:$0xff]
    %v2705 = vld [vmem:[#allocation4 + $0x1cc0] sm:$0xff]
    %v2706 = vld [vmem:[#allocation4 + $0x1cc8] sm:$0xff]
    %v2707 = vld [vmem:[#allocation4 + $0x1cd0] sm:$0xff]
    %v2708 = vld [vmem:[#allocation4 + $0x1cd8] sm:$0xff]
    %v2709 = vld [vmem:[#allocation4 + $0x1ce0] sm:$0xff]
    %v2710 = vld [vmem:[#allocation4 + $0x1ce8] sm:$0xff]
    %v2711 = vld [vmem:[#allocation4 + $0x1cf0] sm:$0xff]
    %v2712 = vld [vmem:[#allocation4 + $0x1cf8] sm:$0xff]
    %v2713 = vld [vmem:[#allocation4 + $0x1d00] sm:$0xff]
    %v2714 = vld [vmem:[#allocation4 + $0x1d08] sm:$0xff]
    %v2715 = vld [vmem:[#allocation4 + $0x1d10] sm:$0xff]
    %v2716 = vld [vmem:[#allocation4 + $0x1d18] sm:$0xff]
    %v2717 = vld [vmem:[#allocation4 + $0x1d20] sm:$0xff]
    %v2718 = vld [vmem:[#allocation4 + $0x1d28] sm:$0xff]
    %v2719 = vld [vmem:[#allocation4 + $0x1d30] sm:$0xff]
    %v2720 = vld [vmem:[#allocation4 + $0x1d38] sm:$0xff]
    %v2721 = vld [vmem:[#allocation4 + $0x1d40] sm:$0xff]
    %v2722 = vld [vmem:[#allocation4 + $0x1d48] sm:$0xff]
    %v2723 = vld [vmem:[#allocation4 + $0x1d50] sm:$0xff]
    %v2724 = vld [vmem:[#allocation4 + $0x1d58] sm:$0xff]
    %v2725 = vld [vmem:[#allocation4 + $0x1d60] sm:$0xff]
    %v2726 = vld [vmem:[#allocation4 + $0x1d68] sm:$0xff]
    %v2727 = vld [vmem:[#allocation4 + $0x1d70] sm:$0xff]
    %v2728 = vld [vmem:[#allocation4 + $0x1d78] sm:$0xff]
    %v2729 = vld [vmem:[#allocation4 + $0x1d80] sm:$0xff]
    %v2730 = vld [vmem:[#allocation4 + $0x1d88] sm:$0xff]
    %v2731 = vld [vmem:[#allocation4 + $0x1d90] sm:$0xff]
    %v2732 = vld [vmem:[#allocation4 + $0x1d98] sm:$0xff]
    %v2733 = vld [vmem:[#allocation4 + $0x1da0] sm:$0xff]
    %v2734 = vld [vmem:[#allocation4 + $0x1da8] sm:$0xff]
    %v2735 = vld [vmem:[#allocation4 + $0x1db0] sm:$0xff]
    %v2736 = vld [vmem:[#allocation4 + $0x1db8] sm:$0xff]
    %v2737 = vld [vmem:[#allocation4 + $0x1dc0] sm:$0xff]
    %v2738 = vld [vmem:[#allocation4 + $0x1dc8] sm:$0xff]
    %v2739 = vld [vmem:[#allocation4 + $0x1dd0] sm:$0xff]
    %v2740 = vld [vmem:[#allocation4 + $0x1dd8] sm:$0xff]
    %v2741 = vld [vmem:[#allocation4 + $0x1de0] sm:$0xff]
    %v2742 = vld [vmem:[#allocation4 + $0x1de8] sm:$0xff]
    %v2743 = vld [vmem:[#allocation4 + $0x1df0] sm:$0xff]
    %v2744 = vld [vmem:[#allocation4 + $0x1df8] sm:$0xff]
    %v2745 = vld [vmem:[#allocation4 + $0x1e00] sm:$0xff]
    %v2746 = vld [vmem:[#allocation4 + $0x1e08] sm:$0xff]
    %v2747 = vld [vmem:[#allocation4 + $0x1e10] sm:$0xff]
    %v2748 = vld [vmem:[#allocation4 + $0x1e18] sm:$0xff]
    %v2749 = vld [vmem:[#allocation4 + $0x1e20] sm:$0xff]
    %v2750 = vld [vmem:[#allocation4 + $0x1e28] sm:$0xff]
    %v2751 = vld [vmem:[#allocation4 + $0x1e30] sm:$0xff]
    %v2752 = vld [vmem:[#allocation4 + $0x1e38] sm:$0xff]
    %v2753 = vld [vmem:[#allocation4 + $0x1e40] sm:$0xff]
    %v2754 = vld [vmem:[#allocation4 + $0x1e48] sm:$0xff]
    %v2755 = vld [vmem:[#allocation4 + $0x1e50] sm:$0xff]
    %v2756 = vld [vmem:[#allocation4 + $0x1e58] sm:$0xff]
    %v2757 = vld [vmem:[#allocation4 + $0x1e60] sm:$0xff]
    %v2758 = vld [vmem:[#allocation4 + $0x1e68] sm:$0xff]
    %v2759 = vld [vmem:[#allocation4 + $0x1e70] sm:$0xff]
    %v2760 = vld [vmem:[#allocation4 + $0x1e78] sm:$0xff]
    %v2761 = vld [vmem:[#allocation4 + $0x1e80] sm:$0xff]
    %v2762 = vld [vmem:[#allocation4 + $0x1e88] sm:$0xff]
    %v2763 = vld [vmem:[#allocation4 + $0x1e90] sm:$0xff]
    %v2764 = vld [vmem:[#allocation4 + $0x1e98] sm:$0xff]
    %v2765 = vld [vmem:[#allocation4 + $0x1ea0] sm:$0xff]
    %v2766 = vld [vmem:[#allocation4 + $0x1ea8] sm:$0xff]
    %v2767 = vld [vmem:[#allocation4 + $0x1eb0] sm:$0xff]
    %v2768 = vld [vmem:[#allocation4 + $0x1eb8] sm:$0xff]
    %v2769 = vld [vmem:[#allocation4 + $0x1ec0] sm:$0xff]
    %v2770 = vld [vmem:[#allocation4 + $0x1ec8] sm:$0xff]
    %v2771 = vld [vmem:[#allocation4 + $0x1ed0] sm:$0xff]
    %v2772 = vld [vmem:[#allocation4 + $0x1ed8] sm:$0xff]
    %v2773 = vld [vmem:[#allocation4 + $0x1ee0] sm:$0xff]
    %v2774 = vld [vmem:[#allocation4 + $0x1ee8] sm:$0xff]
    %v2775 = vld [vmem:[#allocation4 + $0x1ef0] sm:$0xff]
    %v2776 = vld [vmem:[#allocation4 + $0x1ef8] sm:$0xff]
    %v2777 = vld [vmem:[#allocation4 + $0x1f00] sm:$0xff]
    %v2778 = vld [vmem:[#allocation4 + $0x1f08] sm:$0xff]
    %v2779 = vld [vmem:[#allocation4 + $0x1f10] sm:$0xff]
    %v2780 = vld [vmem:[#allocation4 + $0x1f18] sm:$0xff]
    %v2781 = vld [vmem:[#allocation4 + $0x1f20] sm:$0xff]
    %v2782 = vld [vmem:[#allocation4 + $0x1f28] sm:$0xff]
    %v2783 = vld [vmem:[#allocation4 + $0x1f30] sm:$0xff]
    %v2784 = vld [vmem:[#allocation4 + $0x1f38] sm:$0xff]
    %v2785 = vld [vmem:[#allocation4 + $0x1f40] sm:$0xff]
    %v2786 = vld [vmem:[#allocation4 + $0x1f48] sm:$0xff]
    %v2787 = vld [vmem:[#allocation4 + $0x1f50] sm:$0xff]
    %v2788 = vld [vmem:[#allocation4 + $0x1f58] sm:$0xff]
    %v2789 = vld [vmem:[#allocation4 + $0x1f60] sm:$0xff]
    %v2790 = vld [vmem:[#allocation4 + $0x1f68] sm:$0xff]
    %v2791 = vld [vmem:[#allocation4 + $0x1f70] sm:$0xff]
    %v2792 = vld [vmem:[#allocation4 + $0x1f78] sm:$0xff]
    %v2793 = vld [vmem:[#allocation4 + $0x1f80] sm:$0xff]
    %v2794 = vld [vmem:[#allocation4 + $0x1f88] sm:$0xff]
    %v2795 = vld [vmem:[#allocation4 + $0x1f90] sm:$0xff]
    %v2796 = vld [vmem:[#allocation4 + $0x1f98] sm:$0xff]
    %v2797 = vld [vmem:[#allocation4 + $0x1fa0] sm:$0xff]
    %v2798 = vld [vmem:[#allocation4 + $0x1fa8] sm:$0xff]
    %v2799 = vld [vmem:[#allocation4 + $0x1fb0] sm:$0xff]
    %v2800 = vld [vmem:[#allocation4 + $0x1fb8] sm:$0xff]
    %v2801 = vld [vmem:[#allocation4 + $0x1fc0] sm:$0xff]
    %v2802 = vld [vmem:[#allocation4 + $0x1fc8] sm:$0xff]
    %v2803 = vld [vmem:[#allocation4 + $0x1fd0] sm:$0xff]
    %v2804 = vld [vmem:[#allocation4 + $0x1fd8] sm:$0xff]
    %v2805 = vld [vmem:[#allocation4 + $0x1fe0] sm:$0xff]
    %v2806 = vld [vmem:[#allocation4 + $0x1fe8] sm:$0xff]
    %v2807 = vld [vmem:[#allocation4 + $0x1ff0] sm:$0xff]
    %v2808 = vld [vmem:[#allocation4 + $0x1ff8] sm:$0xff]
    %v2809 = vld [vmem:[#allocation12] sm:$0xff]
    %v2810 = vld [vmem:[#allocation12 + $0x8] sm:$0xff]
    %v2813 = vlaneseq
    %v2814 = vshrl.u32 %v2813, 7
    %v2815 = vsub.s32 0, %v2814
    %v2816 = vrot.slane %v2809, %v2815
    %v2817 = vlaneseq
    %v2818 = vshrl.u32 %v2817, 7
    %v2819 = vsub.s32 1, %v2818
    %v2820 = vrot.slane %v2809, %v2819
    %v2821 = vlaneseq
    %v2822 = vshrl.u32 %v2821, 7
    %v2823 = vsub.s32 2, %v2822
    %v2824 = vrot.slane %v2809, %v2823
    %v2825 = vlaneseq
    %v2826 = vshrl.u32 %v2825, 7
    %v2827 = vsub.s32 3, %v2826
    %v2828 = vrot.slane %v2809, %v2827
    %v2829 = vlaneseq
    %v2830 = vshrl.u32 %v2829, 7
    %v2831 = vsub.s32 4, %v2830
    %v2832 = vrot.slane %v2809, %v2831
    %v2833 = vlaneseq
    %v2834 = vshrl.u32 %v2833, 7
    %v2835 = vsub.s32 5, %v2834
    %v2836 = vrot.slane %v2809, %v2835
    %v2837 = vlaneseq
    %v2838 = vshrl.u32 %v2837, 7
    %v2839 = vsub.s32 6, %v2838
    %v2840 = vrot.slane %v2809, %v2839
    %v2841 = vlaneseq
    %v2842 = vshrl.u32 %v2841, 7
    %v2843 = vsub.s32 7, %v2842
    %v2844 = vrot.slane %v2809, %v2843
    %v2845 = vlaneseq
    %v2846 = vshrl.u32 %v2845, 7
    %v2847 = vsub.s32 0, %v2846
    %v2848 = vrot.slane %v2810, %v2847
    %v2849 = vlaneseq
    %v2850 = vshrl.u32 %v2849, 7
    %v2851 = vsub.s32 1, %v2850
    %v2852 = vrot.slane %v2810, %v2851
    %v2853 = vlaneseq
    %v2854 = vshrl.u32 %v2853, 7
    %v2855 = vsub.s32 2, %v2854
    %v2856 = vrot.slane %v2810, %v2855
    %v2857 = vlaneseq
    %v2858 = vshrl.u32 %v2857, 7
    %v2859 = vsub.s32 3, %v2858
    %v2860 = vrot.slane %v2810, %v2859
    %v2861 = vlaneseq
    %v2862 = vshrl.u32 %v2861, 7
    %v2863 = vsub.s32 4, %v2862
    %v2864 = vrot.slane %v2810, %v2863
    %v2865 = vlaneseq
    %v2866 = vshrl.u32 %v2865, 7
    %v2867 = vsub.s32 5, %v2866
    %v2868 = vrot.slane %v2810, %v2867
    %v2869 = vlaneseq
    %v2870 = vshrl.u32 %v2869, 7
    %v2871 = vsub.s32 6, %v2870
    %v2872 = vrot.slane %v2810, %v2871
    %v2873 = vlaneseq
    %v2874 = vshrl.u32 %v2873, 7
    %v2875 = vsub.s32 7, %v2874
    %v2876 = vrot.slane %v2810, %v2875
    %2893 = vmatprep.subr.bf16.mxu0 %v1786
    %2894 = vmatpush1.bf16.msra.mxu0 %v1785
    %2895 = vmatprep.subr.bf16.mxu0 %v1802
    %2896 = vmatpush1.bf16.msra.mxu0 %v1801
    %2897 = vmatprep.subr.bf16.mxu0 %v1818
    %2898 = vmatpush1.bf16.msra.mxu0 %v1817
    %2899 = vmatprep.subr.bf16.mxu0 %v1834
    %2900 = vmatpush1.bf16.msra.mxu0 %v1833
    %2901 = vmatprep.subr.bf16.mxu0 %v1850
    %2902 = vmatpush1.bf16.msra.mxu0 %v1849
    %2903 = vmatprep.subr.bf16.mxu0 %v1866
    %2904 = vmatpush1.bf16.msra.mxu0 %v1865
    %2905 = vmatprep.subr.bf16.mxu0 %v1882
    %2906 = vmatpush1.bf16.msra.mxu0 %v1881
    %2907 = vmatprep.subr.bf16.mxu0 %v1898
    %2908 = vmatpush1.bf16.msra.mxu0 %v1897
    %2909 = vmatprep.subr.bf16.mxu0 %v1914
    %2910 = vmatpush1.bf16.msra.mxu0 %v1913
    %2911 = vmatprep.subr.bf16.mxu0 %v1930
    %2912 = vmatpush1.bf16.msra.mxu0 %v1929
    %2913 = vmatprep.subr.bf16.mxu0 %v1946
    %2914 = vmatpush1.bf16.msra.mxu0 %v1945
    %2915 = vmatprep.subr.bf16.mxu0 %v1962
    %2916 = vmatpush1.bf16.msra.mxu0 %v1961
    %2917 = vmatprep.subr.bf16.mxu0 %v1978
    %2918 = vmatpush1.bf16.msra.mxu0 %v1977
    %2919 = vmatprep.subr.bf16.mxu0 %v1994
    %2920 = vmatpush1.bf16.msra.mxu0 %v1993
    %2921 = vmatprep.subr.bf16.mxu0 %v2010
    %2922 = vmatpush1.bf16.msra.mxu0 %v2009
    %2923 = vmatprep.subr.bf16.mxu0 %v2026
    %2924 = vmatpush1.bf16.msra.mxu0 %v2025
    %2925 = vmatprep.mubr.bf16.mxu0 %v1775
    %2926 = vmatmul.mubr.bf16.gmra.mrb[0].mxu0 %v1774
    %v2927 = vpop.f32.mrb[0].mxu0
    %v2928 = vadd.f32 %v2816, %v2927
    %v2929 = vpop.f32.mrb[0].mxu0
    %v2930 = vadd.f32 %v2820, %v2929
    %v2931 = vpop.f32.mrb[0].mxu0
    %v2932 = vpop.f32.mrb[0].mxu0
    %2933 = vdwg.mxu0
    %2934 = vmatprep.subr.bf16.mxu0 %v2042
    %2935 = vmatpush1.bf16.msra.mxu0 %v2041
    %2936 = vmatprep.subr.bf16.mxu0 %v2058
    %2937 = vmatpush1.bf16.msra.mxu0 %v2057
    %2938 = vmatprep.subr.bf16.mxu0 %v2074
    %2939 = vmatpush1.bf16.msra.mxu0 %v2073
    %2940 = vmatprep.subr.bf16.mxu0 %v2090
    %2941 = vmatpush1.bf16.msra.mxu0 %v2089
    %2942 = vmatprep.subr.bf16.mxu0 %v2106
    %2943 = vmatpush1.bf16.msra.mxu0 %v2105
    %2944 = vmatprep.subr.bf16.mxu0 %v2122
    %2945 = vmatpush1.bf16.msra.mxu0 %v2121
    %2946 = vmatprep.subr.bf16.mxu0 %v2138
    %2947 = vmatpush1.bf16.msra.mxu0 %v2137
    %2948 = vmatprep.subr.bf16.mxu0 %v2154
    %2949 = vmatpush1.bf16.msra.mxu0 %v2153
    %2950 = vmatprep.subr.bf16.mxu0 %v2170
    %2951 = vmatpush1.bf16.msra.mxu0 %v2169
    %2952 = vmatprep.subr.bf16.mxu0 %v2186
    %2953 = vmatpush1.bf16.msra.mxu0 %v2185
    %2954 = vmatprep.subr.bf16.mxu0 %v2202
    %2955 = vmatpush1.bf16.msra.mxu0 %v2201
    %2956 = vmatprep.subr.bf16.mxu0 %v2218
    %2957 = vmatpush1.bf16.msra.mxu0 %v2217
    %2958 = vmatprep.subr.bf16.mxu0 %v2234
    %2959 = vmatpush1.bf16.msra.mxu0 %v2233
    %2960 = vmatprep.subr.bf16.mxu0 %v2250
    %2961 = vmatpush1.bf16.msra.mxu0 %v2249
    %2962 = vmatprep.subr.bf16.mxu0 %v2266
    %2963 = vmatpush1.bf16.msra.mxu0 %v2265
    %2964 = vmatprep.subr.bf16.mxu0 %v2282
    %2965 = vmatpush1.bf16.msra.mxu0 %v2281
    %2966 = vmatprep.mubr.bf16.mxu0 %v1777
    %2967 = vmatmul.mubr.bf16.gmra.mrb[0].mxu0 %v1776
    %v2968 = vpop.f32.mrb[0].mxu0
    %v2969 = vadd.f32 %v2928, %v2968
    %v2970 = vpop.f32.mrb[0].mxu0
    %v2971 = vadd.f32 %v2930, %v2970
    %v2972 = vpop.f32.mrb[0].mxu0
    %v2973 = vpop.f32.mrb[0].mxu0
    %2974 = vdwg.mxu0
    %2975 = vmatprep.subr.bf16.mxu0 %v2298
    %2976 = vmatpush1.bf16.msra.mxu0 %v2297
    %2977 = vmatprep.subr.bf16.mxu0 %v2314
    %2978 = vmatpush1.bf16.msra.mxu0 %v2313
    %2979 = vmatprep.subr.bf16.mxu0 %v2330
    %2980 = vmatpush1.bf16.msra.mxu0 %v2329
    %2981 = vmatprep.subr.bf16.mxu0 %v2346
    %2982 = vmatpush1.bf16.msra.mxu0 %v2345
    %2983 = vmatprep.subr.bf16.mxu0 %v2362
    %2984 = vmatpush1.bf16.msra.mxu0 %v2361
    %2985 = vmatprep.subr.bf16.mxu0 %v2378
    %2986 = vmatpush1.bf16.msra.mxu0 %v2377
    %2987 = vmatprep.subr.bf16.mxu0 %v2394
    %2988 = vmatpush1.bf16.msra.mxu0 %v2393
    %2989 = vmatprep.subr.bf16.mxu0 %v2410
    %2990 = vmatpush1.bf16.msra.mxu0 %v2409
    %2991 = vmatprep.subr.bf16.mxu0 %v2426
    %2992 = vmatpush1.bf16.msra.mxu0 %v2425
    %2993 = vmatprep.subr.bf16.mxu0 %v2442
    %2994 = vmatpush1.bf16.msra.mxu0 %v2441
    %2995 = vmatprep.subr.bf16.mxu0 %v2458
    %2996 = vmatpush1.bf16.msra.mxu0 %v2457
    %2997 = vmatprep.subr.bf16.mxu0 %v2474
    %2998 = vmatpush1.bf16.msra.mxu0 %v2473
    %2999 = vmatprep.subr.bf16.mxu0 %v2490
    %3000 = vmatpush1.bf16.msra.mxu0 %v2489
    %3001 = vmatprep.subr.bf16.mxu0 %v2506
    %3002 = vmatpush1.bf16.msra.mxu0 %v2505
    %3003 = vmatprep.subr.bf16.mxu0 %v2522
    %3004 = vmatpush1.bf16.msra.mxu0 %v2521
    %3005 = vmatprep.subr.bf16.mxu0 %v2538
    %3006 = vmatpush1.bf16.msra.mxu0 %v2537
    %3007 = vmatprep.mubr.bf16.mxu0 %v1779
    %3008 = vmatmul.mubr.bf16.gmra.mrb[0].mxu0 %v1778
    %v3009 = vpop.f32.mrb[0].mxu0
    %v3010 = vadd.f32 %v2969, %v3009
    %v3011 = vpop.f32.mrb[0].mxu0
    %v3012 = vadd.f32 %v2971, %v3011
    %v3013 = vpop.f32.mrb[0].mxu0
    %v3014 = vpop.f32.mrb[0].mxu0
    %3015 = vdwg.mxu0
    %3016 = vmatprep.subr.bf16.mxu0 %v2554
    %3017 = vmatpush1.bf16.msra.mxu0 %v2553
    %3018 = vmatprep.subr.bf16.mxu0 %v2570
    %3019 = vmatpush1.bf16.msra.mxu0 %v2569
    %3020 = vmatprep.subr.bf16.mxu0 %v2586
    %3021 = vmatpush1.bf16.msra.mxu0 %v2585
    %3022 = vmatprep.subr.bf16.mxu0 %v2602
    %3023 = vmatpush1.bf16.msra.mxu0 %v2601
    %3024 = vmatprep.subr.bf16.mxu0 %v2618
    %3025 = vmatpush1.bf16.msra.mxu0 %v2617
    %3026 = vmatprep.subr.bf16.mxu0 %v2634
    %3027 = vmatpush1.bf16.msra.mxu0 %v2633
    %3028 = vmatprep.subr.bf16.mxu0 %v2650
    %3029 = vmatpush1.bf16.msra.mxu0 %v2649
    %3030 = vmatprep.subr.bf16.mxu0 %v2666
    %3031 = vmatpush1.bf16.msra.mxu0 %v2665
    %3032 = vmatprep.subr.bf16.mxu0 %v2682
    %3033 = vmatpush1.bf16.msra.mxu0 %v2681
    %3034 = vmatprep.subr.bf16.mxu0 %v2698
    %3035 = vmatpush1.bf16.msra.mxu0 %v2697
    %3036 = vmatprep.subr.bf16.mxu0 %v2714
    %3037 = vmatpush1.bf16.msra.mxu0 %v2713
    %3038 = vmatprep.subr.bf16.mxu0 %v2730
    %3039 = vmatpush1.bf16.msra.mxu0 %v2729
    %3040 = vmatprep.subr.bf16.mxu0 %v2746
    %3041 = vmatpush1.bf16.msra.mxu0 %v2745
    %3042 = vmatprep.subr.bf16.mxu0 %v2762
    %3043 = vmatpush1.bf16.msra.mxu0 %v2761
    %3044 = vmatprep.subr.bf16.mxu0 %v2778
    %3045 = vmatpush1.bf16.msra.mxu0 %v2777
    %3046 = vmatprep.subr.bf16.mxu0 %v2794
    %3047 = vmatpush1.bf16.msra.mxu0 %v2793
    %3048 = vmatprep.mubr.bf16.mxu0 %v1781
    %3049 = vmatmul.mubr.bf16.gmra.mrb[0].mxu0 %v1780
    %v3050 = vpop.f32.mrb[0].mxu0
    %v3051 = vadd.f32 %v3010, %v3050
    %v3052 = vpop.f32.mrb[0].mxu0
    %v3053 = vadd.f32 %v3012, %v3052
    %v3054 = vpop.f32.mrb[0].mxu0
    %v3055 = vpop.f32.mrb[0].mxu0
    %3056 = vdwg.mxu0
    %3057 = vmatprep.subr.bf16.mxu0 %v1788
    %3058 = vmatpush1.bf16.msra.mxu0 %v1787
    %3059 = vmatprep.subr.bf16.mxu0 %v1804
    %3060 = vmatpush1.bf16.msra.mxu0 %v1803
    %3061 = vmatprep.subr.bf16.mxu0 %v1820
    %3062 = vmatpush1.bf16.msra.mxu0 %v1819
    %3063 = vmatprep.subr.bf16.mxu0 %v1836
    %3064 = vmatpush1.bf16.msra.mxu0 %v1835
    %3065 = vmatprep.subr.bf16.mxu0 %v1852
    %3066 = vmatpush1.bf16.msra.mxu0 %v1851
    %3067 = vmatprep.subr.bf16.mxu0 %v1868
    %3068 = vmatpush1.bf16.msra.mxu0 %v1867
    %3069 = vmatprep.subr.bf16.mxu0 %v1884
    %3070 = vmatpush1.bf16.msra.mxu0 %v1883
    %3071 = vmatprep.subr.bf16.mxu0 %v1900
    %3072 = vmatpush1.bf16.msra.mxu0 %v1899
    %3073 = vmatprep.subr.bf16.mxu0 %v1916
    %3074 = vmatpush1.bf16.msra.mxu0 %v1915
    %3075 = vmatprep.subr.bf16.mxu0 %v1932
    %3076 = vmatpush1.bf16.msra.mxu0 %v1931
    %3077 = vmatprep.subr.bf16.mxu0 %v1948
    %3078 = vmatpush1.bf16.msra.mxu0 %v1947
    %3079 = vmatprep.subr.bf16.mxu0 %v1964
    %3080 = vmatpush1.bf16.msra.mxu0 %v1963
    %3081 = vmatprep.subr.bf16.mxu0 %v1980
    %3082 = vmatpush1.bf16.msra.mxu0 %v1979
    %3083 = vmatprep.subr.bf16.mxu0 %v1996
    %3084 = vmatpush1.bf16.msra.mxu0 %v1995
    %3085 = vmatprep.subr.bf16.mxu0 %v2012
    %3086 = vmatpush1.bf16.msra.mxu0 %v2011
    %3087 = vmatprep.subr.bf16.mxu0 %v2028
    %3088 = vmatpush1.bf16.msra.mxu0 %v2027
    %3089 = vmatprep.mubr.bf16.mxu0 %v1775
    %3090 = vmatmul.mubr.bf16.gmra.mrb[0].mxu0 %v1774
    %v3091 = vpop.f32.mrb[0].mxu0
    %v3092 = vadd.f32 %v2824, %v3091
    %v3093 = vpop.f32.mrb[0].mxu0
    %v3094 = vadd.f32 %v2828, %v3093
    %v3095 = vpop.f32.mrb[0].mxu0
    %v3096 = vpop.f32.mrb[0].mxu0
    %3097 = vdwg.mxu0
    %3098 = vmatprep.subr.bf16.mxu0 %v2044
    %3099 = vmatpush1.bf16.msra.mxu0 %v2043
    %3100 = vmatprep.subr.bf16.mxu0 %v2060
    %3101 = vmatpush1.bf16.msra.mxu0 %v2059
    %3102 = vmatprep.subr.bf16.mxu0 %v2076
    %3103 = vmatpush1.bf16.msra.mxu0 %v2075
    %3104 = vmatprep.subr.bf16.mxu0 %v2092
    %3105 = vmatpush1.bf16.msra.mxu0 %v2091
    %3106 = vmatprep.subr.bf16.mxu0 %v2108
    %3107 = vmatpush1.bf16.msra.mxu0 %v2107
    %3108 = vmatprep.subr.bf16.mxu0 %v2124
    %3109 = vmatpush1.bf16.msra.mxu0 %v2123
    %3110 = vmatprep.subr.bf16.mxu0 %v2140
    %3111 = vmatpush1.bf16.msra.mxu0 %v2139
    %3112 = vmatprep.subr.bf16.mxu0 %v2156
    %3113 = vmatpush1.bf16.msra.mxu0 %v2155
    %3114 = vmatprep.subr.bf16.mxu0 %v2172
    %3115 = vmatpush1.bf16.msra.mxu0 %v2171
    %3116 = vmatprep.subr.bf16.mxu0 %v2188
    %3117 = vmatpush1.bf16.msra.mxu0 %v2187
    %3118 = vmatprep.subr.bf16.mxu0 %v2204
    %3119 = vmatpush1.bf16.msra.mxu0 %v2203
    %3120 = vmatprep.subr.bf16.mxu0 %v2220
    %3121 = vmatpush1.bf16.msra.mxu0 %v2219
    %3122 = vmatprep.subr.bf16.mxu0 %v2236
    %3123 = vmatpush1.bf16.msra.mxu0 %v2235
    %3124 = vmatprep.subr.bf16.mxu0 %v2252
    %3125 = vmatpush1.bf16.msra.mxu0 %v2251
    %3126 = vmatprep.subr.bf16.mxu0 %v2268
    %3127 = vmatpush1.bf16.msra.mxu0 %v2267
    %3128 = vmatprep.subr.bf16.mxu0 %v2284
    %3129 = vmatpush1.bf16.msra.mxu0 %v2283
    %3130 = vmatprep.mubr.bf16.mxu0 %v1777
    %3131 = vmatmul.mubr.bf16.gmra.mrb[0].mxu0 %v1776
    %v3132 = vpop.f32.mrb[0].mxu0
    %v3133 = vadd.f32 %v3092, %v3132
    %v3134 = vpop.f32.mrb[0].mxu0
    %v3135 = vadd.f32 %v3094, %v3134
    %v3136 = vpop.f32.mrb[0].mxu0
    %v3137 = vpop.f32.mrb[0].mxu0
    %3138 = vdwg.mxu0
    %3139 = vmatprep.subr.bf16.mxu0 %v2300
    %3140 = vmatpush1.bf16.msra.mxu0 %v2299
    %3141 = vmatprep.subr.bf16.mxu0 %v2316
    %3142 = vmatpush1.bf16.msra.mxu0 %v2315
    %3143 = vmatprep.subr.bf16.mxu0 %v2332
    %3144 = vmatpush1.bf16.msra.mxu0 %v2331
    %3145 = vmatprep.subr.bf16.mxu0 %v2348
    %3146 = vmatpush1.bf16.msra.mxu0 %v2347
    %3147 = vmatprep.subr.bf16.mxu0 %v2364
    %3148 = vmatpush1.bf16.msra.mxu0 %v2363
    %3149 = vmatprep.subr.bf16.mxu0 %v2380
    %3150 = vmatpush1.bf16.msra.mxu0 %v2379
    %3151 = vmatprep.subr.bf16.mxu0 %v2396
    %3152 = vmatpush1.bf16.msra.mxu0 %v2395
    %3153 = vmatprep.subr.bf16.mxu0 %v2412
    %3154 = vmatpush1.bf16.msra.mxu0 %v2411
    %3155 = vmatprep.subr.bf16.mxu0 %v2428
    %3156 = vmatpush1.bf16.msra.mxu0 %v2427
    %3157 = vmatprep.subr.bf16.mxu0 %v2444
    %3158 = vmatpush1.bf16.msra.mxu0 %v2443
    %3159 = vmatprep.subr.bf16.mxu0 %v2460
    %3160 = vmatpush1.bf16.msra.mxu0 %v2459
    %3161 = vmatprep.subr.bf16.mxu0 %v2476
    %3162 = vmatpush1.bf16.msra.mxu0 %v2475
    %3163 = vmatprep.subr.bf16.mxu0 %v2492
    %3164 = vmatpush1.bf16.msra.mxu0 %v2491
    %3165 = vmatprep.subr.bf16.mxu0 %v2508
    %3166 = vmatpush1.bf16.msra.mxu0 %v2507
    %3167 = vmatprep.subr.bf16.mxu0 %v2524
    %3168 = vmatpush1.bf16.msra.mxu0 %v2523
    %3169 = vmatprep.subr.bf16.mxu0 %v2540
    %3170 = vmatpush1.bf16.msra.mxu0 %v2539
    %3171 = vmatprep.mubr.bf16.mxu0 %v1779
    %3172 = vmatmul.mubr.bf16.gmra.mrb[0].mxu0 %v1778
    %v3173 = vpop.f32.mrb[0].mxu0
    %v3174 = vadd.f32 %v3133, %v3173
    %v3175 = vpop.f32.mrb[0].mxu0
    %v3176 = vadd.f32 %v3135, %v3175
    %v3177 = vpop.f32.mrb[0].mxu0
    %v3178 = vpop.f32.mrb[0].mxu0
    %3179 = vdwg.mxu0
    %3180 = vmatprep.subr.bf16.mxu0 %v2556
    %3181 = vmatpush1.bf16.msra.mxu0 %v2555
    %3182 = vmatprep.subr.bf16.mxu0 %v2572
    %3183 = vmatpush1.bf16.msra.mxu0 %v2571
    %3184 = vmatprep.subr.bf16.mxu0 %v2588
    %3185 = vmatpush1.bf16.msra.mxu0 %v2587
    %3186 = vmatprep.subr.bf16.mxu0 %v2604
    %3187 = vmatpush1.bf16.msra.mxu0 %v2603
    %3188 = vmatprep.subr.bf16.mxu0 %v2620
    %3189 = vmatpush1.bf16.msra.mxu0 %v2619
    %3190 = vmatprep.subr.bf16.mxu0 %v2636
    %3191 = vmatpush1.bf16.msra.mxu0 %v2635
    %3192 = vmatprep.subr.bf16.mxu0 %v2652
    %3193 = vmatpush1.bf16.msra.mxu0 %v2651
    %3194 = vmatprep.subr.bf16.mxu0 %v2668
    %3195 = vmatpush1.bf16.msra.mxu0 %v2667
    %3196 = vmatprep.subr.bf16.mxu0 %v2684
    %3197 = vmatpush1.bf16.msra.mxu0 %v2683
    %3198 = vmatprep.subr.bf16.mxu0 %v2700
    %3199 = vmatpush1.bf16.msra.mxu0 %v2699
    %3200 = vmatprep.subr.bf16.mxu0 %v2716
    %3201 = vmatpush1.bf16.msra.mxu0 %v2715
    %3202 = vmatprep.subr.bf16.mxu0 %v2732
    %3203 = vmatpush1.bf16.msra.mxu0 %v2731
    %3204 = vmatprep.subr.bf16.mxu0 %v2748
    %3205 = vmatpush1.bf16.msra.mxu0 %v2747
    %3206 = vmatprep.subr.bf16.mxu0 %v2764
    %3207 = vmatpush1.bf16.msra.mxu0 %v2763
    %3208 = vmatprep.subr.bf16.mxu0 %v2780
    %3209 = vmatpush1.bf16.msra.mxu0 %v2779
    %3210 = vmatprep.subr.bf16.mxu0 %v2796
    %3211 = vmatpush1.bf16.msra.mxu0 %v2795
    %3212 = vmatprep.mubr.bf16.mxu0 %v1781
    %3213 = vmatmul.mubr.bf16.gmra.mrb[0].mxu0 %v1780
    %v3214 = vpop.f32.mrb[0].mxu0
    %v3215 = vadd.f32 %v3174, %v3214
    %v3216 = vpop.f32.mrb[0].mxu0
    %v3217 = vadd.f32 %v3176, %v3216
    %v3218 = vpop.f32.mrb[0].mxu0
    %v3219 = vpop.f32.mrb[0].mxu0
    %3220 = vdwg.mxu0
    %3221 = vmatprep.subr.bf16.mxu0 %v1790
    %3222 = vmatpush1.bf16.msra.mxu0 %v1789
    %3223 = vmatprep.subr.bf16.mxu0 %v1806
    %3224 = vmatpush1.bf16.msra.mxu0 %v1805
    %3225 = vmatprep.subr.bf16.mxu0 %v1822
    %3226 = vmatpush1.bf16.msra.mxu0 %v1821
    %3227 = vmatprep.subr.bf16.mxu0 %v1838
    %3228 = vmatpush1.bf16.msra.mxu0 %v1837
    %3229 = vmatprep.subr.bf16.mxu0 %v1854
    %3230 = vmatpush1.bf16.msra.mxu0 %v1853
    %3231 = vmatprep.subr.bf16.mxu0 %v1870
    %3232 = vmatpush1.bf16.msra.mxu0 %v1869
    %3233 = vmatprep.subr.bf16.mxu0 %v1886
    %3234 = vmatpush1.bf16.msra.mxu0 %v1885
    %3235 = vmatprep.subr.bf16.mxu0 %v1902
    %3236 = vmatpush1.bf16.msra.mxu0 %v1901
    %3237 = vmatprep.subr.bf16.mxu0 %v1918
    %3238 = vmatpush1.bf16.msra.mxu0 %v1917
    %3239 = vmatprep.subr.bf16.mxu0 %v1934
    %3240 = vmatpush1.bf16.msra.mxu0 %v1933
    %3241 = vmatprep.subr.bf16.mxu0 %v1950
    %3242 = vmatpush1.bf16.msra.mxu0 %v1949
    %3243 = vmatprep.subr.bf16.mxu0 %v1966
    %3244 = vmatpush1.bf16.msra.mxu0 %v1965
    %3245 = vmatprep.subr.bf16.mxu0 %v1982
    %3246 = vmatpush1.bf16.msra.mxu0 %v1981
    %3247 = vmatprep.subr.bf16.mxu0 %v1998
    %3248 = vmatpush1.bf16.msra.mxu0 %v1997
    %3249 = vmatprep.subr.bf16.mxu0 %v2014
    %3250 = vmatpush1.bf16.msra.mxu0 %v2013
    %3251 = vmatprep.subr.bf16.mxu0 %v2030
    %3252 = vmatpush1.bf16.msra.mxu0 %v2029
    %3253 = vmatprep.mubr.bf16.mxu0 %v1775
    %3254 = vmatmul.mubr.bf16.gmra.mrb[0].mxu0 %v1774
    %v3255 = vpop.f32.mrb[0].mxu0
    %v3256 = vadd.f32 %v2832, %v3255
    %v3257 = vpop.f32.mrb[0].mxu0
    %v3258 = vadd.f32 %v2836, %v3257
    %v3259 = vpop.f32.mrb[0].mxu0
    %v3260 = vpop.f32.mrb[0].mxu0
    %3261 = vdwg.mxu0
    %3262 = vmatprep.subr.bf16.mxu0 %v2046
    %3263 = vmatpush1.bf16.msra.mxu0 %v2045
    %3264 = vmatprep.subr.bf16.mxu0 %v2062
    %3265 = vmatpush1.bf16.msra.mxu0 %v2061
    %3266 = vmatprep.subr.bf16.mxu0 %v2078
    %3267 = vmatpush1.bf16.msra.mxu0 %v2077
    %3268 = vmatprep.subr.bf16.mxu0 %v2094
    %3269 = vmatpush1.bf16.msra.mxu0 %v2093
    %3270 = vmatprep.subr.bf16.mxu0 %v2110
    %3271 = vmatpush1.bf16.msra.mxu0 %v2109
    %3272 = vmatprep.subr.bf16.mxu0 %v2126
    %3273 = vmatpush1.bf16.msra.mxu0 %v2125
    %3274 = vmatprep.subr.bf16.mxu0 %v2142
    %3275 = vmatpush1.bf16.msra.mxu0 %v2141
    %3276 = vmatprep.subr.bf16.mxu0 %v2158
    %3277 = vmatpush1.bf16.msra.mxu0 %v2157
    %3278 = vmatprep.subr.bf16.mxu0 %v2174
    %3279 = vmatpush1.bf16.msra.mxu0 %v2173
    %3280 = vmatprep.subr.bf16.mxu0 %v2190
    %3281 = vmatpush1.bf16.msra.mxu0 %v2189
    %3282 = vmatprep.subr.bf16.mxu0 %v2206
    %3283 = vmatpush1.bf16.msra.mxu0 %v2205
    %3284 = vmatprep.subr.bf16.mxu0 %v2222
    %3285 = vmatpush1.bf16.msra.mxu0 %v2221
    %3286 = vmatprep.subr.bf16.mxu0 %v2238
    %3287 = vmatpush1.bf16.msra.mxu0 %v2237
    %3288 = vmatprep.subr.bf16.mxu0 %v2254
    %3289 = vmatpush1.bf16.msra.mxu0 %v2253
    %3290 = vmatprep.subr.bf16.mxu0 %v2270
    %3291 = vmatpush1.bf16.msra.mxu0 %v2269
    %3292 = vmatprep.subr.bf16.mxu0 %v2286
    %3293 = vmatpush1.bf16.msra.mxu0 %v2285
    %3294 = vmatprep.mubr.bf16.mxu0 %v1777
    %3295 = vmatmul.mubr.bf16.gmra.mrb[0].mxu0 %v1776
    %v3296 = vpop.f32.mrb[0].mxu0
    %v3297 = vadd.f32 %v3256, %v3296
    %v3298 = vpop.f32.mrb[0].mxu0
    %v3299 = vadd.f32 %v3258, %v3298
    %v3300 = vpop.f32.mrb[0].mxu0
    %v3301 = vpop.f32.mrb[0].mxu0
    %3302 = vdwg.mxu0
    %3303 = vmatprep.subr.bf16.mxu0 %v2302
    %3304 = vmatpush1.bf16.msra.mxu0 %v2301
    %3305 = vmatprep.subr.bf16.mxu0 %v2318
    %3306 = vmatpush1.bf16.msra.mxu0 %v2317
    %3307 = vmatprep.subr.bf16.mxu0 %v2334
    %3308 = vmatpush1.bf16.msra.mxu0 %v2333
    %3309 = vmatprep.subr.bf16.mxu0 %v2350
    %3310 = vmatpush1.bf16.msra.mxu0 %v2349
    %3311 = vmatprep.subr.bf16.mxu0 %v2366
    %3312 = vmatpush1.bf16.msra.mxu0 %v2365
    %3313 = vmatprep.subr.bf16.mxu0 %v2382
    %3314 = vmatpush1.bf16.msra.mxu0 %v2381
    %3315 = vmatprep.subr.bf16.mxu0 %v2398
    %3316 = vmatpush1.bf16.msra.mxu0 %v2397
    %3317 = vmatprep.subr.bf16.mxu0 %v2414
    %3318 = vmatpush1.bf16.msra.mxu0 %v2413
    %3319 = vmatprep.subr.bf16.mxu0 %v2430
    %3320 = vmatpush1.bf16.msra.mxu0 %v2429
    %3321 = vmatprep.subr.bf16.mxu0 %v2446
    %3322 = vmatpush1.bf16.msra.mxu0 %v2445
    %3323 = vmatprep.subr.bf16.mxu0 %v2462
    %3324 = vmatpush1.bf16.msra.mxu0 %v2461
    %3325 = vmatprep.subr.bf16.mxu0 %v2478
    %3326 = vmatpush1.bf16.msra.mxu0 %v2477
    %3327 = vmatprep.subr.bf16.mxu0 %v2494
    %3328 = vmatpush1.bf16.msra.mxu0 %v2493
    %3329 = vmatprep.subr.bf16.mxu0 %v2510
    %3330 = vmatpush1.bf16.msra.mxu0 %v2509
    %3331 = vmatprep.subr.bf16.mxu0 %v2526
    %3332 = vmatpush1.bf16.msra.mxu0 %v2525
    %3333 = vmatprep.subr.bf16.mxu0 %v2542
    %3334 = vmatpush1.bf16.msra.mxu0 %v2541
    %3335 = vmatprep.mubr.bf16.mxu0 %v1779
    %3336 = vmatmul.mubr.bf16.gmra.mrb[0].mxu0 %v1778
    %v3337 = vpop.f32.mrb[0].mxu0
    %v3338 = vadd.f32 %v3297, %v3337
    %v3339 = vpop.f32.mrb[0].mxu0
    %v3340 = vadd.f32 %v3299, %v3339
    %v3341 = vpop.f32.mrb[0].mxu0
    %v3342 = vpop.f32.mrb[0].mxu0
    %3343 = vdwg.mxu0
    %3344 = vmatprep.subr.bf16.mxu0 %v2558
    %3345 = vmatpush1.bf16.msra.mxu0 %v2557
    %3346 = vmatprep.subr.bf16.mxu0 %v2574
    %3347 = vmatpush1.bf16.msra.mxu0 %v2573
    %3348 = vmatprep.subr.bf16.mxu0 %v2590
    %3349 = vmatpush1.bf16.msra.mxu0 %v2589
    %3350 = vmatprep.subr.bf16.mxu0 %v2606
    %3351 = vmatpush1.bf16.msra.mxu0 %v2605
    %3352 = vmatprep.subr.bf16.mxu0 %v2622
    %3353 = vmatpush1.bf16.msra.mxu0 %v2621
    %3354 = vmatprep.subr.bf16.mxu0 %v2638
    %3355 = vmatpush1.bf16.msra.mxu0 %v2637
    %3356 = vmatprep.subr.bf16.mxu0 %v2654
    %3357 = vmatpush1.bf16.msra.mxu0 %v2653
    %3358 = vmatprep.subr.bf16.mxu0 %v2670
    %3359 = vmatpush1.bf16.msra.mxu0 %v2669
    %3360 = vmatprep.subr.bf16.mxu0 %v2686
    %3361 = vmatpush1.bf16.msra.mxu0 %v2685
    %3362 = vmatprep.subr.bf16.mxu0 %v2702
    %3363 = vmatpush1.bf16.msra.mxu0 %v2701
    %3364 = vmatprep.subr.bf16.mxu0 %v2718
    %3365 = vmatpush1.bf16.msra.mxu0 %v2717
    %3366 = vmatprep.subr.bf16.mxu0 %v2734
    %3367 = vmatpush1.bf16.msra.mxu0 %v2733
    %3368 = vmatprep.subr.bf16.mxu0 %v2750
    %3369 = vmatpush1.bf16.msra.mxu0 %v2749
    %3370 = vmatprep.subr.bf16.mxu0 %v2766
    %3371 = vmatpush1.bf16.msra.mxu0 %v2765
    %3372 = vmatprep.subr.bf16.mxu0 %v2782
    %3373 = vmatpush1.bf16.msra.mxu0 %v2781
    %3374 = vmatprep.subr.bf16.mxu0 %v2798
    %3375 = vmatpush1.bf16.msra.mxu0 %v2797
    %3376 = vmatprep.mubr.bf16.mxu0 %v1781
    %3377 = vmatmul.mubr.bf16.gmra.mrb[0].mxu0 %v1780
    %v3378 = vpop.f32.mrb[0].mxu0
    %v3379 = vadd.f32 %v3338, %v3378
    %v3380 = vpop.f32.mrb[0].mxu0
    %v3381 = vadd.f32 %v3340, %v3380
    %v3382 = vpop.f32.mrb[0].mxu0
    %v3383 = vpop.f32.mrb[0].mxu0
    %3384 = vdwg.mxu0
    %3385 = vmatprep.subr.bf16.mxu0 %v1792
    %3386 = vmatpush1.bf16.msra.mxu0 %v1791
    %3387 = vmatprep.subr.bf16.mxu0 %v1808
    %3388 = vmatpush1.bf16.msra.mxu0 %v1807
    %3389 = vmatprep.subr.bf16.mxu0 %v1824
    %3390 = vmatpush1.bf16.msra.mxu0 %v1823
    %3391 = vmatprep.subr.bf16.mxu0 %v1840
    %3392 = vmatpush1.bf16.msra.mxu0 %v1839
    %3393 = vmatprep.subr.bf16.mxu0 %v1856
    %3394 = vmatpush1.bf16.msra.mxu0 %v1855
    %3395 = vmatprep.subr.bf16.mxu0 %v1872
    %3396 = vmatpush1.bf16.msra.mxu0 %v1871
    %3397 = vmatprep.subr.bf16.mxu0 %v1888
    %3398 = vmatpush1.bf16.msra.mxu0 %v1887
    %3399 = vmatprep.subr.bf16.mxu0 %v1904
    %3400 = vmatpush1.bf16.msra.mxu0 %v1903
    %3401 = vmatprep.subr.bf16.mxu0 %v1920
    %3402 = vmatpush1.bf16.msra.mxu0 %v1919
    %3403 = vmatprep.subr.bf16.mxu0 %v1936
    %3404 = vmatpush1.bf16.msra.mxu0 %v1935
    %3405 = vmatprep.subr.bf16.mxu0 %v1952
    %3406 = vmatpush1.bf16.msra.mxu0 %v1951
    %3407 = vmatprep.subr.bf16.mxu0 %v1968
    %3408 = vmatpush1.bf16.msra.mxu0 %v1967
    %3409 = vmatprep.subr.bf16.mxu0 %v1984
    %3410 = vmatpush1.bf16.msra.mxu0 %v1983
    %3411 = vmatprep.subr.bf16.mxu0 %v2000
    %3412 = vmatpush1.bf16.msra.mxu0 %v1999
    %3413 = vmatprep.subr.bf16.mxu0 %v2016
    %3414 = vmatpush1.bf16.msra.mxu0 %v2015
    %3415 = vmatprep.subr.bf16.mxu0 %v2032
    %3416 = vmatpush1.bf16.msra.mxu0 %v2031
    %3417 = vmatprep.mubr.bf16.mxu0 %v1775
    %3418 = vmatmul.mubr.bf16.gmra.mrb[0].mxu0 %v1774
    %v3419 = vpop.f32.mrb[0].mxu0
    %v3420 = vadd.f32 %v2840, %v3419
    %v3421 = vpop.f32.mrb[0].mxu0
    %v3422 = vadd.f32 %v2844, %v3421
    %v3423 = vpop.f32.mrb[0].mxu0
    %v3424 = vpop.f32.mrb[0].mxu0
    %3425 = vdwg.mxu0
    %3426 = vmatprep.subr.bf16.mxu0 %v2048
    %3427 = vmatpush1.bf16.msra.mxu0 %v2047
    %3428 = vmatprep.subr.bf16.mxu0 %v2064
    %3429 = vmatpush1.bf16.msra.mxu0 %v2063
    %3430 = vmatprep.subr.bf16.mxu0 %v2080
    %3431 = vmatpush1.bf16.msra.mxu0 %v2079
    %3432 = vmatprep.subr.bf16.mxu0 %v2096
    %3433 = vmatpush1.bf16.msra.mxu0 %v2095
    %3434 = vmatprep.subr.bf16.mxu0 %v2112
    %3435 = vmatpush1.bf16.msra.mxu0 %v2111
    %3436 = vmatprep.subr.bf16.mxu0 %v2128
    %3437 = vmatpush1.bf16.msra.mxu0 %v2127
    %3438 = vmatprep.subr.bf16.mxu0 %v2144
    %3439 = vmatpush1.bf16.msra.mxu0 %v2143
    %3440 = vmatprep.subr.bf16.mxu0 %v2160
    %3441 = vmatpush1.bf16.msra.mxu0 %v2159
    %3442 = vmatprep.subr.bf16.mxu0 %v2176
    %3443 = vmatpush1.bf16.msra.mxu0 %v2175
    %3444 = vmatprep.subr.bf16.mxu0 %v2192
    %3445 = vmatpush1.bf16.msra.mxu0 %v2191
    %3446 = vmatprep.subr.bf16.mxu0 %v2208
    %3447 = vmatpush1.bf16.msra.mxu0 %v2207
    %3448 = vmatprep.subr.bf16.mxu0 %v2224
    %3449 = vmatpush1.bf16.msra.mxu0 %v2223
    %3450 = vmatprep.subr.bf16.mxu0 %v2240
    %3451 = vmatpush1.bf16.msra.mxu0 %v2239
    %3452 = vmatprep.subr.bf16.mxu0 %v2256
    %3453 = vmatpush1.bf16.msra.mxu0 %v2255
    %3454 = vmatprep.subr.bf16.mxu0 %v2272
    %3455 = vmatpush1.bf16.msra.mxu0 %v2271
    %3456 = vmatprep.subr.bf16.mxu0 %v2288
    %3457 = vmatpush1.bf16.msra.mxu0 %v2287
    %3458 = vmatprep.mubr.bf16.mxu0 %v1777
    %3459 = vmatmul.mubr.bf16.gmra.mrb[0].mxu0 %v1776
    %v3460 = vpop.f32.mrb[0].mxu0
    %v3461 = vadd.f32 %v3420, %v3460
    %v3462 = vpop.f32.mrb[0].mxu0
    %v3463 = vadd.f32 %v3422, %v3462
    %v3464 = vpop.f32.mrb[0].mxu0
    %v3465 = vpop.f32.mrb[0].mxu0
    %3466 = vdwg.mxu0
    %3467 = vmatprep.subr.bf16.mxu0 %v2304
    %3468 = vmatpush1.bf16.msra.mxu0 %v2303
    %3469 = vmatprep.subr.bf16.mxu0 %v2320
    %3470 = vmatpush1.bf16.msra.mxu0 %v2319
    %3471 = vmatprep.subr.bf16.mxu0 %v2336
    %3472 = vmatpush1.bf16.msra.mxu0 %v2335
    %3473 = vmatprep.subr.bf16.mxu0 %v2352
    %3474 = vmatpush1.bf16.msra.mxu0 %v2351
    %3475 = vmatprep.subr.bf16.mxu0 %v2368
    %3476 = vmatpush1.bf16.msra.mxu0 %v2367
    %3477 = vmatprep.subr.bf16.mxu0 %v2384
    %3478 = vmatpush1.bf16.msra.mxu0 %v2383
    %3479 = vmatprep.subr.bf16.mxu0 %v2400
    %3480 = vmatpush1.bf16.msra.mxu0 %v2399
    %3481 = vmatprep.subr.bf16.mxu0 %v2416
    %3482 = vmatpush1.bf16.msra.mxu0 %v2415
    %3483 = vmatprep.subr.bf16.mxu0 %v2432
    %3484 = vmatpush1.bf16.msra.mxu0 %v2431
    %3485 = vmatprep.subr.bf16.mxu0 %v2448
    %3486 = vmatpush1.bf16.msra.mxu0 %v2447
    %3487 = vmatprep.subr.bf16.mxu0 %v2464
    %3488 = vmatpush1.bf16.msra.mxu0 %v2463
    %3489 = vmatprep.subr.bf16.mxu0 %v2480
    %3490 = vmatpush1.bf16.msra.mxu0 %v2479
    %3491 = vmatprep.subr.bf16.mxu0 %v2496
    %3492 = vmatpush1.bf16.msra.mxu0 %v2495
    %3493 = vmatprep.subr.bf16.mxu0 %v2512
    %3494 = vmatpush1.bf16.msra.mxu0 %v2511
    %3495 = vmatprep.subr.bf16.mxu0 %v2528
    %3496 = vmatpush1.bf16.msra.mxu0 %v2527
    %3497 = vmatprep.subr.bf16.mxu0 %v2544
    %3498 = vmatpush1.bf16.msra.mxu0 %v2543
    %3499 = vmatprep.mubr.bf16.mxu0 %v1779
    %3500 = vmatmul.mubr.bf16.gmra.mrb[0].mxu0 %v1778
    %v3501 = vpop.f32.mrb[0].mxu0
    %v3502 = vadd.f32 %v3461, %v3501
    %v3503 = vpop.f32.mrb[0].mxu0
    %v3504 = vadd.f32 %v3463, %v3503
    %v3505 = vpop.f32.mrb[0].mxu0
    %v3506 = vpop.f32.mrb[0].mxu0
    %3507 = vdwg.mxu0
    %3508 = vmatprep.subr.bf16.mxu0 %v2560
    %3509 = vmatpush1.bf16.msra.mxu0 %v2559
    %3510 = vmatprep.subr.bf16.mxu0 %v2576
    %3511 = vmatpush1.bf16.msra.mxu0 %v2575
    %3512 = vmatprep.subr.bf16.mxu0 %v2592
    %3513 = vmatpush1.bf16.msra.mxu0 %v2591
    %3514 = vmatprep.subr.bf16.mxu0 %v2608
    %3515 = vmatpush1.bf16.msra.mxu0 %v2607
    %3516 = vmatprep.subr.bf16.mxu0 %v2624
    %3517 = vmatpush1.bf16.msra.mxu0 %v2623
    %3518 = vmatprep.subr.bf16.mxu0 %v2640
    %3519 = vmatpush1.bf16.msra.mxu0 %v2639
    %3520 = vmatprep.subr.bf16.mxu0 %v2656
    %3521 = vmatpush1.bf16.msra.mxu0 %v2655
    %3522 = vmatprep.subr.bf16.mxu0 %v2672
    %3523 = vmatpush1.bf16.msra.mxu0 %v2671
    %3524 = vmatprep.subr.bf16.mxu0 %v2688
    %3525 = vmatpush1.bf16.msra.mxu0 %v2687
    %3526 = vmatprep.subr.bf16.mxu0 %v2704
    %3527 = vmatpush1.bf16.msra.mxu0 %v2703
    %3528 = vmatprep.subr.bf16.mxu0 %v2720
    %3529 = vmatpush1.bf16.msra.mxu0 %v2719
    %3530 = vmatprep.subr.bf16.mxu0 %v2736
    %3531 = vmatpush1.bf16.msra.mxu0 %v2735
    %3532 = vmatprep.subr.bf16.mxu0 %v2752
    %3533 = vmatpush1.bf16.msra.mxu0 %v2751
    %3534 = vmatprep.subr.bf16.mxu0 %v2768
    %3535 = vmatpush1.bf16.msra.mxu0 %v2767
    %3536 = vmatprep.subr.bf16.mxu0 %v2784
    %3537 = vmatpush1.bf16.msra.mxu0 %v2783
    %3538 = vmatprep.subr.bf16.mxu0 %v2800
    %3539 = vmatpush1.bf16.msra.mxu0 %v2799
    %3540 = vmatprep.mubr.bf16.mxu0 %v1781
    %3541 = vmatmul.mubr.bf16.gmra.mrb[0].mxu0 %v1780
    %v3542 = vpop.f32.mrb[0].mxu0
    %v3543 = vadd.f32 %v3502, %v3542
    %v3544 = vpop.f32.mrb[0].mxu0
    %v3545 = vadd.f32 %v3504, %v3544
    %v3546 = vpop.f32.mrb[0].mxu0
    %v3547 = vpop.f32.mrb[0].mxu0
    %3548 = vdwg.mxu0
    %3549 = vmatprep.subr.bf16.mxu0 %v1794
    %3550 = vmatpush1.bf16.msra.mxu0 %v1793
    %3551 = vmatprep.subr.bf16.mxu0 %v1810
    %3552 = vmatpush1.bf16.msra.mxu0 %v1809
    %3553 = vmatprep.subr.bf16.mxu0 %v1826
    %3554 = vmatpush1.bf16.msra.mxu0 %v1825
    %3555 = vmatprep.subr.bf16.mxu0 %v1842
    %3556 = vmatpush1.bf16.msra.mxu0 %v1841
    %3557 = vmatprep.subr.bf16.mxu0 %v1858
    %3558 = vmatpush1.bf16.msra.mxu0 %v1857
    %3559 = vmatprep.subr.bf16.mxu0 %v1874
    %3560 = vmatpush1.bf16.msra.mxu0 %v1873
    %3561 = vmatprep.subr.bf16.mxu0 %v1890
    %3562 = vmatpush1.bf16.msra.mxu0 %v1889
    %3563 = vmatprep.subr.bf16.mxu0 %v1906
    %3564 = vmatpush1.bf16.msra.mxu0 %v1905
    %3565 = vmatprep.subr.bf16.mxu0 %v1922
    %3566 = vmatpush1.bf16.msra.mxu0 %v1921
    %3567 = vmatprep.subr.bf16.mxu0 %v1938
    %3568 = vmatpush1.bf16.msra.mxu0 %v1937
    %3569 = vmatprep.subr.bf16.mxu0 %v1954
    %3570 = vmatpush1.bf16.msra.mxu0 %v1953
    %3571 = vmatprep.subr.bf16.mxu0 %v1970
    %3572 = vmatpush1.bf16.msra.mxu0 %v1969
    %3573 = vmatprep.subr.bf16.mxu0 %v1986
    %3574 = vmatpush1.bf16.msra.mxu0 %v1985
    %3575 = vmatprep.subr.bf16.mxu0 %v2002
    %3576 = vmatpush1.bf16.msra.mxu0 %v2001
    %3577 = vmatprep.subr.bf16.mxu0 %v2018
    %3578 = vmatpush1.bf16.msra.mxu0 %v2017
    %3579 = vmatprep.subr.bf16.mxu0 %v2034
    %3580 = vmatpush1.bf16.msra.mxu0 %v2033
    %3581 = vmatprep.mubr.bf16.mxu0 %v1775
    %3582 = vmatmul.mubr.bf16.gmra.mrb[0].mxu0 %v1774
    %v3583 = vpop.f32.mrb[0].mxu0
    %v3584 = vadd.f32 %v2848, %v3583
    %v3585 = vpop.f32.mrb[0].mxu0
    %v3586 = vadd.f32 %v2852, %v3585
    %v3587 = vpop.f32.mrb[0].mxu0
    %v3588 = vpop.f32.mrb[0].mxu0
    %3589 = vdwg.mxu0
    %3590 = vmatprep.subr.bf16.mxu0 %v2050
    %3591 = vmatpush1.bf16.msra.mxu0 %v2049
    %3592 = vmatprep.subr.bf16.mxu0 %v2066
    %3593 = vmatpush1.bf16.msra.mxu0 %v2065
    %3594 = vmatprep.subr.bf16.mxu0 %v2082
    %3595 = vmatpush1.bf16.msra.mxu0 %v2081
    %3596 = vmatprep.subr.bf16.mxu0 %v2098
    %3597 = vmatpush1.bf16.msra.mxu0 %v2097
    %3598 = vmatprep.subr.bf16.mxu0 %v2114
    %3599 = vmatpush1.bf16.msra.mxu0 %v2113
    %3600 = vmatprep.subr.bf16.mxu0 %v2130
    %3601 = vmatpush1.bf16.msra.mxu0 %v2129
    %3602 = vmatprep.subr.bf16.mxu0 %v2146
    %3603 = vmatpush1.bf16.msra.mxu0 %v2145
    %3604 = vmatprep.subr.bf16.mxu0 %v2162
    %3605 = vmatpush1.bf16.msra.mxu0 %v2161
    %3606 = vmatprep.subr.bf16.mxu0 %v2178
    %3607 = vmatpush1.bf16.msra.mxu0 %v2177
    %3608 = vmatprep.subr.bf16.mxu0 %v2194
    %3609 = vmatpush1.bf16.msra.mxu0 %v2193
    %3610 = vmatprep.subr.bf16.mxu0 %v2210
    %3611 = vmatpush1.bf16.msra.mxu0 %v2209
    %3612 = vmatprep.subr.bf16.mxu0 %v2226
    %3613 = vmatpush1.bf16.msra.mxu0 %v2225
    %3614 = vmatprep.subr.bf16.mxu0 %v2242
    %3615 = vmatpush1.bf16.msra.mxu0 %v2241
    %3616 = vmatprep.subr.bf16.mxu0 %v2258
    %3617 = vmatpush1.bf16.msra.mxu0 %v2257
    %3618 = vmatprep.subr.bf16.mxu0 %v2274
    %3619 = vmatpush1.bf16.msra.mxu0 %v2273
    %3620 = vmatprep.subr.bf16.mxu0 %v2290
    %3621 = vmatpush1.bf16.msra.mxu0 %v2289
    %3622 = vmatprep.mubr.bf16.mxu0 %v1777
    %3623 = vmatmul.mubr.bf16.gmra.mrb[0].mxu0 %v1776
    %v3624 = vpop.f32.mrb[0].mxu0
    %v3625 = vadd.f32 %v3584, %v3624
    %v3626 = vpop.f32.mrb[0].mxu0
    %v3627 = vadd.f32 %v3586, %v3626
    %v3628 = vpop.f32.mrb[0].mxu0
    %v3629 = vpop.f32.mrb[0].mxu0
    %3630 = vdwg.mxu0
    %3631 = vmatprep.subr.bf16.mxu0 %v2306
    %3632 = vmatpush1.bf16.msra.mxu0 %v2305
    %3633 = vmatprep.subr.bf16.mxu0 %v2322
    %3634 = vmatpush1.bf16.msra.mxu0 %v2321
    %3635 = vmatprep.subr.bf16.mxu0 %v2338
    %3636 = vmatpush1.bf16.msra.mxu0 %v2337
    %3637 = vmatprep.subr.bf16.mxu0 %v2354
    %3638 = vmatpush1.bf16.msra.mxu0 %v2353
    %3639 = vmatprep.subr.bf16.mxu0 %v2370
    %3640 = vmatpush1.bf16.msra.mxu0 %v2369
    %3641 = vmatprep.subr.bf16.mxu0 %v2386
    %3642 = vmatpush1.bf16.msra.mxu0 %v2385
    %3643 = vmatprep.subr.bf16.mxu0 %v2402
    %3644 = vmatpush1.bf16.msra.mxu0 %v2401
    %3645 = vmatprep.subr.bf16.mxu0 %v2418
    %3646 = vmatpush1.bf16.msra.mxu0 %v2417
    %3647 = vmatprep.subr.bf16.mxu0 %v2434
    %3648 = vmatpush1.bf16.msra.mxu0 %v2433
    %3649 = vmatprep.subr.bf16.mxu0 %v2450
    %3650 = vmatpush1.bf16.msra.mxu0 %v2449
    %3651 = vmatprep.subr.bf16.mxu0 %v2466
    %3652 = vmatpush1.bf16.msra.mxu0 %v2465
    %3653 = vmatprep.subr.bf16.mxu0 %v2482
    %3654 = vmatpush1.bf16.msra.mxu0 %v2481
    %3655 = vmatprep.subr.bf16.mxu0 %v2498
    %3656 = vmatpush1.bf16.msra.mxu0 %v2497
    %3657 = vmatprep.subr.bf16.mxu0 %v2514
    %3658 = vmatpush1.bf16.msra.mxu0 %v2513
    %3659 = vmatprep.subr.bf16.mxu0 %v2530
    %3660 = vmatpush1.bf16.msra.mxu0 %v2529
    %3661 = vmatprep.subr.bf16.mxu0 %v2546
    %3662 = vmatpush1.bf16.msra.mxu0 %v2545
    %3663 = vmatprep.mubr.bf16.mxu0 %v1779
    %3664 = vmatmul.mubr.bf16.gmra.mrb[0].mxu0 %v1778
    %v3665 = vpop.f32.mrb[0].mxu0
    %v3666 = vadd.f32 %v3625, %v3665
    %v3667 = vpop.f32.mrb[0].mxu0
    %v3668 = vadd.f32 %v3627, %v3667
    %v3669 = vpop.f32.mrb[0].mxu0
    %v3670 = vpop.f32.mrb[0].mxu0
    %3671 = vdwg.mxu0
    %3672 = vmatprep.subr.bf16.mxu0 %v2562
    %3673 = vmatpush1.bf16.msra.mxu0 %v2561
    %3674 = vmatprep.subr.bf16.mxu0 %v2578
    %3675 = vmatpush1.bf16.msra.mxu0 %v2577
    %3676 = vmatprep.subr.bf16.mxu0 %v2594
    %3677 = vmatpush1.bf16.msra.mxu0 %v2593
    %3678 = vmatprep.subr.bf16.mxu0 %v2610
    %3679 = vmatpush1.bf16.msra.mxu0 %v2609
    %3680 = vmatprep.subr.bf16.mxu0 %v2626
    %3681 = vmatpush1.bf16.msra.mxu0 %v2625
    %3682 = vmatprep.subr.bf16.mxu0 %v2642
    %3683 = vmatpush1.bf16.msra.mxu0 %v2641
    %3684 = vmatprep.subr.bf16.mxu0 %v2658
    %3685 = vmatpush1.bf16.msra.mxu0 %v2657
    %3686 = vmatprep.subr.bf16.mxu0 %v2674
    %3687 = vmatpush1.bf16.msra.mxu0 %v2673
    %3688 = vmatprep.subr.bf16.mxu0 %v2690
    %3689 = vmatpush1.bf16.msra.mxu0 %v2689
    %3690 = vmatprep.subr.bf16.mxu0 %v2706
    %3691 = vmatpush1.bf16.msra.mxu0 %v2705
    %3692 = vmatprep.subr.bf16.mxu0 %v2722
    %3693 = vmatpush1.bf16.msra.mxu0 %v2721
    %3694 = vmatprep.subr.bf16.mxu0 %v2738
    %3695 = vmatpush1.bf16.msra.mxu0 %v2737
    %3696 = vmatprep.subr.bf16.mxu0 %v2754
    %3697 = vmatpush1.bf16.msra.mxu0 %v2753
    %3698 = vmatprep.subr.bf16.mxu0 %v2770
    %3699 = vmatpush1.bf16.msra.mxu0 %v2769
    %3700 = vmatprep.subr.bf16.mxu0 %v2786
    %3701 = vmatpush1.bf16.msra.mxu0 %v2785
    %3702 = vmatprep.subr.bf16.mxu0 %v2802
    %3703 = vmatpush1.bf16.msra.mxu0 %v2801
    %3704 = vmatprep.mubr.bf16.mxu0 %v1781
    %3705 = vmatmul.mubr.bf16.gmra.mrb[0].mxu0 %v1780
    %v3706 = vpop.f32.mrb[0].mxu0
    %v3707 = vadd.f32 %v3666, %v3706
    %v3708 = vpop.f32.mrb[0].mxu0
    %v3709 = vadd.f32 %v3668, %v3708
    %v3710 = vpop.f32.mrb[0].mxu0
    %v3711 = vpop.f32.mrb[0].mxu0
    %3712 = vdwg.mxu0
    %3713 = vmatprep.subr.bf16.mxu0 %v1796
    %3714 = vmatpush1.bf16.msra.mxu0 %v1795
    %3715 = vmatprep.subr.bf16.mxu0 %v1812
    %3716 = vmatpush1.bf16.msra.mxu0 %v1811
    %3717 = vmatprep.subr.bf16.mxu0 %v1828
    %3718 = vmatpush1.bf16.msra.mxu0 %v1827
    %3719 = vmatprep.subr.bf16.mxu0 %v1844
    %3720 = vmatpush1.bf16.msra.mxu0 %v1843
    %3721 = vmatprep.subr.bf16.mxu0 %v1860
    %3722 = vmatpush1.bf16.msra.mxu0 %v1859
    %3723 = vmatprep.subr.bf16.mxu0 %v1876
    %3724 = vmatpush1.bf16.msra.mxu0 %v1875
    %3725 = vmatprep.subr.bf16.mxu0 %v1892
    %3726 = vmatpush1.bf16.msra.mxu0 %v1891
    %3727 = vmatprep.subr.bf16.mxu0 %v1908
    %3728 = vmatpush1.bf16.msra.mxu0 %v1907
    %3729 = vmatprep.subr.bf16.mxu0 %v1924
    %3730 = vmatpush1.bf16.msra.mxu0 %v1923
    %3731 = vmatprep.subr.bf16.mxu0 %v1940
    %3732 = vmatpush1.bf16.msra.mxu0 %v1939
    %3733 = vmatprep.subr.bf16.mxu0 %v1956
    %3734 = vmatpush1.bf16.msra.mxu0 %v1955
    %3735 = vmatprep.subr.bf16.mxu0 %v1972
    %3736 = vmatpush1.bf16.msra.mxu0 %v1971
    %3737 = vmatprep.subr.bf16.mxu0 %v1988
    %3738 = vmatpush1.bf16.msra.mxu0 %v1987
    %3739 = vmatprep.subr.bf16.mxu0 %v2004
    %3740 = vmatpush1.bf16.msra.mxu0 %v2003
    %3741 = vmatprep.subr.bf16.mxu0 %v2020
    %3742 = vmatpush1.bf16.msra.mxu0 %v2019
    %3743 = vmatprep.subr.bf16.mxu0 %v2036
    %3744 = vmatpush1.bf16.msra.mxu0 %v2035
    %3745 = vmatprep.mubr.bf16.mxu0 %v1775
    %3746 = vmatmul.mubr.bf16.gmra.mrb[0].mxu0 %v1774
    %v3747 = vpop.f32.mrb[0].mxu0
    %v3748 = vadd.f32 %v2856, %v3747
    %v3749 = vpop.f32.mrb[0].mxu0
    %v3750 = vadd.f32 %v2860, %v3749
    %v3751 = vpop.f32.mrb[0].mxu0
    %v3752 = vpop.f32.mrb[0].mxu0
    %3753 = vdwg.mxu0
    %3754 = vmatprep.subr.bf16.mxu0 %v2052
    %3755 = vmatpush1.bf16.msra.mxu0 %v2051
    %3756 = vmatprep.subr.bf16.mxu0 %v2068
    %3757 = vmatpush1.bf16.msra.mxu0 %v2067
    %3758 = vmatprep.subr.bf16.mxu0 %v2084
    %3759 = vmatpush1.bf16.msra.mxu0 %v2083
    %3760 = vmatprep.subr.bf16.mxu0 %v2100
    %3761 = vmatpush1.bf16.msra.mxu0 %v2099
    %3762 = vmatprep.subr.bf16.mxu0 %v2116
    %3763 = vmatpush1.bf16.msra.mxu0 %v2115
    %3764 = vmatprep.subr.bf16.mxu0 %v2132
    %3765 = vmatpush1.bf16.msra.mxu0 %v2131
    %3766 = vmatprep.subr.bf16.mxu0 %v2148
    %3767 = vmatpush1.bf16.msra.mxu0 %v2147
    %3768 = vmatprep.subr.bf16.mxu0 %v2164
    %3769 = vmatpush1.bf16.msra.mxu0 %v2163
    %3770 = vmatprep.subr.bf16.mxu0 %v2180
    %3771 = vmatpush1.bf16.msra.mxu0 %v2179
    %3772 = vmatprep.subr.bf16.mxu0 %v2196
    %3773 = vmatpush1.bf16.msra.mxu0 %v2195
    %3774 = vmatprep.subr.bf16.mxu0 %v2212
    %3775 = vmatpush1.bf16.msra.mxu0 %v2211
    %3776 = vmatprep.subr.bf16.mxu0 %v2228
    %3777 = vmatpush1.bf16.msra.mxu0 %v2227
    %3778 = vmatprep.subr.bf16.mxu0 %v2244
    %3779 = vmatpush1.bf16.msra.mxu0 %v2243
    %3780 = vmatprep.subr.bf16.mxu0 %v2260
    %3781 = vmatpush1.bf16.msra.mxu0 %v2259
    %3782 = vmatprep.subr.bf16.mxu0 %v2276
    %3783 = vmatpush1.bf16.msra.mxu0 %v2275
    %3784 = vmatprep.subr.bf16.mxu0 %v2292
    %3785 = vmatpush1.bf16.msra.mxu0 %v2291
    %3786 = vmatprep.mubr.bf16.mxu0 %v1777
    %3787 = vmatmul.mubr.bf16.gmra.mrb[0].mxu0 %v1776
    %v3788 = vpop.f32.mrb[0].mxu0
    %v3789 = vadd.f32 %v3748, %v3788
    %v3790 = vpop.f32.mrb[0].mxu0
    %v3791 = vadd.f32 %v3750, %v3790
    %v3792 = vpop.f32.mrb[0].mxu0
    %v3793 = vpop.f32.mrb[0].mxu0
    %3794 = vdwg.mxu0
    %3795 = vmatprep.subr.bf16.mxu0 %v2308
    %3796 = vmatpush1.bf16.msra.mxu0 %v2307
    %3797 = vmatprep.subr.bf16.mxu0 %v2324
    %3798 = vmatpush1.bf16.msra.mxu0 %v2323
    %3799 = vmatprep.subr.bf16.mxu0 %v2340
    %3800 = vmatpush1.bf16.msra.mxu0 %v2339
    %3801 = vmatprep.subr.bf16.mxu0 %v2356
    %3802 = vmatpush1.bf16.msra.mxu0 %v2355
    %3803 = vmatprep.subr.bf16.mxu0 %v2372
    %3804 = vmatpush1.bf16.msra.mxu0 %v2371
    %3805 = vmatprep.subr.bf16.mxu0 %v2388
    %3806 = vmatpush1.bf16.msra.mxu0 %v2387
    %3807 = vmatprep.subr.bf16.mxu0 %v2404
    %3808 = vmatpush1.bf16.msra.mxu0 %v2403
    %3809 = vmatprep.subr.bf16.mxu0 %v2420
    %3810 = vmatpush1.bf16.msra.mxu0 %v2419
    %3811 = vmatprep.subr.bf16.mxu0 %v2436
    %3812 = vmatpush1.bf16.msra.mxu0 %v2435
    %3813 = vmatprep.subr.bf16.mxu0 %v2452
    %3814 = vmatpush1.bf16.msra.mxu0 %v2451
    %3815 = vmatprep.subr.bf16.mxu0 %v2468
    %3816 = vmatpush1.bf16.msra.mxu0 %v2467
    %3817 = vmatprep.subr.bf16.mxu0 %v2484
    %3818 = vmatpush1.bf16.msra.mxu0 %v2483
    %3819 = vmatprep.subr.bf16.mxu0 %v2500
    %3820 = vmatpush1.bf16.msra.mxu0 %v2499
    %3821 = vmatprep.subr.bf16.mxu0 %v2516
    %3822 = vmatpush1.bf16.msra.mxu0 %v2515
    %3823 = vmatprep.subr.bf16.mxu0 %v2532
    %3824 = vmatpush1.bf16.msra.mxu0 %v2531
    %3825 = vmatprep.subr.bf16.mxu0 %v2548
    %3826 = vmatpush1.bf16.msra.mxu0 %v2547
    %3827 = vmatprep.mubr.bf16.mxu0 %v1779
    %3828 = vmatmul.mubr.bf16.gmra.mrb[0].mxu0 %v1778
    %v3829 = vpop.f32.mrb[0].mxu0
    %v3830 = vadd.f32 %v3789, %v3829
    %v3831 = vpop.f32.mrb[0].mxu0
    %v3832 = vadd.f32 %v3791, %v3831
    %v3833 = vpop.f32.mrb[0].mxu0
    %v3834 = vpop.f32.mrb[0].mxu0
    %3835 = vdwg.mxu0
    %3836 = vmatprep.subr.bf16.mxu0 %v2564
    %3837 = vmatpush1.bf16.msra.mxu0 %v2563
    %3838 = vmatprep.subr.bf16.mxu0 %v2580
    %3839 = vmatpush1.bf16.msra.mxu0 %v2579
    %3840 = vmatprep.subr.bf16.mxu0 %v2596
    %3841 = vmatpush1.bf16.msra.mxu0 %v2595
    %3842 = vmatprep.subr.bf16.mxu0 %v2612
    %3843 = vmatpush1.bf16.msra.mxu0 %v2611
    %3844 = vmatprep.subr.bf16.mxu0 %v2628
    %3845 = vmatpush1.bf16.msra.mxu0 %v2627
    %3846 = vmatprep.subr.bf16.mxu0 %v2644
    %3847 = vmatpush1.bf16.msra.mxu0 %v2643
    %3848 = vmatprep.subr.bf16.mxu0 %v2660
    %3849 = vmatpush1.bf16.msra.mxu0 %v2659
    %3850 = vmatprep.subr.bf16.mxu0 %v2676
    %3851 = vmatpush1.bf16.msra.mxu0 %v2675
    %3852 = vmatprep.subr.bf16.mxu0 %v2692
    %3853 = vmatpush1.bf16.msra.mxu0 %v2691
    %3854 = vmatprep.subr.bf16.mxu0 %v2708
    %3855 = vmatpush1.bf16.msra.mxu0 %v2707
    %3856 = vmatprep.subr.bf16.mxu0 %v2724
    %3857 = vmatpush1.bf16.msra.mxu0 %v2723
    %3858 = vmatprep.subr.bf16.mxu0 %v2740
    %3859 = vmatpush1.bf16.msra.mxu0 %v2739
    %3860 = vmatprep.subr.bf16.mxu0 %v2756
    %3861 = vmatpush1.bf16.msra.mxu0 %v2755
    %3862 = vmatprep.subr.bf16.mxu0 %v2772
    %3863 = vmatpush1.bf16.msra.mxu0 %v2771
    %3864 = vmatprep.subr.bf16.mxu0 %v2788
    %3865 = vmatpush1.bf16.msra.mxu0 %v2787
    %3866 = vmatprep.subr.bf16.mxu0 %v2804
    %3867 = vmatpush1.bf16.msra.mxu0 %v2803
    %3868 = vmatprep.mubr.bf16.mxu0 %v1781
    %3869 = vmatmul.mubr.bf16.gmra.mrb[0].mxu0 %v1780
    %v3870 = vpop.f32.mrb[0].mxu0
    %v3871 = vadd.f32 %v3830, %v3870
    %v3872 = vpop.f32.mrb[0].mxu0
    %v3873 = vadd.f32 %v3832, %v3872
    %v3874 = vpop.f32.mrb[0].mxu0
    %v3875 = vpop.f32.mrb[0].mxu0
    %3876 = vdwg.mxu0
    %3877 = vmatprep.subr.bf16.mxu0 %v1798
    %3878 = vmatpush1.bf16.msra.mxu0 %v1797
    %3879 = vmatprep.subr.bf16.mxu0 %v1814
    %3880 = vmatpush1.bf16.msra.mxu0 %v1813
    %3881 = vmatprep.subr.bf16.mxu0 %v1830
    %3882 = vmatpush1.bf16.msra.mxu0 %v1829
    %3883 = vmatprep.subr.bf16.mxu0 %v1846
    %3884 = vmatpush1.bf16.msra.mxu0 %v1845
    %3885 = vmatprep.subr.bf16.mxu0 %v1862
    %3886 = vmatpush1.bf16.msra.mxu0 %v1861
    %3887 = vmatprep.subr.bf16.mxu0 %v1878
    %3888 = vmatpush1.bf16.msra.mxu0 %v1877
    %3889 = vmatprep.subr.bf16.mxu0 %v1894
    %3890 = vmatpush1.bf16.msra.mxu0 %v1893
    %3891 = vmatprep.subr.bf16.mxu0 %v1910
    %3892 = vmatpush1.bf16.msra.mxu0 %v1909
    %3893 = vmatprep.subr.bf16.mxu0 %v1926
    %3894 = vmatpush1.bf16.msra.mxu0 %v1925
    %3895 = vmatprep.subr.bf16.mxu0 %v1942
    %3896 = vmatpush1.bf16.msra.mxu0 %v1941
    %3897 = vmatprep.subr.bf16.mxu0 %v1958
    %3898 = vmatpush1.bf16.msra.mxu0 %v1957
    %3899 = vmatprep.subr.bf16.mxu0 %v1974
    %3900 = vmatpush1.bf16.msra.mxu0 %v1973
    %3901 = vmatprep.subr.bf16.mxu0 %v1990
    %3902 = vmatpush1.bf16.msra.mxu0 %v1989
    %3903 = vmatprep.subr.bf16.mxu0 %v2006
    %3904 = vmatpush1.bf16.msra.mxu0 %v2005
    %3905 = vmatprep.subr.bf16.mxu0 %v2022
    %3906 = vmatpush1.bf16.msra.mxu0 %v2021
    %3907 = vmatprep.subr.bf16.mxu0 %v2038
    %3908 = vmatpush1.bf16.msra.mxu0 %v2037
    %3909 = vmatprep.mubr.bf16.mxu0 %v1775
    %3910 = vmatmul.mubr.bf16.gmra.mrb[0].mxu0 %v1774
    %v3911 = vpop.f32.mrb[0].mxu0
    %v3912 = vadd.f32 %v2864, %v3911
    %v3913 = vpop.f32.mrb[0].mxu0
    %v3914 = vadd.f32 %v2868, %v3913
    %v3915 = vpop.f32.mrb[0].mxu0
    %v3916 = vpop.f32.mrb[0].mxu0
    %3917 = vdwg.mxu0
    %3918 = vmatprep.subr.bf16.mxu0 %v2054
    %3919 = vmatpush1.bf16.msra.mxu0 %v2053
    %3920 = vmatprep.subr.bf16.mxu0 %v2070
    %3921 = vmatpush1.bf16.msra.mxu0 %v2069
    %3922 = vmatprep.subr.bf16.mxu0 %v2086
    %3923 = vmatpush1.bf16.msra.mxu0 %v2085
    %3924 = vmatprep.subr.bf16.mxu0 %v2102
    %3925 = vmatpush1.bf16.msra.mxu0 %v2101
    %3926 = vmatprep.subr.bf16.mxu0 %v2118
    %3927 = vmatpush1.bf16.msra.mxu0 %v2117
    %3928 = vmatprep.subr.bf16.mxu0 %v2134
    %3929 = vmatpush1.bf16.msra.mxu0 %v2133
    %3930 = vmatprep.subr.bf16.mxu0 %v2150
    %3931 = vmatpush1.bf16.msra.mxu0 %v2149
    %3932 = vmatprep.subr.bf16.mxu0 %v2166
    %3933 = vmatpush1.bf16.msra.mxu0 %v2165
    %3934 = vmatprep.subr.bf16.mxu0 %v2182
    %3935 = vmatpush1.bf16.msra.mxu0 %v2181
    %3936 = vmatprep.subr.bf16.mxu0 %v2198
    %3937 = vmatpush1.bf16.msra.mxu0 %v2197
    %3938 = vmatprep.subr.bf16.mxu0 %v2214
    %3939 = vmatpush1.bf16.msra.mxu0 %v2213
    %3940 = vmatprep.subr.bf16.mxu0 %v2230
    %3941 = vmatpush1.bf16.msra.mxu0 %v2229
    %3942 = vmatprep.subr.bf16.mxu0 %v2246
    %3943 = vmatpush1.bf16.msra.mxu0 %v2245
    %3944 = vmatprep.subr.bf16.mxu0 %v2262
    %3945 = vmatpush1.bf16.msra.mxu0 %v2261
    %3946 = vmatprep.subr.bf16.mxu0 %v2278
    %3947 = vmatpush1.bf16.msra.mxu0 %v2277
    %3948 = vmatprep.subr.bf16.mxu0 %v2294
    %3949 = vmatpush1.bf16.msra.mxu0 %v2293
    %3950 = vmatprep.mubr.bf16.mxu0 %v1777
    %3951 = vmatmul.mubr.bf16.gmra.mrb[0].mxu0 %v1776
    %v3952 = vpop.f32.mrb[0].mxu0
    %v3953 = vadd.f32 %v3912, %v3952
    %v3954 = vpop.f32.mrb[0].mxu0
    %v3955 = vadd.f32 %v3914, %v3954
    %v3956 = vpop.f32.mrb[0].mxu0
    %v3957 = vpop.f32.mrb[0].mxu0
    %3958 = vdwg.mxu0
    %3959 = vmatprep.subr.bf16.mxu0 %v2310
    %3960 = vmatpush1.bf16.msra.mxu0 %v2309
    %3961 = vmatprep.subr.bf16.mxu0 %v2326
    %3962 = vmatpush1.bf16.msra.mxu0 %v2325
    %3963 = vmatprep.subr.bf16.mxu0 %v2342
    %3964 = vmatpush1.bf16.msra.mxu0 %v2341
    %3965 = vmatprep.subr.bf16.mxu0 %v2358
    %3966 = vmatpush1.bf16.msra.mxu0 %v2357
    %3967 = vmatprep.subr.bf16.mxu0 %v2374
    %3968 = vmatpush1.bf16.msra.mxu0 %v2373
    %3969 = vmatprep.subr.bf16.mxu0 %v2390
    %3970 = vmatpush1.bf16.msra.mxu0 %v2389
    %3971 = vmatprep.subr.bf16.mxu0 %v2406
    %3972 = vmatpush1.bf16.msra.mxu0 %v2405
    %3973 = vmatprep.subr.bf16.mxu0 %v2422
    %3974 = vmatpush1.bf16.msra.mxu0 %v2421
    %3975 = vmatprep.subr.bf16.mxu0 %v2438
    %3976 = vmatpush1.bf16.msra.mxu0 %v2437
    %3977 = vmatprep.subr.bf16.mxu0 %v2454
    %3978 = vmatpush1.bf16.msra.mxu0 %v2453
    %3979 = vmatprep.subr.bf16.mxu0 %v2470
    %3980 = vmatpush1.bf16.msra.mxu0 %v2469
    %3981 = vmatprep.subr.bf16.mxu0 %v2486
    %3982 = vmatpush1.bf16.msra.mxu0 %v2485
    %3983 = vmatprep.subr.bf16.mxu0 %v2502
    %3984 = vmatpush1.bf16.msra.mxu0 %v2501
    %3985 = vmatprep.subr.bf16.mxu0 %v2518
    %3986 = vmatpush1.bf16.msra.mxu0 %v2517
    %3987 = vmatprep.subr.bf16.mxu0 %v2534
    %3988 = vmatpush1.bf16.msra.mxu0 %v2533
    %3989 = vmatprep.subr.bf16.mxu0 %v2550
    %3990 = vmatpush1.bf16.msra.mxu0 %v2549
    %3991 = vmatprep.mubr.bf16.mxu0 %v1779
    %3992 = vmatmul.mubr.bf16.gmra.mrb[0].mxu0 %v1778
    %v3993 = vpop.f32.mrb[0].mxu0
    %v3994 = vadd.f32 %v3953, %v3993
    %v3995 = vpop.f32.mrb[0].mxu0
    %v3996 = vadd.f32 %v3955, %v3995
    %v3997 = vpop.f32.mrb[0].mxu0
    %v3998 = vpop.f32.mrb[0].mxu0
    %3999 = vdwg.mxu0
    %4000 = vmatprep.subr.bf16.mxu0 %v2566
    %4001 = vmatpush1.bf16.msra.mxu0 %v2565
    %4002 = vmatprep.subr.bf16.mxu0 %v2582
    %4003 = vmatpush1.bf16.msra.mxu0 %v2581
    %4004 = vmatprep.subr.bf16.mxu0 %v2598
    %4005 = vmatpush1.bf16.msra.mxu0 %v2597
    %4006 = vmatprep.subr.bf16.mxu0 %v2614
    %4007 = vmatpush1.bf16.msra.mxu0 %v2613
    %4008 = vmatprep.subr.bf16.mxu0 %v2630
    %4009 = vmatpush1.bf16.msra.mxu0 %v2629
    %4010 = vmatprep.subr.bf16.mxu0 %v2646
    %4011 = vmatpush1.bf16.msra.mxu0 %v2645
    %4012 = vmatprep.subr.bf16.mxu0 %v2662
    %4013 = vmatpush1.bf16.msra.mxu0 %v2661
    %4014 = vmatprep.subr.bf16.mxu0 %v2678
    %4015 = vmatpush1.bf16.msra.mxu0 %v2677
    %4016 = vmatprep.subr.bf16.mxu0 %v2694
    %4017 = vmatpush1.bf16.msra.mxu0 %v2693
    %4018 = vmatprep.subr.bf16.mxu0 %v2710
    %4019 = vmatpush1.bf16.msra.mxu0 %v2709
    %4020 = vmatprep.subr.bf16.mxu0 %v2726
    %4021 = vmatpush1.bf16.msra.mxu0 %v2725
    %4022 = vmatprep.subr.bf16.mxu0 %v2742
    %4023 = vmatpush1.bf16.msra.mxu0 %v2741
    %4024 = vmatprep.subr.bf16.mxu0 %v2758
    %4025 = vmatpush1.bf16.msra.mxu0 %v2757
    %4026 = vmatprep.subr.bf16.mxu0 %v2774
    %4027 = vmatpush1.bf16.msra.mxu0 %v2773
    %4028 = vmatprep.subr.bf16.mxu0 %v2790
    %4029 = vmatpush1.bf16.msra.mxu0 %v2789
    %4030 = vmatprep.subr.bf16.mxu0 %v2806
    %4031 = vmatpush1.bf16.msra.mxu0 %v2805
    %4032 = vmatprep.mubr.bf16.mxu0 %v1781
    %4033 = vmatmul.mubr.bf16.gmra.mrb[0].mxu0 %v1780
    %v4034 = vpop.f32.mrb[0].mxu0
    %v4035 = vadd.f32 %v3994, %v4034
    %v4036 = vpop.f32.mrb[0].mxu0
    %v4037 = vadd.f32 %v3996, %v4036
    %v4038 = vpop.f32.mrb[0].mxu0
    %v4039 = vpop.f32.mrb[0].mxu0
    %4040 = vdwg.mxu0
    %4041 = vmatprep.subr.bf16.mxu0 %v1800
    %4042 = vmatpush1.bf16.msra.mxu0 %v1799
    %4043 = vmatprep.subr.bf16.mxu0 %v1816
    %4044 = vmatpush1.bf16.msra.mxu0 %v1815
    %4045 = vmatprep.subr.bf16.mxu0 %v1832
    %4046 = vmatpush1.bf16.msra.mxu0 %v1831
    %4047 = vmatprep.subr.bf16.mxu0 %v1848
    %4048 = vmatpush1.bf16.msra.mxu0 %v1847
    %4049 = vmatprep.subr.bf16.mxu0 %v1864
    %4050 = vmatpush1.bf16.msra.mxu0 %v1863
    %4051 = vmatprep.subr.bf16.mxu0 %v1880
    %4052 = vmatpush1.bf16.msra.mxu0 %v1879
    %4053 = vmatprep.subr.bf16.mxu0 %v1896
    %4054 = vmatpush1.bf16.msra.mxu0 %v1895
    %4055 = vmatprep.subr.bf16.mxu0 %v1912
    %4056 = vmatpush1.bf16.msra.mxu0 %v1911
    %4057 = vmatprep.subr.bf16.mxu0 %v1928
    %4058 = vmatpush1.bf16.msra.mxu0 %v1927
    %4059 = vmatprep.subr.bf16.mxu0 %v1944
    %4060 = vmatpush1.bf16.msra.mxu0 %v1943
    %4061 = vmatprep.subr.bf16.mxu0 %v1960
    %4062 = vmatpush1.bf16.msra.mxu0 %v1959
    %4063 = vmatprep.subr.bf16.mxu0 %v1976
    %4064 = vmatpush1.bf16.msra.mxu0 %v1975
    %4065 = vmatprep.subr.bf16.mxu0 %v1992
    %4066 = vmatpush1.bf16.msra.mxu0 %v1991
    %4067 = vmatprep.subr.bf16.mxu0 %v2008
    %4068 = vmatpush1.bf16.msra.mxu0 %v2007
    %4069 = vmatprep.subr.bf16.mxu0 %v2024
    %4070 = vmatpush1.bf16.msra.mxu0 %v2023
    %4071 = vmatprep.subr.bf16.mxu0 %v2040
    %4072 = vmatpush1.bf16.msra.mxu0 %v2039
    %4073 = vmatprep.mubr.bf16.mxu0 %v1775
    %4074 = vmatmul.mubr.bf16.gmra.mrb[0].mxu0 %v1774
    %v4075 = vpop.f32.mrb[0].mxu0
    %v4076 = vadd.f32 %v2872, %v4075
    %v4077 = vpop.f32.mrb[0].mxu0
    %v4078 = vadd.f32 %v2876, %v4077
    %v4079 = vpop.f32.mrb[0].mxu0
    %v4080 = vpop.f32.mrb[0].mxu0
    %4081 = vdwg.mxu0
    %4082 = vmatprep.subr.bf16.mxu0 %v2056
    %4083 = vmatpush1.bf16.msra.mxu0 %v2055
    %4084 = vmatprep.subr.bf16.mxu0 %v2072
    %4085 = vmatpush1.bf16.msra.mxu0 %v2071
    %4086 = vmatprep.subr.bf16.mxu0 %v2088
    %4087 = vmatpush1.bf16.msra.mxu0 %v2087
    %4088 = vmatprep.subr.bf16.mxu0 %v2104
    %4089 = vmatpush1.bf16.msra.mxu0 %v2103
    %4090 = vmatprep.subr.bf16.mxu0 %v2120
    %4091 = vmatpush1.bf16.msra.mxu0 %v2119
    %4092 = vmatprep.subr.bf16.mxu0 %v2136
    %4093 = vmatpush1.bf16.msra.mxu0 %v2135
    %4094 = vmatprep.subr.bf16.mxu0 %v2152
    %4095 = vmatpush1.bf16.msra.mxu0 %v2151
    %4096 = vmatprep.subr.bf16.mxu0 %v2168
    %4097 = vmatpush1.bf16.msra.mxu0 %v2167
    %4098 = vmatprep.subr.bf16.mxu0 %v2184
    %4099 = vmatpush1.bf16.msra.mxu0 %v2183
    %4100 = vmatprep.subr.bf16.mxu0 %v2200
    %4101 = vmatpush1.bf16.msra.mxu0 %v2199
    %4102 = vmatprep.subr.bf16.mxu0 %v2216
    %4103 = vmatpush1.bf16.msra.mxu0 %v2215
    %4104 = vmatprep.subr.bf16.mxu0 %v2232
    %4105 = vmatpush1.bf16.msra.mxu0 %v2231
    %4106 = vmatprep.subr.bf16.mxu0 %v2248
    %4107 = vmatpush1.bf16.msra.mxu0 %v2247
    %4108 = vmatprep.subr.bf16.mxu0 %v2264
    %4109 = vmatpush1.bf16.msra.mxu0 %v2263
    %4110 = vmatprep.subr.bf16.mxu0 %v2280
    %4111 = vmatpush1.bf16.msra.mxu0 %v2279
    %4112 = vmatprep.subr.bf16.mxu0 %v2296
    %4113 = vmatpush1.bf16.msra.mxu0 %v2295
    %4114 = vmatprep.mubr.bf16.mxu0 %v1777
    %4115 = vmatmul.mubr.bf16.gmra.mrb[0].mxu0 %v1776
    %v4116 = vpop.f32.mrb[0].mxu0
    %v4117 = vadd.f32 %v4076, %v4116
    %v4118 = vpop.f32.mrb[0].mxu0
    %v4119 = vadd.f32 %v4078, %v4118
    %v4120 = vpop.f32.mrb[0].mxu0
    %v4121 = vpop.f32.mrb[0].mxu0
    %4122 = vdwg.mxu0
    %4123 = vmatprep.subr.bf16.mxu0 %v2312
    %4124 = vmatpush1.bf16.msra.mxu0 %v2311
    %4125 = vmatprep.subr.bf16.mxu0 %v2328
    %4126 = vmatpush1.bf16.msra.mxu0 %v2327
    %4127 = vmatprep.subr.bf16.mxu0 %v2344
    %4128 = vmatpush1.bf16.msra.mxu0 %v2343
    %4129 = vmatprep.subr.bf16.mxu0 %v2360
    %4130 = vmatpush1.bf16.msra.mxu0 %v2359
    %4131 = vmatprep.subr.bf16.mxu0 %v2376
    %4132 = vmatpush1.bf16.msra.mxu0 %v2375
    %4133 = vmatprep.subr.bf16.mxu0 %v2392
    %4134 = vmatpush1.bf16.msra.mxu0 %v2391
    %4135 = vmatprep.subr.bf16.mxu0 %v2408
    %4136 = vmatpush1.bf16.msra.mxu0 %v2407
    %4137 = vmatprep.subr.bf16.mxu0 %v2424
    %4138 = vmatpush1.bf16.msra.mxu0 %v2423
    %4139 = vmatprep.subr.bf16.mxu0 %v2440
    %4140 = vmatpush1.bf16.msra.mxu0 %v2439
    %4141 = vmatprep.subr.bf16.mxu0 %v2456
    %4142 = vmatpush1.bf16.msra.mxu0 %v2455
    %4143 = vmatprep.subr.bf16.mxu0 %v2472
    %4144 = vmatpush1.bf16.msra.mxu0 %v2471
    %4145 = vmatprep.subr.bf16.mxu0 %v2488
    %4146 = vmatpush1.bf16.msra.mxu0 %v2487
    %4147 = vmatprep.subr.bf16.mxu0 %v2504
    %4148 = vmatpush1.bf16.msra.mxu0 %v2503
    %4149 = vmatprep.subr.bf16.mxu0 %v2520
    %4150 = vmatpush1.bf16.msra.mxu0 %v2519
    %4151 = vmatprep.subr.bf16.mxu0 %v2536
    %4152 = vmatpush1.bf16.msra.mxu0 %v2535
    %4153 = vmatprep.subr.bf16.mxu0 %v2552
    %4154 = vmatpush1.bf16.msra.mxu0 %v2551
    %4155 = vmatprep.mubr.bf16.mxu0 %v1779
    %4156 = vmatmul.mubr.bf16.gmra.mrb[0].mxu0 %v1778
    %v4157 = vpop.f32.mrb[0].mxu0
    %v4158 = vadd.f32 %v4117, %v4157
    %v4159 = vpop.f32.mrb[0].mxu0
    %v4160 = vadd.f32 %v4119, %v4159
    %v4161 = vpop.f32.mrb[0].mxu0
    %v4162 = vpop.f32.mrb[0].mxu0
    %4163 = vdwg.mxu0
    %4164 = vmatprep.subr.bf16.mxu0 %v2568
    %4165 = vmatpush1.bf16.msra.mxu0 %v2567
    %4166 = vmatprep.subr.bf16.mxu0 %v2584
    %4167 = vmatpush1.bf16.msra.mxu0 %v2583
    %4168 = vmatprep.subr.bf16.mxu0 %v2600
    %4169 = vmatpush1.bf16.msra.mxu0 %v2599
    %4170 = vmatprep.subr.bf16.mxu0 %v2616
    %4171 = vmatpush1.bf16.msra.mxu0 %v2615
    %4172 = vmatprep.subr.bf16.mxu0 %v2632
    %4173 = vmatpush1.bf16.msra.mxu0 %v2631
    %4174 = vmatprep.subr.bf16.mxu0 %v2648
    %4175 = vmatpush1.bf16.msra.mxu0 %v2647
    %4176 = vmatprep.subr.bf16.mxu0 %v2664
    %4177 = vmatpush1.bf16.msra.mxu0 %v2663
    %4178 = vmatprep.subr.bf16.mxu0 %v2680
    %4179 = vmatpush1.bf16.msra.mxu0 %v2679
    %4180 = vmatprep.subr.bf16.mxu0 %v2696
    %4181 = vmatpush1.bf16.msra.mxu0 %v2695
    %4182 = vmatprep.subr.bf16.mxu0 %v2712
    %4183 = vmatpush1.bf16.msra.mxu0 %v2711
    %4184 = vmatprep.subr.bf16.mxu0 %v2728
    %4185 = vmatpush1.bf16.msra.mxu0 %v2727
    %4186 = vmatprep.subr.bf16.mxu0 %v2744
    %4187 = vmatpush1.bf16.msra.mxu0 %v2743
    %4188 = vmatprep.subr.bf16.mxu0 %v2760
    %4189 = vmatpush1.bf16.msra.mxu0 %v2759
    %4190 = vmatprep.subr.bf16.mxu0 %v2776
    %4191 = vmatpush1.bf16.msra.mxu0 %v2775
    %4192 = vmatprep.subr.bf16.mxu0 %v2792
    %4193 = vmatpush1.bf16.msra.mxu0 %v2791
    %4194 = vmatprep.subr.bf16.mxu0 %v2808
    %4195 = vmatpush1.bf16.msra.mxu0 %v2807
    %4196 = vmatprep.mubr.bf16.mxu0 %v1781
    %4197 = vmatmul.mubr.bf16.gmra.mrb[0].mxu0 %v1780
    %v4198 = vpop.f32.mrb[0].mxu0
    %v4199 = vadd.f32 %v4158, %v4198
    %v4200 = vpop.f32.mrb[0].mxu0
    %v4201 = vadd.f32 %v4160, %v4200
    %v4202 = vpop.f32.mrb[0].mxu0
    %v4203 = vpop.f32.mrb[0].mxu0
    %4204 = vdwg.mxu0
    %v4205 = vmax.f32 %v3051, 0.0
    %v4206 = vmax.f32 %v3053, 0.0
    %v4207 = vmax.f32 %v3215, 0.0
    %v4208 = vmax.f32 %v3217, 0.0
    %v4209 = vmax.f32 %v3379, 0.0
    %v4210 = vmax.f32 %v3381, 0.0
    %v4211 = vmax.f32 %v3543, 0.0
    %v4212 = vmax.f32 %v3545, 0.0
    %v4213 = vmax.f32 %v3707, 0.0
    %v4214 = vmax.f32 %v3709, 0.0
    %v4215 = vmax.f32 %v3871, 0.0
    %v4216 = vmax.f32 %v3873, 0.0
    %v4217 = vmax.f32 %v4035, 0.0
    %v4218 = vmax.f32 %v4037, 0.0
    %v4219 = vmax.f32 %v4199, 0.0
    %v4220 = vmax.f32 %v4201, 0.0
    %v4221 = vpack.c.bf16 %v4205, %v4205
    %v4222 = vpack.c.bf16 %v4206, %v4206
    %v4223 = vpack.c.bf16 %v4207, %v4207
    %v4224 = vpack.c.bf16 %v4208, %v4208
    %v4225 = vpack.c.bf16 %v4209, %v4209
    %v4226 = vpack.c.bf16 %v4210, %v4210
    %v4227 = vpack.c.bf16 %v4211, %v4211
    %v4228 = vpack.c.bf16 %v4212, %v4212
    %v4229 = vpack.c.bf16 %v4213, %v4213
    %v4230 = vpack.c.bf16 %v4214, %v4214
    %v4231 = vpack.c.bf16 %v4215, %v4215
    %v4232 = vpack.c.bf16 %v4216, %v4216
    %v4233 = vpack.c.bf16 %v4217, %v4217
    %v4234 = vpack.c.bf16 %v4218, %v4218
    %v4235 = vpack.c.bf16 %v4219, %v4219
    %v4236 = vpack.c.bf16 %v4220, %v4220
    %s4237 = smul.u32 4, 256
    %s4238 = smul.u32 %s4237, 1
    %s4239 = sshll.u32 %s4238, 4
    %4240 = dma.done %s178, %s4239
    %v4241 = vld [vmem:[#allocation5] sm:$0xff]
    %v4242 = vld [vmem:[#allocation5 + $0x8] sm:$0xff]
    %v4243 = vld [vmem:[#allocation5 + $0x10] sm:$0xff]
    %v4244 = vld [vmem:[#allocation5 + $0x18] sm:$0xff]
    %v4245 = vld [vmem:[#allocation5 + $0x20] sm:$0xff]
    %v4246 = vld [vmem:[#allocation5 + $0x28] sm:$0xff]
    %v4247 = vld [vmem:[#allocation5 + $0x30] sm:$0xff]
    %v4248 = vld [vmem:[#allocation5 + $0x38] sm:$0xff]
    %v4249 = vld [vmem:[#allocation5 + $0x40] sm:$0xff]
    %v4250 = vld [vmem:[#allocation5 + $0x48] sm:$0xff]
    %v4251 = vld [vmem:[#allocation5 + $0x50] sm:$0xff]
    %v4252 = vld [vmem:[#allocation5 + $0x58] sm:$0xff]
    %v4253 = vld [vmem:[#allocation5 + $0x60] sm:$0xff]
    %v4254 = vld [vmem:[#allocation5 + $0x68] sm:$0xff]
    %v4255 = vld [vmem:[#allocation5 + $0x70] sm:$0xff]
    %v4256 = vld [vmem:[#allocation5 + $0x78] sm:$0xff]
    %v4257 = vld [vmem:[#allocation5 + $0x80] sm:$0xff]
    %v4258 = vld [vmem:[#allocation5 + $0x88] sm:$0xff]
    %v4259 = vld [vmem:[#allocation5 + $0x90] sm:$0xff]
    %v4260 = vld [vmem:[#allocation5 + $0x98] sm:$0xff]
    %v4261 = vld [vmem:[#allocation5 + $0xa0] sm:$0xff]
    %v4262 = vld [vmem:[#allocation5 + $0xa8] sm:$0xff]
    %v4263 = vld [vmem:[#allocation5 + $0xb0] sm:$0xff]
    %v4264 = vld [vmem:[#allocation5 + $0xb8] sm:$0xff]
    %v4265 = vld [vmem:[#allocation5 + $0xc0] sm:$0xff]
    %v4266 = vld [vmem:[#allocation5 + $0xc8] sm:$0xff]
    %v4267 = vld [vmem:[#allocation5 + $0xd0] sm:$0xff]
    %v4268 = vld [vmem:[#allocation5 + $0xd8] sm:$0xff]
    %v4269 = vld [vmem:[#allocation5 + $0xe0] sm:$0xff]
    %v4270 = vld [vmem:[#allocation5 + $0xe8] sm:$0xff]
    %v4271 = vld [vmem:[#allocation5 + $0xf0] sm:$0xff]
    %v4272 = vld [vmem:[#allocation5 + $0xf8] sm:$0xff]
    %v4273 = vld [vmem:[#allocation5 + $0x100] sm:$0xff]
    %v4274 = vld [vmem:[#allocation5 + $0x108] sm:$0xff]
    %v4275 = vld [vmem:[#allocation5 + $0x110] sm:$0xff]
    %v4276 = vld [vmem:[#allocation5 + $0x118] sm:$0xff]
    %v4277 = vld [vmem:[#allocation5 + $0x120] sm:$0xff]
    %v4278 = vld [vmem:[#allocation5 + $0x128] sm:$0xff]
    %v4279 = vld [vmem:[#allocation5 + $0x130] sm:$0xff]
    %v4280 = vld [vmem:[#allocation5 + $0x138] sm:$0xff]
    %v4281 = vld [vmem:[#allocation5 + $0x140] sm:$0xff]
    %v4282 = vld [vmem:[#allocation5 + $0x148] sm:$0xff]
    %v4283 = vld [vmem:[#allocation5 + $0x150] sm:$0xff]
    %v4284 = vld [vmem:[#allocation5 + $0x158] sm:$0xff]
    %v4285 = vld [vmem:[#allocation5 + $0x160] sm:$0xff]
    %v4286 = vld [vmem:[#allocation5 + $0x168] sm:$0xff]
    %v4287 = vld [vmem:[#allocation5 + $0x170] sm:$0xff]
    %v4288 = vld [vmem:[#allocation5 + $0x178] sm:$0xff]
    %v4289 = vld [vmem:[#allocation5 + $0x180] sm:$0xff]
    %v4290 = vld [vmem:[#allocation5 + $0x188] sm:$0xff]
    %v4291 = vld [vmem:[#allocation5 + $0x190] sm:$0xff]
    %v4292 = vld [vmem:[#allocation5 + $0x198] sm:$0xff]
    %v4293 = vld [vmem:[#allocation5 + $0x1a0] sm:$0xff]
    %v4294 = vld [vmem:[#allocation5 + $0x1a8] sm:$0xff]
    %v4295 = vld [vmem:[#allocation5 + $0x1b0] sm:$0xff]
    %v4296 = vld [vmem:[#allocation5 + $0x1b8] sm:$0xff]
    %v4297 = vld [vmem:[#allocation5 + $0x1c0] sm:$0xff]
    %v4298 = vld [vmem:[#allocation5 + $0x1c8] sm:$0xff]
    %v4299 = vld [vmem:[#allocation5 + $0x1d0] sm:$0xff]
    %v4300 = vld [vmem:[#allocation5 + $0x1d8] sm:$0xff]
    %v4301 = vld [vmem:[#allocation5 + $0x1e0] sm:$0xff]
    %v4302 = vld [vmem:[#allocation5 + $0x1e8] sm:$0xff]
    %v4303 = vld [vmem:[#allocation5 + $0x1f0] sm:$0xff]
    %v4304 = vld [vmem:[#allocation5 + $0x1f8] sm:$0xff]
    %v4305 = vld [vmem:[#allocation5 + $0x200] sm:$0xff]
    %v4306 = vld [vmem:[#allocation5 + $0x208] sm:$0xff]
    %v4307 = vld [vmem:[#allocation5 + $0x210] sm:$0xff]
    %v4308 = vld [vmem:[#allocation5 + $0x218] sm:$0xff]
    %v4309 = vld [vmem:[#allocation5 + $0x220] sm:$0xff]
    %v4310 = vld [vmem:[#allocation5 + $0x228] sm:$0xff]
    %v4311 = vld [vmem:[#allocation5 + $0x230] sm:$0xff]
    %v4312 = vld [vmem:[#allocation5 + $0x238] sm:$0xff]
    %v4313 = vld [vmem:[#allocation5 + $0x240] sm:$0xff]
    %v4314 = vld [vmem:[#allocation5 + $0x248] sm:$0xff]
    %v4315 = vld [vmem:[#allocation5 + $0x250] sm:$0xff]
    %v4316 = vld [vmem:[#allocation5 + $0x258] sm:$0xff]
    %v4317 = vld [vmem:[#allocation5 + $0x260] sm:$0xff]
    %v4318 = vld [vmem:[#allocation5 + $0x268] sm:$0xff]
    %v4319 = vld [vmem:[#allocation5 + $0x270] sm:$0xff]
    %v4320 = vld [vmem:[#allocation5 + $0x278] sm:$0xff]
    %v4321 = vld [vmem:[#allocation5 + $0x280] sm:$0xff]
    %v4322 = vld [vmem:[#allocation5 + $0x288] sm:$0xff]
    %v4323 = vld [vmem:[#allocation5 + $0x290] sm:$0xff]
    %v4324 = vld [vmem:[#allocation5 + $0x298] sm:$0xff]
    %v4325 = vld [vmem:[#allocation5 + $0x2a0] sm:$0xff]
    %v4326 = vld [vmem:[#allocation5 + $0x2a8] sm:$0xff]
    %v4327 = vld [vmem:[#allocation5 + $0x2b0] sm:$0xff]
    %v4328 = vld [vmem:[#allocation5 + $0x2b8] sm:$0xff]
    %v4329 = vld [vmem:[#allocation5 + $0x2c0] sm:$0xff]
    %v4330 = vld [vmem:[#allocation5 + $0x2c8] sm:$0xff]
    %v4331 = vld [vmem:[#allocation5 + $0x2d0] sm:$0xff]
    %v4332 = vld [vmem:[#allocation5 + $0x2d8] sm:$0xff]
    %v4333 = vld [vmem:[#allocation5 + $0x2e0] sm:$0xff]
    %v4334 = vld [vmem:[#allocation5 + $0x2e8] sm:$0xff]
    %v4335 = vld [vmem:[#allocation5 + $0x2f0] sm:$0xff]
    %v4336 = vld [vmem:[#allocation5 + $0x2f8] sm:$0xff]
    %v4337 = vld [vmem:[#allocation5 + $0x300] sm:$0xff]
    %v4338 = vld [vmem:[#allocation5 + $0x308] sm:$0xff]
    %v4339 = vld [vmem:[#allocation5 + $0x310] sm:$0xff]
    %v4340 = vld [vmem:[#allocation5 + $0x318] sm:$0xff]
    %v4341 = vld [vmem:[#allocation5 + $0x320] sm:$0xff]
    %v4342 = vld [vmem:[#allocation5 + $0x328] sm:$0xff]
    %v4343 = vld [vmem:[#allocation5 + $0x330] sm:$0xff]
    %v4344 = vld [vmem:[#allocation5 + $0x338] sm:$0xff]
    %v4345 = vld [vmem:[#allocation5 + $0x340] sm:$0xff]
    %v4346 = vld [vmem:[#allocation5 + $0x348] sm:$0xff]
    %v4347 = vld [vmem:[#allocation5 + $0x350] sm:$0xff]
    %v4348 = vld [vmem:[#allocation5 + $0x358] sm:$0xff]
    %v4349 = vld [vmem:[#allocation5 + $0x360] sm:$0xff]
    %v4350 = vld [vmem:[#allocation5 + $0x368] sm:$0xff]
    %v4351 = vld [vmem:[#allocation5 + $0x370] sm:$0xff]
    %v4352 = vld [vmem:[#allocation5 + $0x378] sm:$0xff]
    %v4353 = vld [vmem:[#allocation5 + $0x380] sm:$0xff]
    %v4354 = vld [vmem:[#allocation5 + $0x388] sm:$0xff]
    %v4355 = vld [vmem:[#allocation5 + $0x390] sm:$0xff]
    %v4356 = vld [vmem:[#allocation5 + $0x398] sm:$0xff]
    %v4357 = vld [vmem:[#allocation5 + $0x3a0] sm:$0xff]
    %v4358 = vld [vmem:[#allocation5 + $0x3a8] sm:$0xff]
    %v4359 = vld [vmem:[#allocation5 + $0x3b0] sm:$0xff]
    %v4360 = vld [vmem:[#allocation5 + $0x3b8] sm:$0xff]
    %v4361 = vld [vmem:[#allocation5 + $0x3c0] sm:$0xff]
    %v4362 = vld [vmem:[#allocation5 + $0x3c8] sm:$0xff]
    %v4363 = vld [vmem:[#allocation5 + $0x3d0] sm:$0xff]
    %v4364 = vld [vmem:[#allocation5 + $0x3d8] sm:$0xff]
    %v4365 = vld [vmem:[#allocation5 + $0x3e0] sm:$0xff]
    %v4366 = vld [vmem:[#allocation5 + $0x3e8] sm:$0xff]
    %v4367 = vld [vmem:[#allocation5 + $0x3f0] sm:$0xff]
    %v4368 = vld [vmem:[#allocation5 + $0x3f8] sm:$0xff]
    %v4369 = vld [vmem:[#allocation13] sm:$0x1]
    %v4371 = vlaneseq
    %v4372 = vshrl.u32 %v4371, 7
    %v4373 = vsub.s32 0, %v4372
    %v4374 = vrot.slane %v4369, %v4373
    %4376 = vmatprep.subr.bf16.mxu0 0
    %4377 = vmatpush1.bf16.msra.mxu0 %v4241
    %4378 = vmatprep.subr.bf16.mxu0 0
    %4379 = vmatpush1.bf16.msra.mxu0 %v4242
    %4380 = vmatprep.subr.bf16.mxu0 0
    %4381 = vmatpush1.bf16.msra.mxu0 %v4243
    %4382 = vmatprep.subr.bf16.mxu0 0
    %4383 = vmatpush1.bf16.msra.mxu0 %v4244
    %4384 = vmatprep.subr.bf16.mxu0 0
    %4385 = vmatpush1.bf16.msra.mxu0 %v4245
    %4386 = vmatprep.subr.bf16.mxu0 0
    %4387 = vmatpush1.bf16.msra.mxu0 %v4246
    %4388 = vmatprep.subr.bf16.mxu0 0
    %4389 = vmatpush1.bf16.msra.mxu0 %v4247
    %4390 = vmatprep.subr.bf16.mxu0 0
    %4391 = vmatpush1.bf16.msra.mxu0 %v4248
    %4392 = vmatprep.subr.bf16.mxu0 0
    %4393 = vmatpush1.bf16.msra.mxu0 %v4249
    %4394 = vmatprep.subr.bf16.mxu0 0
    %4395 = vmatpush1.bf16.msra.mxu0 %v4250
    %4396 = vmatprep.subr.bf16.mxu0 0
    %4397 = vmatpush1.bf16.msra.mxu0 %v4251
    %4398 = vmatprep.subr.bf16.mxu0 0
    %4399 = vmatpush1.bf16.msra.mxu0 %v4252
    %4400 = vmatprep.subr.bf16.mxu0 0
    %4401 = vmatpush1.bf16.msra.mxu0 %v4253
    %4402 = vmatprep.subr.bf16.mxu0 0
    %4403 = vmatpush1.bf16.msra.mxu0 %v4254
    %4404 = vmatprep.subr.bf16.mxu0 0
    %4405 = vmatpush1.bf16.msra.mxu0 %v4255
    %4406 = vmatprep.subr.bf16.mxu0 0
    %4407 = vmatpush1.bf16.msra.mxu0 %v4256
    %4408 = vmatprep.mubr.bf16.mxu0 %v4222
    %4409 = vmatmul.mubr.bf16.gmra.mrb[0].mxu0 %v4221
    %v4410 = vpop.f32.mrb[0].mxu0
    %v4411 = vadd.f32 %v4374, %v4410
    %v4412 = vpop.f32.mrb[0].mxu0
    %v4413 = vpop.f32.mrb[0].mxu0
    %v4414 = vpop.f32.mrb[0].mxu0
    %4415 = vdwg.mxu0
    %4416 = vmatprep.subr.bf16.mxu0 0
    %4417 = vmatpush1.bf16.msra.mxu0 %v4257
    %4418 = vmatprep.subr.bf16.mxu0 0
    %4419 = vmatpush1.bf16.msra.mxu0 %v4258
    %4420 = vmatprep.subr.bf16.mxu0 0
    %4421 = vmatpush1.bf16.msra.mxu0 %v4259
    %4422 = vmatprep.subr.bf16.mxu0 0
    %4423 = vmatpush1.bf16.msra.mxu0 %v4260
    %4424 = vmatprep.subr.bf16.mxu0 0
    %4425 = vmatpush1.bf16.msra.mxu0 %v4261
    %4426 = vmatprep.subr.bf16.mxu0 0
    %4427 = vmatpush1.bf16.msra.mxu0 %v4262
    %4428 = vmatprep.subr.bf16.mxu0 0
    %4429 = vmatpush1.bf16.msra.mxu0 %v4263
    %4430 = vmatprep.subr.bf16.mxu0 0
    %4431 = vmatpush1.bf16.msra.mxu0 %v4264
    %4432 = vmatprep.subr.bf16.mxu0 0
    %4433 = vmatpush1.bf16.msra.mxu0 %v4265
    %4434 = vmatprep.subr.bf16.mxu0 0
    %4435 = vmatpush1.bf16.msra.mxu0 %v4266
    %4436 = vmatprep.subr.bf16.mxu0 0
    %4437 = vmatpush1.bf16.msra.mxu0 %v4267
    %4438 = vmatprep.subr.bf16.mxu0 0
    %4439 = vmatpush1.bf16.msra.mxu0 %v4268
    %4440 = vmatprep.subr.bf16.mxu0 0
    %4441 = vmatpush1.bf16.msra.mxu0 %v4269
    %4442 = vmatprep.subr.bf16.mxu0 0
    %4443 = vmatpush1.bf16.msra.mxu0 %v4270
    %4444 = vmatprep.subr.bf16.mxu0 0
    %4445 = vmatpush1.bf16.msra.mxu0 %v4271
    %4446 = vmatprep.subr.bf16.mxu0 0
    %4447 = vmatpush1.bf16.msra.mxu0 %v4272
    %4448 = vmatprep.mubr.bf16.mxu0 %v4224
    %4449 = vmatmul.mubr.bf16.gmra.mrb[0].mxu0 %v4223
    %v4450 = vpop.f32.mrb[0].mxu0
    %v4451 = vadd.f32 %v4411, %v4450
    %v4452 = vpop.f32.mrb[0].mxu0
    %v4453 = vpop.f32.mrb[0].mxu0
    %v4454 = vpop.f32.mrb[0].mxu0
    %4455 = vdwg.mxu0
    %4456 = vmatprep.subr.bf16.mxu0 0
    %4457 = vmatpush1.bf16.msra.mxu0 %v4273
    %4458 = vmatprep.subr.bf16.mxu0 0
    %4459 = vmatpush1.bf16.msra.mxu0 %v4274
    %4460 = vmatprep.subr.bf16.mxu0 0
    %4461 = vmatpush1.bf16.msra.mxu0 %v4275
    %4462 = vmatprep.subr.bf16.mxu0 0
    %4463 = vmatpush1.bf16.msra.mxu0 %v4276
    %4464 = vmatprep.subr.bf16.mxu0 0
    %4465 = vmatpush1.bf16.msra.mxu0 %v4277
    %4466 = vmatprep.subr.bf16.mxu0 0
    %4467 = vmatpush1.bf16.msra.mxu0 %v4278
    %4468 = vmatprep.subr.bf16.mxu0 0
    %4469 = vmatpush1.bf16.msra.mxu0 %v4279
    %4470 = vmatprep.subr.bf16.mxu0 0
    %4471 = vmatpush1.bf16.msra.mxu0 %v4280
    %4472 = vmatprep.subr.bf16.mxu0 0
    %4473 = vmatpush1.bf16.msra.mxu0 %v4281
    %4474 = vmatprep.subr.bf16.mxu0 0
    %4475 = vmatpush1.bf16.msra.mxu0 %v4282
    %4476 = vmatprep.subr.bf16.mxu0 0
    %4477 = vmatpush1.bf16.msra.mxu0 %v4283
    %4478 = vmatprep.subr.bf16.mxu0 0
    %4479 = vmatpush1.bf16.msra.mxu0 %v4284
    %4480 = vmatprep.subr.bf16.mxu0 0
    %4481 = vmatpush1.bf16.msra.mxu0 %v4285
    %4482 = vmatprep.subr.bf16.mxu0 0
    %4483 = vmatpush1.bf16.msra.mxu0 %v4286
    %4484 = vmatprep.subr.bf16.mxu0 0
    %4485 = vmatpush1.bf16.msra.mxu0 %v4287
    %4486 = vmatprep.subr.bf16.mxu0 0
    %4487 = vmatpush1.bf16.msra.mxu0 %v4288
    %4488 = vmatprep.mubr.bf16.mxu0 %v4226
    %4489 = vmatmul.mubr.bf16.gmra.mrb[0].mxu0 %v4225
    %v4490 = vpop.f32.mrb[0].mxu0
    %v4491 = vadd.f32 %v4451, %v4490
    %v4492 = vpop.f32.mrb[0].mxu0
    %v4493 = vpop.f32.mrb[0].mxu0
    %v4494 = vpop.f32.mrb[0].mxu0
    %4495 = vdwg.mxu0
    %4496 = vmatprep.subr.bf16.mxu0 0
    %4497 = vmatpush1.bf16.msra.mxu0 %v4289
    %4498 = vmatprep.subr.bf16.mxu0 0
    %4499 = vmatpush1.bf16.msra.mxu0 %v4290
    %4500 = vmatprep.subr.bf16.mxu0 0
    %4501 = vmatpush1.bf16.msra.mxu0 %v4291
    %4502 = vmatprep.subr.bf16.mxu0 0
    %4503 = vmatpush1.bf16.msra.mxu0 %v4292
    %4504 = vmatprep.subr.bf16.mxu0 0
    %4505 = vmatpush1.bf16.msra.mxu0 %v4293
    %4506 = vmatprep.subr.bf16.mxu0 0
    %4507 = vmatpush1.bf16.msra.mxu0 %v4294
    %4508 = vmatprep.subr.bf16.mxu0 0
    %4509 = vmatpush1.bf16.msra.mxu0 %v4295
    %4510 = vmatprep.subr.bf16.mxu0 0
    %4511 = vmatpush1.bf16.msra.mxu0 %v4296
    %4512 = vmatprep.subr.bf16.mxu0 0
    %4513 = vmatpush1.bf16.msra.mxu0 %v4297
    %4514 = vmatprep.subr.bf16.mxu0 0
    %4515 = vmatpush1.bf16.msra.mxu0 %v4298
    %4516 = vmatprep.subr.bf16.mxu0 0
    %4517 = vmatpush1.bf16.msra.mxu0 %v4299
    %4518 = vmatprep.subr.bf16.mxu0 0
    %4519 = vmatpush1.bf16.msra.mxu0 %v4300
    %4520 = vmatprep.subr.bf16.mxu0 0
    %4521 = vmatpush1.bf16.msra.mxu0 %v4301
    %4522 = vmatprep.subr.bf16.mxu0 0
    %4523 = vmatpush1.bf16.msra.mxu0 %v4302
    %4524 = vmatprep.subr.bf16.mxu0 0
    %4525 = vmatpush1.bf16.msra.mxu0 %v4303
    %4526 = vmatprep.subr.bf16.mxu0 0
    %4527 = vmatpush1.bf16.msra.mxu0 %v4304
    %4528 = vmatprep.mubr.bf16.mxu0 %v4228
    %4529 = vmatmul.mubr.bf16.gmra.mrb[0].mxu0 %v4227
    %v4530 = vpop.f32.mrb[0].mxu0
    %v4531 = vadd.f32 %v4491, %v4530
    %v4532 = vpop.f32.mrb[0].mxu0
    %v4533 = vpop.f32.mrb[0].mxu0
    %v4534 = vpop.f32.mrb[0].mxu0
    %4535 = vdwg.mxu0
    %4536 = vmatprep.subr.bf16.mxu0 0
    %4537 = vmatpush1.bf16.msra.mxu0 %v4305
    %4538 = vmatprep.subr.bf16.mxu0 0
    %4539 = vmatpush1.bf16.msra.mxu0 %v4306
    %4540 = vmatprep.subr.bf16.mxu0 0
    %4541 = vmatpush1.bf16.msra.mxu0 %v4307
    %4542 = vmatprep.subr.bf16.mxu0 0
    %4543 = vmatpush1.bf16.msra.mxu0 %v4308
    %4544 = vmatprep.subr.bf16.mxu0 0
    %4545 = vmatpush1.bf16.msra.mxu0 %v4309
    %4546 = vmatprep.subr.bf16.mxu0 0
    %4547 = vmatpush1.bf16.msra.mxu0 %v4310
    %4548 = vmatprep.subr.bf16.mxu0 0
    %4549 = vmatpush1.bf16.msra.mxu0 %v4311
    %4550 = vmatprep.subr.bf16.mxu0 0
    %4551 = vmatpush1.bf16.msra.mxu0 %v4312
    %4552 = vmatprep.subr.bf16.mxu0 0
    %4553 = vmatpush1.bf16.msra.mxu0 %v4313
    %4554 = vmatprep.subr.bf16.mxu0 0
    %4555 = vmatpush1.bf16.msra.mxu0 %v4314
    %4556 = vmatprep.subr.bf16.mxu0 0
    %4557 = vmatpush1.bf16.msra.mxu0 %v4315
    %4558 = vmatprep.subr.bf16.mxu0 0
    %4559 = vmatpush1.bf16.msra.mxu0 %v4316
    %4560 = vmatprep.subr.bf16.mxu0 0
    %4561 = vmatpush1.bf16.msra.mxu0 %v4317
    %4562 = vmatprep.subr.bf16.mxu0 0
    %4563 = vmatpush1.bf16.msra.mxu0 %v4318
    %4564 = vmatprep.subr.bf16.mxu0 0
    %4565 = vmatpush1.bf16.msra.mxu0 %v4319
    %4566 = vmatprep.subr.bf16.mxu0 0
    %4567 = vmatpush1.bf16.msra.mxu0 %v4320
    %4568 = vmatprep.mubr.bf16.mxu0 %v4230
    %4569 = vmatmul.mubr.bf16.gmra.mrb[0].mxu0 %v4229
    %v4570 = vpop.f32.mrb[0].mxu0
    %v4571 = vadd.f32 %v4531, %v4570
    %v4572 = vpop.f32.mrb[0].mxu0
    %v4573 = vpop.f32.mrb[0].mxu0
    %v4574 = vpop.f32.mrb[0].mxu0
    %4575 = vdwg.mxu0
    %4576 = vmatprep.subr.bf16.mxu0 0
    %4577 = vmatpush1.bf16.msra.mxu0 %v4321
    %4578 = vmatprep.subr.bf16.mxu0 0
    %4579 = vmatpush1.bf16.msra.mxu0 %v4322
    %4580 = vmatprep.subr.bf16.mxu0 0
    %4581 = vmatpush1.bf16.msra.mxu0 %v4323
    %4582 = vmatprep.subr.bf16.mxu0 0
    %4583 = vmatpush1.bf16.msra.mxu0 %v4324
    %4584 = vmatprep.subr.bf16.mxu0 0
    %4585 = vmatpush1.bf16.msra.mxu0 %v4325
    %4586 = vmatprep.subr.bf16.mxu0 0
    %4587 = vmatpush1.bf16.msra.mxu0 %v4326
    %4588 = vmatprep.subr.bf16.mxu0 0
    %4589 = vmatpush1.bf16.msra.mxu0 %v4327
    %4590 = vmatprep.subr.bf16.mxu0 0
    %4591 = vmatpush1.bf16.msra.mxu0 %v4328
    %4592 = vmatprep.subr.bf16.mxu0 0
    %4593 = vmatpush1.bf16.msra.mxu0 %v4329
    %4594 = vmatprep.subr.bf16.mxu0 0
    %4595 = vmatpush1.bf16.msra.mxu0 %v4330
    %4596 = vmatprep.subr.bf16.mxu0 0
    %4597 = vmatpush1.bf16.msra.mxu0 %v4331
    %4598 = vmatprep.subr.bf16.mxu0 0
    %4599 = vmatpush1.bf16.msra.mxu0 %v4332
    %4600 = vmatprep.subr.bf16.mxu0 0
    %4601 = vmatpush1.bf16.msra.mxu0 %v4333
    %4602 = vmatprep.subr.bf16.mxu0 0
    %4603 = vmatpush1.bf16.msra.mxu0 %v4334
    %4604 = vmatprep.subr.bf16.mxu0 0
    %4605 = vmatpush1.bf16.msra.mxu0 %v4335
    %4606 = vmatprep.subr.bf16.mxu0 0
    %4607 = vmatpush1.bf16.msra.mxu0 %v4336
    %4608 = vmatprep.mubr.bf16.mxu0 %v4232
    %4609 = vmatmul.mubr.bf16.gmra.mrb[0].mxu0 %v4231
    %v4610 = vpop.f32.mrb[0].mxu0
    %v4611 = vadd.f32 %v4571, %v4610
    %v4612 = vpop.f32.mrb[0].mxu0
    %v4613 = vpop.f32.mrb[0].mxu0
    %v4614 = vpop.f32.mrb[0].mxu0
    %4615 = vdwg.mxu0
    %4616 = vmatprep.subr.bf16.mxu0 0
    %4617 = vmatpush1.bf16.msra.mxu0 %v4337
    %4618 = vmatprep.subr.bf16.mxu0 0
    %4619 = vmatpush1.bf16.msra.mxu0 %v4338
    %4620 = vmatprep.subr.bf16.mxu0 0
    %4621 = vmatpush1.bf16.msra.mxu0 %v4339
    %4622 = vmatprep.subr.bf16.mxu0 0
    %4623 = vmatpush1.bf16.msra.mxu0 %v4340
    %4624 = vmatprep.subr.bf16.mxu0 0
    %4625 = vmatpush1.bf16.msra.mxu0 %v4341
    %4626 = vmatprep.subr.bf16.mxu0 0
    %4627 = vmatpush1.bf16.msra.mxu0 %v4342
    %4628 = vmatprep.subr.bf16.mxu0 0
    %4629 = vmatpush1.bf16.msra.mxu0 %v4343
    %4630 = vmatprep.subr.bf16.mxu0 0
    %4631 = vmatpush1.bf16.msra.mxu0 %v4344
    %4632 = vmatprep.subr.bf16.mxu0 0
    %4633 = vmatpush1.bf16.msra.mxu0 %v4345
    %4634 = vmatprep.subr.bf16.mxu0 0
    %4635 = vmatpush1.bf16.msra.mxu0 %v4346
    %4636 = vmatprep.subr.bf16.mxu0 0
    %4637 = vmatpush1.bf16.msra.mxu0 %v4347
    %4638 = vmatprep.subr.bf16.mxu0 0
    %4639 = vmatpush1.bf16.msra.mxu0 %v4348
    %4640 = vmatprep.subr.bf16.mxu0 0
    %4641 = vmatpush1.bf16.msra.mxu0 %v4349
    %4642 = vmatprep.subr.bf16.mxu0 0
    %4643 = vmatpush1.bf16.msra.mxu0 %v4350
    %4644 = vmatprep.subr.bf16.mxu0 0
    %4645 = vmatpush1.bf16.msra.mxu0 %v4351
    %4646 = vmatprep.subr.bf16.mxu0 0
    %4647 = vmatpush1.bf16.msra.mxu0 %v4352
    %4648 = vmatprep.mubr.bf16.mxu0 %v4234
    %4649 = vmatmul.mubr.bf16.gmra.mrb[0].mxu0 %v4233
    %v4650 = vpop.f32.mrb[0].mxu0
    %v4651 = vadd.f32 %v4611, %v4650
    %v4652 = vpop.f32.mrb[0].mxu0
    %v4653 = vpop.f32.mrb[0].mxu0
    %v4654 = vpop.f32.mrb[0].mxu0
    %4655 = vdwg.mxu0
    %4656 = vmatprep.subr.bf16.mxu0 0
    %4657 = vmatpush1.bf16.msra.mxu0 %v4353
    %4658 = vmatprep.subr.bf16.mxu0 0
    %4659 = vmatpush1.bf16.msra.mxu0 %v4354
    %4660 = vmatprep.subr.bf16.mxu0 0
    %4661 = vmatpush1.bf16.msra.mxu0 %v4355
    %4662 = vmatprep.subr.bf16.mxu0 0
    %4663 = vmatpush1.bf16.msra.mxu0 %v4356
    %4664 = vmatprep.subr.bf16.mxu0 0
    %4665 = vmatpush1.bf16.msra.mxu0 %v4357
    %4666 = vmatprep.subr.bf16.mxu0 0
    %4667 = vmatpush1.bf16.msra.mxu0 %v4358
    %4668 = vmatprep.subr.bf16.mxu0 0
    %4669 = vmatpush1.bf16.msra.mxu0 %v4359
    %4670 = vmatprep.subr.bf16.mxu0 0
    %4671 = vmatpush1.bf16.msra.mxu0 %v4360
    %4672 = vmatprep.subr.bf16.mxu0 0
    %4673 = vmatpush1.bf16.msra.mxu0 %v4361
    %4674 = vmatprep.subr.bf16.mxu0 0
    %4675 = vmatpush1.bf16.msra.mxu0 %v4362
    %4676 = vmatprep.subr.bf16.mxu0 0
    %4677 = vmatpush1.bf16.msra.mxu0 %v4363
    %4678 = vmatprep.subr.bf16.mxu0 0
    %4679 = vmatpush1.bf16.msra.mxu0 %v4364
    %4680 = vmatprep.subr.bf16.mxu0 0
    %4681 = vmatpush1.bf16.msra.mxu0 %v4365
    %4682 = vmatprep.subr.bf16.mxu0 0
    %4683 = vmatpush1.bf16.msra.mxu0 %v4366
    %4684 = vmatprep.subr.bf16.mxu0 0
    %4685 = vmatpush1.bf16.msra.mxu0 %v4367
    %4686 = vmatprep.subr.bf16.mxu0 0
    %4687 = vmatpush1.bf16.msra.mxu0 %v4368
    %4688 = vmatprep.mubr.bf16.mxu0 %v4236
    %4689 = vmatmul.mubr.bf16.gmra.mrb[0].mxu0 %v4235
    %v4690 = vpop.f32.mrb[0].mxu0
    %v4691 = vadd.f32 %v4651, %v4690
    %v4692 = vpop.f32.mrb[0].mxu0
    %v4693 = vpop.f32.mrb[0].mxu0
    %v4694 = vpop.f32.mrb[0].mxu0
    %4695 = vdwg.mxu0
    %4696 = vst [vmem:[#allocation15] sm:$0xff] %v4691
    // Predicated region
    $region42: #{fc_net_forward.1} parent=1 // pred_check
      _
    $region43: #{fc_net_forward.1} parent=1 // pred_check_branch
      %4698 = sbr.rel (0) target = $region45
    $region44: #{fc_net_forward.1} parent=1 // pred_region
      %s4700 = ssub.s32 128, 128
      %4701 = vsyncadd [#allocation9], %s4700
      %s4703 = sshll.u32 [#allocation15], 4
      %s4704 = int_to_ptr.vmem [resolvable:$true] %s4703
      %4706 = dma.vmem_to_hbm [thread:$0]  %s4704, 128, %s9, [#allocation9]
    $region45: #{fc_net_forward.1} parent=1 // pred_fallthru
      _
    // Predicated region
    $region46: #{fc_net_forward.1} parent=1 // pred_check
      _
    $region47: #{fc_net_forward.1} parent=1 // pred_check_branch
      %4708 = sbr.rel (0) target = $region49
    $region48: #{fc_net_forward.1} parent=1 // pred_region
      %4709 = dma.done [#allocation9], 128
    $region49: #{fc_net_forward.1} parent=1 // pred_fallthru
      _
    %4710 = vsyncpa [#allocation8], 1
    %4711 = vsyncpa [#allocation11], 1
    %4712 = vsyncpa [#allocation14], 1
    %4713 = vsyncpa [#allocation9], 1
  %4714 = vsyncmov [#allocation6]
  %s4715 = vpop.sfrf %4714
  %p4716 = scmp.eq.s32.totalorder %s4715, 0
  %p4717 = pneg %p4716
  %4719 = shalt.err (%p4717)
  %s4720 = scalar_lea.sflag [#allocation6], 1
  %4721 = vsyncmov %s4720
  %s4722 = vpop.sfrf %4721
  %p4723 = scmp.eq.s32.totalorder %s4722, 0
  %p4724 = pneg %p4723
  %4726 = shalt.err (%p4724)
  %s4727 = scalar_lea.sflag [#allocation6], 2
  %4728 = vsyncmov %s4727
  %s4729 = vpop.sfrf %4728
  %p4730 = scmp.eq.s32.totalorder %s4729, 0
  %p4731 = pneg %p4730
  %4733 = shalt.err (%p4731)
  %s4734 = scalar_lea.sflag [#allocation6], 3
  %4735 = vsyncmov %s4734
  %s4736 = vpop.sfrf %4735
  %p4737 = scmp.eq.s32.totalorder %s4736, 0
  %p4738 = pneg %p4737
  %4740 = shalt.err (%p4738)

</llo_original>
